<compile_context>
chip_gen: v7x
topology: tpu7x:2x2x1
jax: 0.10.0
libtpu: 0.0.40
codegen_flags: <defaults>
</compile_context>

<pallas_src>
import functools

import jax
import jax.numpy as jnp
from jax import lax
from jax.experimental import pallas as pl
from jax.experimental.pallas import tpu as pltpu


def _round_up(x, m):
    return (x + m - 1) // m * m


def _attention_group_kernel(x_ref, wq_ref, wkv_ref, wp_ref, b_ref, o_ref,
                            acc_ref, *, scale, heads_per_group, head_dim,
                            seq_len, num_groups):
    """One (batch, query-tile, head-group) grid step.

    x_ref  : (1, n_pad, C) bf16  full (padded) sequence; queries sliced from it
    wq_ref : (G, C, g*hd)  bf16  per-group query projection (VMEM-resident)
    wkv_ref: (G, C, 2g*hd) bf16  per-group fused key||value projection
    wp_ref : (G, g*hd, C)  bf16  per-group slice of the output projection
    b_ref  : (1, C)        f32   output-projection bias
    o_ref  : (1, tq, C)          output block (resident across the group axis)
    acc_ref: (tq, C)       f32   VMEM accumulator over head groups
    """
    g, hd = heads_per_group, head_dim
    ghd = g * hd
    grp = pl.program_id(2)

    xkv = x_ref[0]                                   # (n_pad, C) bf16
    n_pad = xkv.shape[0]
    tq = o_ref.shape[1]
    if n_pad == tq:                                  # single query tile
        xq = xkv
    else:
        q_start = pl.multiple_of(pl.program_id(1) * tq, 128)
        xq = lax.dynamic_slice_in_dim(xkv, q_start, tq, axis=0)   # (tq, C)

    wq = wq_ref[grp]                                 # (C, g*hd)
    wkv = wkv_ref[grp]                               # (C, 2*g*hd)
    wp = wp_ref[grp]                                 # (g*hd, C)

    # Group-wide projections: wide bf16 MXU matmuls, f32 accumulation.
    q_all = lax.dot_general(xq, wq, (((1,), (0,)), ((), ())),
                            preferred_element_type=jnp.float32)   # (tq, g*hd)
    q_all = (q_all * scale).astype(jnp.bfloat16)     # fold softmax scale into q
    kv = lax.dot_general(xkv, wkv, (((1,), (0,)), ((), ())),
                         preferred_element_type=jnp.float32)      # (n_pad, 2g*hd)
    k_all = kv[:, :ghd].astype(jnp.bfloat16)
    v_all = kv[:, ghd:].astype(jnp.bfloat16)

    # Additive mask for zero-padded key columns (static: emitted only if padded).
    if n_pad != seq_len:
        col = lax.broadcasted_iota(jnp.int32, (tq, n_pad), 1)
        key_bias = jnp.where(col < seq_len, 0.0, -1e30).astype(jnp.float32)
    else:
        key_bias = None

    # Per-head attention inside the group (hd-deep score contractions are
    # inherent; the expensive projections above already run at full width).
    ctx_parts = []
    for h in range(g):
        qh = q_all[:, h * hd:(h + 1) * hd]
        kh = k_all[:, h * hd:(h + 1) * hd]
        vh = v_all[:, h * hd:(h + 1) * hd]
        # scores = qh @ kh^T without materializing a transpose (trans_b form)
        s = lax.dot_general(qh, kh, (((1,), (1,)), ((), ())),
                            preferred_element_type=jnp.float32)   # (tq, n_pad)
        if key_bias is not None:
            s = s + key_bias
        # Softmax with deferred normalization: never divide the (tq, n_pad) tile.
        m = jnp.max(s, axis=-1, keepdims=True)
        p = jnp.exp(s - m)
        inv = pl.reciprocal(jnp.sum(p, axis=-1, keepdims=True), approx=True)
        ctx = lax.dot_general(p.astype(jnp.bfloat16), vh,
                              (((1,), (0,)), ((), ())),
                              preferred_element_type=jnp.float32)  # (tq, hd)
        ctx_parts.append((ctx * inv).astype(jnp.bfloat16))

    ctx_g = ctx_parts[0] if g == 1 else jnp.concatenate(ctx_parts, axis=-1)

    # Per-group slice of the output projection (contraction depth g*hd).
    partial = lax.dot_general(ctx_g, wp, (((1,), (0,)), ((), ())),
                              preferred_element_type=jnp.float32)  # (tq, C)

    if num_groups == 1:
        o_ref[0] = (partial + b_ref[...]).astype(o_ref.dtype)
    else:
        @pl.when(grp == 0)
        def _store_first():
            acc_ref[...] = partial

        @pl.when(grp > 0)
        def _accumulate():
            acc_ref[...] += partial

        @pl.when(grp == num_groups - 1)
        def _finalize():
            o_ref[0] = (acc_ref[...] + b_ref[...]).astype(o_ref.dtype)


def attention_pallas(x, w_qkv, w_proj, b_proj, *, num_heads, q_tile=256,
                     heads_per_group=None, out_dtype=None):
    """x: (B, N, C); w_qkv: (3C, C) torch layout; w_proj: (C, C); b_proj: (C,)."""
    B, N, C = x.shape
    H = num_heads
    hd = C // H
    scale = hd ** (-0.5)
    out_dtype = x.dtype if out_dtype is None else out_dtype

    # Pack heads so the group projection width g*hd targets the 256-wide MXU
    # (v6e/v7x); g must divide H.
    if heads_per_group is None:
        g = 1
        for cand in range(1, H + 1):
            if H % cand == 0 and cand * hd <= 256:
                g = cand
    else:
        g = heads_per_group
    assert H % g == 0, "heads_per_group must divide num_heads"
    G = H // g
    ghd = g * hd

    # --- weights: (in, out) layout, grouped per g heads, pre-cast to bf16 ----
    w_t = jnp.transpose(w_qkv).astype(jnp.bfloat16)              # (C, 3C)

    def per_group(w2d):                                          # (C, C)->(G, C, g*hd)
        return w2d.reshape(C, G, ghd).transpose(1, 0, 2)

    wq_all = per_group(w_t[:, 0 * C:1 * C])                      # (G, C, g*hd)
    wk_all = per_group(w_t[:, 1 * C:2 * C])
    wv_all = per_group(w_t[:, 2 * C:3 * C])
    wkv_all = jnp.concatenate([wk_all, wv_all], axis=2)          # (G, C, 2*g*hd)
    wp_all = jnp.transpose(w_proj).astype(jnp.bfloat16).reshape(G, ghd, C)
    b2 = b_proj.reshape(1, C).astype(jnp.float32)

    # --- sequence padding: query tile rounded to a multiple of 128 ----------
    tq = min(_round_up(q_tile, 128), _round_up(N, 128))
    n_pad = _round_up(N, tq)
    x_bf = x.astype(jnp.bfloat16)
    if n_pad != N:
        x_bf = jnp.pad(x_bf, ((0, 0), (0, n_pad - N), (0, 0)))

    grid = (B, n_pad // tq, G)
    kernel = functools.partial(_attention_group_kernel, scale=scale,
                               heads_per_group=g, head_dim=hd,
                               seq_len=N, num_groups=G)

    out = pl.pallas_call(
        kernel,
        out_shape=jax.ShapeDtypeStruct((B, n_pad, C), out_dtype),
        grid_spec=pltpu.PrefetchScalarGridSpec(
            num_scalar_prefetch=0,
            grid=grid,
            in_specs=[
                # Single activation input: keys/values AND the query slice come
                # from this block; DMA'd only when the batch index changes.
                pl.BlockSpec((1, n_pad, C), lambda b, qi, gi: (b, 0, 0)),
                # Weights: constant block index -> fetched once, VMEM-resident.
                pl.BlockSpec((G, C, ghd), lambda b, qi, gi: (0, 0, 0)),
                pl.BlockSpec((G, C, 2 * ghd), lambda b, qi, gi: (0, 0, 0)),
                pl.BlockSpec((G, ghd, C), lambda b, qi, gi: (0, 0, 0)),
                pl.BlockSpec((1, C), lambda b, qi, gi: (0, 0)),
            ],
            out_specs=pl.BlockSpec((1, tq, C), lambda b, qi, gi: (b, qi, 0)),
            scratch_shapes=[pltpu.VMEM((tq, C), jnp.float32)],
        ),
        compiler_params=pltpu.CompilerParams(
            dimension_semantics=("parallel", "parallel", "arbitrary"),
            vmem_limit_bytes=48 * 1024 * 1024,
        ),
    )(x_bf, wq_all, wkv_all, wp_all, b2)

    return out[:, :N, :] if n_pad != N else out


def attention_reference(x, w_qkv, w_proj, b_proj, *, num_heads):
    """Pure-JAX (f32) mirror of the PyTorch forward for correctness checking."""
    B, N, C = x.shape
    head_dim = C // num_heads
    scale = head_dim ** (-0.5)
    qkv = x @ w_qkv.T                                            # (B, N, 3C)
    qkv = qkv.reshape(B, N, 3, num_heads, head_dim)
    qkv = jnp.transpose(qkv, (2, 0, 3, 1, 4))                    # (3, B, H, N, hd)
    q, k, v = qkv[0], qkv[1], qkv[2]
    attn = jnp.einsum('bhnd,bhmd->bhnm', q, k) * scale
    attn = jax.nn.softmax(attn, axis=-1)
    out = jnp.einsum('bhnm,bhmd->bhnd', attn, v)
    out = jnp.transpose(out, (0, 2, 1, 3)).reshape(B, N, C)
    return out @ w_proj.T + b_proj


if __name__ == "__main__":
    # NOTE: toy shapes (C=32 < 128 lanes, head_dim=4) validate semantics only;
    # benchmark with ViT-scale shapes (N>=196, C>=768, hd=64) for performance.
    key = jax.random.PRNGKey(0)
    kx, kqkv, kproj, kb, kx2 = jax.random.split(key, 5)

    B, N, C, H = 2, 8, 32, 8   # head_dim = 4
    x = jax.random.normal(kx, (B, N, C), dtype=jnp.float32)
    w_qkv = 0.02 * jax.random.normal(kqkv, (3 * C, C), dtype=jnp.float32)
    w_proj = 0.02 * jax.random.normal(kproj, (C, C), dtype=jnp.float32)
    b_proj = 0.02 * jax.random.normal(kb, (C,), dtype=jnp.float32)

    # Test 1: default head grouping (all 8 heads in one group), single q-tile.
    y = attention_pallas(x, w_qkv, w_proj, b_proj, num_heads=H)
    y = jax.block_until_ready(y)
    y_ref = attention_reference(x, w_qkv, w_proj, b_proj, num_heads=H)
    assert jnp.allclose(y, y_ref, atol=2e-2, rtol=2e-2), "mismatch (test 1)"

    # Test 2: multiple head groups + multiple query tiles + padded/masked keys.
    x2 = jax.random.normal(kx2, (1, 160, C), dtype=jnp.float32)
    y2 = attention_pallas(x2, w_qkv, w_proj, b_proj, num_heads=H,
                          q_tile=128, heads_per_group=2)
    y2 = jax.block_until_ready(y2)
    y2_ref = attention_reference(x2, w_qkv, w_proj, b_proj, num_heads=H)
    assert jnp.allclose(y2, y2_ref, atol=2e-2, rtol=2e-2), "mismatch (test 2)"

    print("KERNEL_OK")
</pallas_src>

<mosaic_0001>
module attributes {stable_mosaic.version = 11 : i64} {
  func.func @_attention_group_kernel(%arg0: i32, %arg1: i32, %arg2: i32, %arg3: memref<1x128x32xbf16, #tpu.memory_space<vmem>>, %arg4: memref<1x32x32xbf16, #tpu.memory_space<vmem>>, %arg5: memref<1x32x64xbf16, #tpu.memory_space<vmem>>, %arg6: memref<1x32x32xbf16, #tpu.memory_space<vmem>>, %arg7: memref<1x32xf32, #tpu.memory_space<vmem>>, %arg8: memref<1x128x32xf32, #tpu.memory_space<vmem>>, %arg9: memref<128x32xf32, #tpu.memory_space<vmem>>) attributes {dimension_semantics = [#tpu.dimension_semantics<parallel>, #tpu.dimension_semantics<parallel>, #tpu.dimension_semantics<arbitrary>], iteration_bounds = array<i64: 2, 1, 1>, scalar_prefetch = 0 : i64, scratch_operands = 1 : i64, tpu.core_type = #tpu.core_type<tc>, window_params = [{transform_indices = @transform_0, window_bounds = array<i64: 1, 128, 32>}, {pipeline_mode = #tpu.pipeline_mode<synchronous>, transform_indices = @transform_1, window_bounds = array<i64: 1, 32, 32>}, {pipeline_mode = #tpu.pipeline_mode<synchronous>, transform_indices = @transform_2, window_bounds = array<i64: 1, 32, 64>}, {pipeline_mode = #tpu.pipeline_mode<synchronous>, transform_indices = @transform_3, window_bounds = array<i64: 1, 32, 32>}, {pipeline_mode = #tpu.pipeline_mode<synchronous>, transform_indices = @transform_4, window_bounds = array<i64: 1, 32>}, {transform_indices = @transform_5, window_bounds = array<i64: 1, 128, 32>}]} {
    %c0 = arith.constant 0 : index
    %c0_0 = arith.constant 0 : index
    %c0_1 = arith.constant 0 : index
    %0 = vector.load %arg3[%c0, %c0_0, %c0_1] : memref<1x128x32xbf16, #tpu.memory_space<vmem>>, vector<1x128x32xbf16>
    %1 = vector.shape_cast %0 : vector<1x128x32xbf16> to vector<128x32xbf16>
    %2 = arith.index_cast %arg2 : i32 to index
    %c0_2 = arith.constant 0 : index
    %c0_3 = arith.constant 0 : index
    %3 = vector.load %arg4[%2, %c0_2, %c0_3] : memref<1x32x32xbf16, #tpu.memory_space<vmem>>, vector<1x32x32xbf16>
    %4 = vector.shape_cast %3 : vector<1x32x32xbf16> to vector<32x32xbf16>
    %5 = arith.index_cast %arg2 : i32 to index
    %c0_4 = arith.constant 0 : index
    %c0_5 = arith.constant 0 : index
    %6 = vector.load %arg5[%5, %c0_4, %c0_5] : memref<1x32x64xbf16, #tpu.memory_space<vmem>>, vector<1x32x64xbf16>
    %7 = vector.shape_cast %6 : vector<1x32x64xbf16> to vector<32x64xbf16>
    %8 = arith.index_cast %arg2 : i32 to index
    %c0_6 = arith.constant 0 : index
    %c0_7 = arith.constant 0 : index
    %9 = vector.load %arg6[%8, %c0_6, %c0_7] : memref<1x32x32xbf16, #tpu.memory_space<vmem>>, vector<1x32x32xbf16>
    %10 = vector.shape_cast %9 : vector<1x32x32xbf16> to vector<32x32xbf16>
    %cst = arith.constant dense<0.000000e+00> : vector<128x32xf32>
    %11 = tpu.matmul %1, %4, %cst {dimension_numbers = #tpu.dot_dimension_numbers<[1], [0], [0], [1], [0, 0, 1, 1], [], []>} : vector<128x32xbf16>, vector<32x32xbf16>, vector<128x32xf32> -> vector<128x32xf32>
    %cst_8 = arith.constant 5.000000e-01 : f32
    %12 = vector.broadcast %cst_8 : f32 to vector<128x32xf32>
    %13 = arith.mulf %11, %12 : vector<128x32xf32>
    %14 = arith.truncf %13 : vector<128x32xf32> to vector<128x32xbf16>
    %cst_9 = arith.constant dense<0.000000e+00> : vector<128x64xf32>
    %15 = tpu.matmul %1, %7, %cst_9 {dimension_numbers = #tpu.dot_dimension_numbers<[1], [0], [0], [1], [0, 0, 1, 1], [], []>} : vector<128x32xbf16>, vector<32x64xbf16>, vector<128x64xf32> -> vector<128x64xf32>
    %16 = vector.extract_strided_slice %15 {offsets = [0, 0], sizes = [128, 32], strides = [1, 1]} : vector<128x64xf32> to vector<128x32xf32>
    %17 = arith.truncf %16 : vector<128x32xf32> to vector<128x32xbf16>
    %18 = vector.extract_strided_slice %15 {offsets = [0, 32], sizes = [128, 32], strides = [1, 1]} : vector<128x64xf32> to vector<128x32xf32>
    %19 = arith.truncf %18 : vector<128x32xf32> to vector<128x32xbf16>
    %20 = tpu.iota {dimensions = array<i32: 1>} : vector<128x128xi32>
    %c8_i32 = arith.constant 8 : i32
    %21 = vector.broadcast %c8_i32 : i32 to vector<128x128xi32>
    %22 = arith.cmpi slt, %20, %21 : vector<128x128xi32>
    %cst_10 = arith.constant 0.000000e+00 : f32
    %cst_11 = arith.constant -1.000000e+30 : f32
    %23 = vector.broadcast %cst_10 : f32 to vector<128x128xf32>
    %24 = vector.broadcast %cst_11 : f32 to vector<128x128xf32>
    %25 = arith.select %22, %23, %24 : vector<128x128xi1>, vector<128x128xf32>
    %26 = vector.extract_strided_slice %14 {offsets = [0, 0], sizes = [128, 4], strides = [1, 1]} : vector<128x32xbf16> to vector<128x4xbf16>
    %27 = vector.extract_strided_slice %17 {offsets = [0, 0], sizes = [128, 4], strides = [1, 1]} : vector<128x32xbf16> to vector<128x4xbf16>
    %28 = vector.extract_strided_slice %19 {offsets = [0, 0], sizes = [128, 4], strides = [1, 1]} : vector<128x32xbf16> to vector<128x4xbf16>
    %cst_12 = arith.constant dense<0.000000e+00> : vector<128x128xf32>
    %29 = tpu.matmul %26, %27, %cst_12 {dimension_numbers = #tpu.dot_dimension_numbers<[1], [1], [0], [0], [0, 0, 1, 0], [], []>} : vector<128x4xbf16>, vector<128x4xbf16>, vector<128x128xf32> -> vector<128x128xf32>
    %30 = arith.addf %29, %25 : vector<128x128xf32>
    %cst_13 = arith.constant dense<0xFF800000> : vector<128xf32>
    %31 = vector.multi_reduction <maximumf>, %30, %cst_13 [1] : vector<128x128xf32> to vector<128xf32>
    %32 = vector.shape_cast %31 : vector<128xf32> to vector<128x1xf32>
    %33 = vector.broadcast %32 : vector<128x1xf32> to vector<128x128xf32>
    %34 = arith.subf %30, %33 : vector<128x128xf32>
    %35 = math.exp %34 : vector<128x128xf32>
    %cst_14 = arith.constant dense<0.000000e+00> : vector<128xf32>
    %36 = vector.multi_reduction <add>, %35, %cst_14 [1] : vector<128x128xf32> to vector<128xf32>
    %37 = vector.shape_cast %36 : vector<128xf32> to vector<128x1xf32>
    %38 = tpu.reciprocal %37 {approx = true} : vector<128x1xf32> -> vector<128x1xf32>
    %39 = arith.truncf %35 : vector<128x128xf32> to vector<128x128xbf16>
    %cst_15 = arith.constant dense<0.000000e+00> : vector<128x4xf32>
    %40 = tpu.matmul %39, %28, %cst_15 {dimension_numbers = #tpu.dot_dimension_numbers<[1], [0], [0], [1], [0, 0, 1, 1], [], []>} : vector<128x128xbf16>, vector<128x4xbf16>, vector<128x4xf32> -> vector<128x4xf32>
    %41 = vector.broadcast %38 : vector<128x1xf32> to vector<128x4xf32>
    %42 = arith.mulf %40, %41 : vector<128x4xf32>
    %43 = arith.truncf %42 : vector<128x4xf32> to vector<128x4xbf16>
    %44 = vector.extract_strided_slice %14 {offsets = [0, 4], sizes = [128, 4], strides = [1, 1]} : vector<128x32xbf16> to vector<128x4xbf16>
    %45 = vector.extract_strided_slice %17 {offsets = [0, 4], sizes = [128, 4], strides = [1, 1]} : vector<128x32xbf16> to vector<128x4xbf16>
    %46 = vector.extract_strided_slice %19 {offsets = [0, 4], sizes = [128, 4], strides = [1, 1]} : vector<128x32xbf16> to vector<128x4xbf16>
    %cst_16 = arith.constant dense<0.000000e+00> : vector<128x128xf32>
    %47 = tpu.matmul %44, %45, %cst_16 {dimension_numbers = #tpu.dot_dimension_numbers<[1], [1], [0], [0], [0, 0, 1, 0], [], []>} : vector<128x4xbf16>, vector<128x4xbf16>, vector<128x128xf32> -> vector<128x128xf32>
    %48 = arith.addf %47, %25 : vector<128x128xf32>
    %cst_17 = arith.constant dense<0xFF800000> : vector<128xf32>
    %49 = vector.multi_reduction <maximumf>, %48, %cst_17 [1] : vector<128x128xf32> to vector<128xf32>
    %50 = vector.shape_cast %49 : vector<128xf32> to vector<128x1xf32>
    %51 = vector.broadcast %50 : vector<128x1xf32> to vector<128x128xf32>
    %52 = arith.subf %48, %51 : vector<128x128xf32>
    %53 = math.exp %52 : vector<128x128xf32>
    %cst_18 = arith.constant dense<0.000000e+00> : vector<128xf32>
    %54 = vector.multi_reduction <add>, %53, %cst_18 [1] : vector<128x128xf32> to vector<128xf32>
    %55 = vector.shape_cast %54 : vector<128xf32> to vector<128x1xf32>
    %56 = tpu.reciprocal %55 {approx = true} : vector<128x1xf32> -> vector<128x1xf32>
    %57 = arith.truncf %53 : vector<128x128xf32> to vector<128x128xbf16>
    %cst_19 = arith.constant dense<0.000000e+00> : vector<128x4xf32>
    %58 = tpu.matmul %57, %46, %cst_19 {dimension_numbers = #tpu.dot_dimension_numbers<[1], [0], [0], [1], [0, 0, 1, 1], [], []>} : vector<128x128xbf16>, vector<128x4xbf16>, vector<128x4xf32> -> vector<128x4xf32>
    %59 = vector.broadcast %56 : vector<128x1xf32> to vector<128x4xf32>
    %60 = arith.mulf %58, %59 : vector<128x4xf32>
    %61 = arith.truncf %60 : vector<128x4xf32> to vector<128x4xbf16>
    %62 = vector.extract_strided_slice %14 {offsets = [0, 8], sizes = [128, 4], strides = [1, 1]} : vector<128x32xbf16> to vector<128x4xbf16>
    %63 = vector.extract_strided_slice %17 {offsets = [0, 8], sizes = [128, 4], strides = [1, 1]} : vector<128x32xbf16> to vector<128x4xbf16>
    %64 = vector.extract_strided_slice %19 {offsets = [0, 8], sizes = [128, 4], strides = [1, 1]} : vector<128x32xbf16> to vector<128x4xbf16>
    %cst_20 = arith.constant dense<0.000000e+00> : vector<128x128xf32>
    %65 = tpu.matmul %62, %63, %cst_20 {dimension_numbers = #tpu.dot_dimension_numbers<[1], [1], [0], [0], [0, 0, 1, 0], [], []>} : vector<128x4xbf16>, vector<128x4xbf16>, vector<128x128xf32> -> vector<128x128xf32>
    %66 = arith.addf %65, %25 : vector<128x128xf32>
    %cst_21 = arith.constant dense<0xFF800000> : vector<128xf32>
    %67 = vector.multi_reduction <maximumf>, %66, %cst_21 [1] : vector<128x128xf32> to vector<128xf32>
    %68 = vector.shape_cast %67 : vector<128xf32> to vector<128x1xf32>
    %69 = vector.broadcast %68 : vector<128x1xf32> to vector<128x128xf32>
    %70 = arith.subf %66, %69 : vector<128x128xf32>
    %71 = math.exp %70 : vector<128x128xf32>
    %cst_22 = arith.constant dense<0.000000e+00> : vector<128xf32>
    %72 = vector.multi_reduction <add>, %71, %cst_22 [1] : vector<128x128xf32> to vector<128xf32>
    %73 = vector.shape_cast %72 : vector<128xf32> to vector<128x1xf32>
    %74 = tpu.reciprocal %73 {approx = true} : vector<128x1xf32> -> vector<128x1xf32>
    %75 = arith.truncf %71 : vector<128x128xf32> to vector<128x128xbf16>
    %cst_23 = arith.constant dense<0.000000e+00> : vector<128x4xf32>
    %76 = tpu.matmul %75, %64, %cst_23 {dimension_numbers = #tpu.dot_dimension_numbers<[1], [0], [0], [1], [0, 0, 1, 1], [], []>} : vector<128x128xbf16>, vector<128x4xbf16>, vector<128x4xf32> -> vector<128x4xf32>
    %77 = vector.broadcast %74 : vector<128x1xf32> to vector<128x4xf32>
    %78 = arith.mulf %76, %77 : vector<128x4xf32>
    %79 = arith.truncf %78 : vector<128x4xf32> to vector<128x4xbf16>
    %80 = vector.extract_strided_slice %14 {offsets = [0, 12], sizes = [128, 4], strides = [1, 1]} : vector<128x32xbf16> to vector<128x4xbf16>
    %81 = vector.extract_strided_slice %17 {offsets = [0, 12], sizes = [128, 4], strides = [1, 1]} : vector<128x32xbf16> to vector<128x4xbf16>
    %82 = vector.extract_strided_slice %19 {offsets = [0, 12], sizes = [128, 4], strides = [1, 1]} : vector<128x32xbf16> to vector<128x4xbf16>
    %cst_24 = arith.constant dense<0.000000e+00> : vector<128x128xf32>
    %83 = tpu.matmul %80, %81, %cst_24 {dimension_numbers = #tpu.dot_dimension_numbers<[1], [1], [0], [0], [0, 0, 1, 0], [], []>} : vector<128x4xbf16>, vector<128x4xbf16>, vector<128x128xf32> -> vector<128x128xf32>
    %84 = arith.addf %83, %25 : vector<128x128xf32>
    %cst_25 = arith.constant dense<0xFF800000> : vector<128xf32>
    %85 = vector.multi_reduction <maximumf>, %84, %cst_25 [1] : vector<128x128xf32> to vector<128xf32>
    %86 = vector.shape_cast %85 : vector<128xf32> to vector<128x1xf32>
    %87 = vector.broadcast %86 : vector<128x1xf32> to vector<128x128xf32>
    %88 = arith.subf %84, %87 : vector<128x128xf32>
    %89 = math.exp %88 : vector<128x128xf32>
    %cst_26 = arith.constant dense<0.000000e+00> : vector<128xf32>
    %90 = vector.multi_reduction <add>, %89, %cst_26 [1] : vector<128x128xf32> to vector<128xf32>
    %91 = vector.shape_cast %90 : vector<128xf32> to vector<128x1xf32>
    %92 = tpu.reciprocal %91 {approx = true} : vector<128x1xf32> -> vector<128x1xf32>
    %93 = arith.truncf %89 : vector<128x128xf32> to vector<128x128xbf16>
    %cst_27 = arith.constant dense<0.000000e+00> : vector<128x4xf32>
    %94 = tpu.matmul %93, %82, %cst_27 {dimension_numbers = #tpu.dot_dimension_numbers<[1], [0], [0], [1], [0, 0, 1, 1], [], []>} : vector<128x128xbf16>, vector<128x4xbf16>, vector<128x4xf32> -> vector<128x4xf32>
    %95 = vector.broadcast %92 : vector<128x1xf32> to vector<128x4xf32>
    %96 = arith.mulf %94, %95 : vector<128x4xf32>
    %97 = arith.truncf %96 : vector<128x4xf32> to vector<128x4xbf16>
    %98 = vector.extract_strided_slice %14 {offsets = [0, 16], sizes = [128, 4], strides = [1, 1]} : vector<128x32xbf16> to vector<128x4xbf16>
    %99 = vector.extract_strided_slice %17 {offsets = [0, 16], sizes = [128, 4], strides = [1, 1]} : vector<128x32xbf16> to vector<128x4xbf16>
    %100 = vector.extract_strided_slice %19 {offsets = [0, 16], sizes = [128, 4], strides = [1, 1]} : vector<128x32xbf16> to vector<128x4xbf16>
    %cst_28 = arith.constant dense<0.000000e+00> : vector<128x128xf32>
    %101 = tpu.matmul %98, %99, %cst_28 {dimension_numbers = #tpu.dot_dimension_numbers<[1], [1], [0], [0], [0, 0, 1, 0], [], []>} : vector<128x4xbf16>, vector<128x4xbf16>, vector<128x128xf32> -> vector<128x128xf32>
    %102 = arith.addf %101, %25 : vector<128x128xf32>
    %cst_29 = arith.constant dense<0xFF800000> : vector<128xf32>
    %103 = vector.multi_reduction <maximumf>, %102, %cst_29 [1] : vector<128x128xf32> to vector<128xf32>
    %104 = vector.shape_cast %103 : vector<128xf32> to vector<128x1xf32>
    %105 = vector.broadcast %104 : vector<128x1xf32> to vector<128x128xf32>
    %106 = arith.subf %102, %105 : vector<128x128xf32>
    %107 = math.exp %106 : vector<128x128xf32>
    %cst_30 = arith.constant dense<0.000000e+00> : vector<128xf32>
    %108 = vector.multi_reduction <add>, %107, %cst_30 [1] : vector<128x128xf32> to vector<128xf32>
    %109 = vector.shape_cast %108 : vector<128xf32> to vector<128x1xf32>
    %110 = tpu.reciprocal %109 {approx = true} : vector<128x1xf32> -> vector<128x1xf32>
    %111 = arith.truncf %107 : vector<128x128xf32> to vector<128x128xbf16>
    %cst_31 = arith.constant dense<0.000000e+00> : vector<128x4xf32>
    %112 = tpu.matmul %111, %100, %cst_31 {dimension_numbers = #tpu.dot_dimension_numbers<[1], [0], [0], [1], [0, 0, 1, 1], [], []>} : vector<128x128xbf16>, vector<128x4xbf16>, vector<128x4xf32> -> vector<128x4xf32>
    %113 = vector.broadcast %110 : vector<128x1xf32> to vector<128x4xf32>
    %114 = arith.mulf %112, %113 : vector<128x4xf32>
    %115 = arith.truncf %114 : vector<128x4xf32> to vector<128x4xbf16>
    %116 = vector.extract_strided_slice %14 {offsets = [0, 20], sizes = [128, 4], strides = [1, 1]} : vector<128x32xbf16> to vector<128x4xbf16>
    %117 = vector.extract_strided_slice %17 {offsets = [0, 20], sizes = [128, 4], strides = [1, 1]} : vector<128x32xbf16> to vector<128x4xbf16>
    %118 = vector.extract_strided_slice %19 {offsets = [0, 20], sizes = [128, 4], strides = [1, 1]} : vector<128x32xbf16> to vector<128x4xbf16>
    %cst_32 = arith.constant dense<0.000000e+00> : vector<128x128xf32>
    %119 = tpu.matmul %116, %117, %cst_32 {dimension_numbers = #tpu.dot_dimension_numbers<[1], [1], [0], [0], [0, 0, 1, 0], [], []>} : vector<128x4xbf16>, vector<128x4xbf16>, vector<128x128xf32> -> vector<128x128xf32>
    %120 = arith.addf %119, %25 : vector<128x128xf32>
    %cst_33 = arith.constant dense<0xFF800000> : vector<128xf32>
    %121 = vector.multi_reduction <maximumf>, %120, %cst_33 [1] : vector<128x128xf32> to vector<128xf32>
    %122 = vector.shape_cast %121 : vector<128xf32> to vector<128x1xf32>
    %123 = vector.broadcast %122 : vector<128x1xf32> to vector<128x128xf32>
    %124 = arith.subf %120, %123 : vector<128x128xf32>
    %125 = math.exp %124 : vector<128x128xf32>
    %cst_34 = arith.constant dense<0.000000e+00> : vector<128xf32>
    %126 = vector.multi_reduction <add>, %125, %cst_34 [1] : vector<128x128xf32> to vector<128xf32>
    %127 = vector.shape_cast %126 : vector<128xf32> to vector<128x1xf32>
    %128 = tpu.reciprocal %127 {approx = true} : vector<128x1xf32> -> vector<128x1xf32>
    %129 = arith.truncf %125 : vector<128x128xf32> to vector<128x128xbf16>
    %cst_35 = arith.constant dense<0.000000e+00> : vector<128x4xf32>
    %130 = tpu.matmul %129, %118, %cst_35 {dimension_numbers = #tpu.dot_dimension_numbers<[1], [0], [0], [1], [0, 0, 1, 1], [], []>} : vector<128x128xbf16>, vector<128x4xbf16>, vector<128x4xf32> -> vector<128x4xf32>
    %131 = vector.broadcast %128 : vector<128x1xf32> to vector<128x4xf32>
    %132 = arith.mulf %130, %131 : vector<128x4xf32>
    %133 = arith.truncf %132 : vector<128x4xf32> to vector<128x4xbf16>
    %134 = vector.extract_strided_slice %14 {offsets = [0, 24], sizes = [128, 4], strides = [1, 1]} : vector<128x32xbf16> to vector<128x4xbf16>
    %135 = vector.extract_strided_slice %17 {offsets = [0, 24], sizes = [128, 4], strides = [1, 1]} : vector<128x32xbf16> to vector<128x4xbf16>
    %136 = vector.extract_strided_slice %19 {offsets = [0, 24], sizes = [128, 4], strides = [1, 1]} : vector<128x32xbf16> to vector<128x4xbf16>
    %cst_36 = arith.constant dense<0.000000e+00> : vector<128x128xf32>
    %137 = tpu.matmul %134, %135, %cst_36 {dimension_numbers = #tpu.dot_dimension_numbers<[1], [1], [0], [0], [0, 0, 1, 0], [], []>} : vector<128x4xbf16>, vector<128x4xbf16>, vector<128x128xf32> -> vector<128x128xf32>
    %138 = arith.addf %137, %25 : vector<128x128xf32>
    %cst_37 = arith.constant dense<0xFF800000> : vector<128xf32>
    %139 = vector.multi_reduction <maximumf>, %138, %cst_37 [1] : vector<128x128xf32> to vector<128xf32>
    %140 = vector.shape_cast %139 : vector<128xf32> to vector<128x1xf32>
    %141 = vector.broadcast %140 : vector<128x1xf32> to vector<128x128xf32>
    %142 = arith.subf %138, %141 : vector<128x128xf32>
    %143 = math.exp %142 : vector<128x128xf32>
    %cst_38 = arith.constant dense<0.000000e+00> : vector<128xf32>
    %144 = vector.multi_reduction <add>, %143, %cst_38 [1] : vector<128x128xf32> to vector<128xf32>
    %145 = vector.shape_cast %144 : vector<128xf32> to vector<128x1xf32>
    %146 = tpu.reciprocal %145 {approx = true} : vector<128x1xf32> -> vector<128x1xf32>
    %147 = arith.truncf %143 : vector<128x128xf32> to vector<128x128xbf16>
    %cst_39 = arith.constant dense<0.000000e+00> : vector<128x4xf32>
    %148 = tpu.matmul %147, %136, %cst_39 {dimension_numbers = #tpu.dot_dimension_numbers<[1], [0], [0], [1], [0, 0, 1, 1], [], []>} : vector<128x128xbf16>, vector<128x4xbf16>, vector<128x4xf32> -> vector<128x4xf32>
    %149 = vector.broadcast %146 : vector<128x1xf32> to vector<128x4xf32>
    %150 = arith.mulf %148, %149 : vector<128x4xf32>
    %151 = arith.truncf %150 : vector<128x4xf32> to vector<128x4xbf16>
    %152 = vector.extract_strided_slice %14 {offsets = [0, 28], sizes = [128, 4], strides = [1, 1]} : vector<128x32xbf16> to vector<128x4xbf16>
    %153 = vector.extract_strided_slice %17 {offsets = [0, 28], sizes = [128, 4], strides = [1, 1]} : vector<128x32xbf16> to vector<128x4xbf16>
    %154 = vector.extract_strided_slice %19 {offsets = [0, 28], sizes = [128, 4], strides = [1, 1]} : vector<128x32xbf16> to vector<128x4xbf16>
    %cst_40 = arith.constant dense<0.000000e+00> : vector<128x128xf32>
    %155 = tpu.matmul %152, %153, %cst_40 {dimension_numbers = #tpu.dot_dimension_numbers<[1], [1], [0], [0], [0, 0, 1, 0], [], []>} : vector<128x4xbf16>, vector<128x4xbf16>, vector<128x128xf32> -> vector<128x128xf32>
    %156 = arith.addf %155, %25 : vector<128x128xf32>
    %cst_41 = arith.constant dense<0xFF800000> : vector<128xf32>
    %157 = vector.multi_reduction <maximumf>, %156, %cst_41 [1] : vector<128x128xf32> to vector<128xf32>
    %158 = vector.shape_cast %157 : vector<128xf32> to vector<128x1xf32>
    %159 = vector.broadcast %158 : vector<128x1xf32> to vector<128x128xf32>
    %160 = arith.subf %156, %159 : vector<128x128xf32>
    %161 = math.exp %160 : vector<128x128xf32>
    %cst_42 = arith.constant dense<0.000000e+00> : vector<128xf32>
    %162 = vector.multi_reduction <add>, %161, %cst_42 [1] : vector<128x128xf32> to vector<128xf32>
    %163 = vector.shape_cast %162 : vector<128xf32> to vector<128x1xf32>
    %164 = tpu.reciprocal %163 {approx = true} : vector<128x1xf32> -> vector<128x1xf32>
    %165 = arith.truncf %161 : vector<128x128xf32> to vector<128x128xbf16>
    %cst_43 = arith.constant dense<0.000000e+00> : vector<128x4xf32>
    %166 = tpu.matmul %165, %154, %cst_43 {dimension_numbers = #tpu.dot_dimension_numbers<[1], [0], [0], [1], [0, 0, 1, 1], [], []>} : vector<128x128xbf16>, vector<128x4xbf16>, vector<128x4xf32> -> vector<128x4xf32>
    %167 = vector.broadcast %164 : vector<128x1xf32> to vector<128x4xf32>
    %168 = arith.mulf %166, %167 : vector<128x4xf32>
    %169 = arith.truncf %168 : vector<128x4xf32> to vector<128x4xbf16>
    %170 = tpu.concatenate %43, %61, %79, %97, %115, %133, %151, %169 in 1 : vector<128x4xbf16>, vector<128x4xbf16>, vector<128x4xbf16>, vector<128x4xbf16>, vector<128x4xbf16>, vector<128x4xbf16>, vector<128x4xbf16>, vector<128x4xbf16> -> vector<128x32xbf16>
    %cst_44 = arith.constant dense<0.000000e+00> : vector<128x32xf32>
    %171 = tpu.matmul %170, %10, %cst_44 {dimension_numbers = #tpu.dot_dimension_numbers<[1], [0], [0], [1], [0, 0, 1, 1], [], []>} : vector<128x32xbf16>, vector<32x32xbf16>, vector<128x32xf32> -> vector<128x32xf32>
    %c0_45 = arith.constant 0 : index
    %c0_46 = arith.constant 0 : index
    %172 = vector.load %arg7[%c0_45, %c0_46] : memref<1x32xf32, #tpu.memory_space<vmem>>, vector<1x32xf32>
    %173 = vector.broadcast %172 : vector<1x32xf32> to vector<128x32xf32>
    %174 = arith.addf %171, %173 : vector<128x32xf32>
    %c0_47 = arith.constant 0 : index
    %c0_48 = arith.constant 0 : index
    %c0_49 = arith.constant 0 : index
    %175 = vector.load %arg8[%c0_47, %c0_48, %c0_49] : memref<1x128x32xf32, #tpu.memory_space<vmem>>, vector<1x128x32xf32>
    %176 = vector.shape_cast %175 : vector<1x128x32xf32> to vector<128x32xf32>
    %177 = vector.shape_cast %174 : vector<128x32xf32> to vector<1x128x32xf32>
    tpu.vector_store %arg8[%c0_47, %c0_48, %c0_49], %177 {strides = array<i32>} : memref<1x128x32xf32, #tpu.memory_space<vmem>>, vector<1x128x32xf32>,
    return
  }
  func.func @transform_0(%arg0: i32, %arg1: i32, %arg2: i32) -> (i32, i32, i32) {
    %c0_i32 = arith.constant 0 : i32
    %c0_i32_0 = arith.constant 0 : i32
    %c0_i32_1 = arith.constant 0 : i32
    return %arg0, %c0_i32, %c0_i32_0 : i32, i32, i32
  }
  func.func @transform_1(%arg0: i32, %arg1: i32, %arg2: i32) -> (i32, i32, i32) {
    %c0_i32 = arith.constant 0 : i32
    %c0_i32_0 = arith.constant 0 : i32
    %c0_i32_1 = arith.constant 0 : i32
    %c0_i32_2 = arith.constant 0 : i32
    return %c0_i32, %c0_i32_0, %c0_i32_1 : i32, i32, i32
  }
  func.func @transform_2(%arg0: i32, %arg1: i32, %arg2: i32) -> (i32, i32, i32) {
    %c0_i32 = arith.constant 0 : i32
    %c0_i32_0 = arith.constant 0 : i32
    %c0_i32_1 = arith.constant 0 : i32
    %c0_i32_2 = arith.constant 0 : i32
    return %c0_i32, %c0_i32_0, %c0_i32_1 : i32, i32, i32
  }
  func.func @transform_3(%arg0: i32, %arg1: i32, %arg2: i32) -> (i32, i32, i32) {
    %c0_i32 = arith.constant 0 : i32
    %c0_i32_0 = arith.constant 0 : i32
    %c0_i32_1 = arith.constant 0 : i32
    %c0_i32_2 = arith.constant 0 : i32
    return %c0_i32, %c0_i32_0, %c0_i32_1 : i32, i32, i32
  }
  func.func @transform_4(%arg0: i32, %arg1: i32, %arg2: i32) -> (i32, i32) {
    %c0_i32 = arith.constant 0 : i32
    %c0_i32_0 = arith.constant 0 : i32
    %c0_i32_1 = arith.constant 0 : i32
    return %c0_i32, %c0_i32_0 : i32, i32
  }
  func.func @transform_5(%arg0: i32, %arg1: i32, %arg2: i32) -> (i32, i32, i32) {
    %c0_i32 = arith.constant 0 : i32
    %c0_i32_0 = arith.constant 0 : i32
    return %arg0, %arg1, %c0_i32 : i32, i32, i32
  }
}

</mosaic_0001>

<llo_original>
// kernel: tpu_custom_call.1
$region0: #{tpu_custom_call.1}
  #allocation0 [shape = 'u32[]', space=smem, size = 0x4, offset = 0x4, fixed_abs, tag = 'smem constant byte address 0x4 - core index']
  #allocation1 [shape = 'u32[144,128]{1,0:T(1,128)}', space=vmem, size = 0x12000, scoped, tag = 'internal scratch']
  #allocation2 [shape = 'f32[128,32]{1,0:T(8,128)}', space=vmem, size = 0x10000, scoped, tag = 'scratch operand']
  %s0 = inlined_call_operand.vmem [shape: bf16[2,128,32], index: 0, kind: input, shape index: {}]
  %s1 = inlined_call_operand.vmem [shape: bf16[1,32,32], index: 1, kind: input, shape index: {}]
  %s2 = inlined_call_operand.vmem [shape: bf16[1,32,64], index: 2, kind: input, shape index: {}]
  %s3 = inlined_call_operand.vmem [shape: bf16[1,32,32], index: 3, kind: input, shape index: {}]
  %s4 = inlined_call_operand.vmem [shape: f32[1,32], index: 4, kind: input, shape index: {}]
  %s5 = inlined_call_operand.vmem [shape: f32[2,128,32], index: 5, kind: output, shape index: {}]
  %s6 = sld [smem:[#allocation0]]
  $region53: #{tpu_custom_call.1} parent=0
    _
  %s8 = ssub.s32 1, %s6
  %s9 = scalar_select 0, %s8, %s6
  loop: start=0, step=1, limit=4
  $region2: #{tpu_custom_call.1} parent=0 // loop_pre_header
    _
  $region3: #{tpu_custom_call.1} parent=0 // loop_header
    %s11 = sphi 0, %s15
    %p12 = scmp.ge.s32.totalorder %s11, 4
    %s18 = sphi 0, %s37
    %s19 = sphi 0, %s33
    %s20 = sphi 0, %s29
    %s21 = sphi 0, %s18
    %s22 = sphi 0, %s19
    %s23 = sphi 0, %s20
    %s24 = sphi 0, %s21
    %s25 = sphi 0, %s22
    %s26 = sphi 0, %s23
    %s40 = sphi 0, %s42
    %s43 = sphi 0, %s40
    %s44 = sphi 0, %s43
    %s60 = sphi 0, %s44
    %s64 = sphi 0, %s64
    %s66 = sphi 0, %s64
    %s67 = sphi 0, %s66
    %s81 = sphi 0, %s67
    %s85 = sphi 0, %s85
    %s87 = sphi 0, %s85
    %s88 = sphi 0, %s87
    %s102 = sphi 0, %s88
    %s106 = sphi 0, %s106
    %s108 = sphi 0, %s106
    %s109 = sphi 0, %s108
    %s123 = sphi 0, %s109
    %s127 = sphi 0, %s127
    %s129 = sphi 0, %s127
    %s130 = sphi 0, %s129
    %s144 = sphi 0, %s130
    %s152 = sphi 0, %s154
    %s155 = sphi 0, %s152
    %s156 = sphi 0, %s155
    %s172 = sphi 0, %s156
  $region4: #{tpu_custom_call.1} parent=0 // loop_header_branch
    %14 = sbr.rel (%p12) target = $region8
  $region5: #{tpu_custom_call.1} parent=0 // loop_body
    %s16 = ssub.s32 %s11, 1
    %s17 = ssub.s32 %s11, 2
    %s27 = sadd.s32 1, %s20
    %p28 = scmp.ge.s32.totalorder %s27, 1
    %s29 = scalar_select %p28, 0, %s27
    %s30 = sadd.s32 1, %s19
    %s31 = scalar_select %p28, %s30, %s19
    %p32 = scmp.ge.s32.totalorder %s31, 1
    %s33 = scalar_select %p32, 0, %s31
    %s34 = sadd.s32 1, %s18
    %s35 = scalar_select %p32, %s34, %s18
    %p36 = scmp.ge.s32.totalorder %s35, 2
    %s37 = scalar_select %p36, 0, %s35
    %s38 = ssub.s32 %s18, %s37
    %p39 = scmp.eq.s32.totalorder %s38, 0
    %s41 = sadd.s32 %s40, 1
    %s42 = scalar_select %p39, %s40, %s41
    %p45 = pneg %p39
    %p46 = scmp.eq.s32.totalorder %s11, 1
    %p47 = por %p45, %p46
    %p48 = scmp.ne.s32.totalorder %s40, %s43
    %p49 = scmp.eq.s32.totalorder %s11, 0
    %p50 = por %p48, %p49
    %p51 = scmp.ne.s32.totalorder %s40, %s43
    %p52 = scmp.eq.s32.totalorder %s16, 1
    %p53 = por %p51, %p52
    %p54 = scmp.ne.s32.totalorder %s43, %s44
    %p55 = scmp.eq.s32.totalorder %s16, 0
    %p56 = por %p54, %p55
    %p57 = scmp.ne.s32.totalorder %s43, %s44
    %p58 = scmp.eq.s32.totalorder %s17, 1
    %p59 = por %p57, %p58
    %p61 = scmp.ne.s32.totalorder %s44, %s60
    %p62 = scmp.eq.s32.totalorder %s17, 0
    %p63 = por %p61, %p62
    %s65 = sadd.s32 %s64, 1
    %p68 = scmp.eq.s32.totalorder %s11, 1
    %p69 = scmp.ne.s32.totalorder %s64, %s66
    %p70 = scmp.eq.s32.totalorder %s11, 0
    %p71 = por %p69, %p70
    %p72 = scmp.ne.s32.totalorder %s64, %s66
    %p73 = scmp.eq.s32.totalorder %s16, 1
    %p74 = por %p72, %p73
    %p75 = scmp.ne.s32.totalorder %s66, %s67
    %p76 = scmp.eq.s32.totalorder %s16, 0
    %p77 = por %p75, %p76
    %p78 = scmp.ne.s32.totalorder %s66, %s67
    %p79 = scmp.eq.s32.totalorder %s17, 1
    %p80 = por %p78, %p79
    %p82 = scmp.ne.s32.totalorder %s67, %s81
    %p83 = scmp.eq.s32.totalorder %s17, 0
    %p84 = por %p82, %p83
    %s86 = sadd.s32 %s85, 1
    %p89 = scmp.eq.s32.totalorder %s11, 1
    %p90 = scmp.ne.s32.totalorder %s85, %s87
    %p91 = scmp.eq.s32.totalorder %s11, 0
    %p92 = por %p90, %p91
    %p93 = scmp.ne.s32.totalorder %s85, %s87
    %p94 = scmp.eq.s32.totalorder %s16, 1
    %p95 = por %p93, %p94
    %p96 = scmp.ne.s32.totalorder %s87, %s88
    %p97 = scmp.eq.s32.totalorder %s16, 0
    %p98 = por %p96, %p97
    %p99 = scmp.ne.s32.totalorder %s87, %s88
    %p100 = scmp.eq.s32.totalorder %s17, 1
    %p101 = por %p99, %p100
    %p103 = scmp.ne.s32.totalorder %s88, %s102
    %p104 = scmp.eq.s32.totalorder %s17, 0
    %p105 = por %p103, %p104
    %s107 = sadd.s32 %s106, 1
    %p110 = scmp.eq.s32.totalorder %s11, 1
    %p111 = scmp.ne.s32.totalorder %s106, %s108
    %p112 = scmp.eq.s32.totalorder %s11, 0
    %p113 = por %p111, %p112
    %p114 = scmp.ne.s32.totalorder %s106, %s108
    %p115 = scmp.eq.s32.totalorder %s16, 1
    %p116 = por %p114, %p115
    %p117 = scmp.ne.s32.totalorder %s108, %s109
    %p118 = scmp.eq.s32.totalorder %s16, 0
    %p119 = por %p117, %p118
    %p120 = scmp.ne.s32.totalorder %s108, %s109
    %p121 = scmp.eq.s32.totalorder %s17, 1
    %p122 = por %p120, %p121
    %p124 = scmp.ne.s32.totalorder %s109, %s123
    %p125 = scmp.eq.s32.totalorder %s17, 0
    %p126 = por %p124, %p125
    %s128 = sadd.s32 %s127, 1
    %p131 = scmp.eq.s32.totalorder %s11, 1
    %p132 = scmp.ne.s32.totalorder %s127, %s129
    %p133 = scmp.eq.s32.totalorder %s11, 0
    %p134 = por %p132, %p133
    %p135 = scmp.ne.s32.totalorder %s127, %s129
    %p136 = scmp.eq.s32.totalorder %s16, 1
    %p137 = por %p135, %p136
    %p138 = scmp.ne.s32.totalorder %s129, %s130
    %p139 = scmp.eq.s32.totalorder %s16, 0
    %p140 = por %p138, %p139
    %p141 = scmp.ne.s32.totalorder %s129, %s130
    %p142 = scmp.eq.s32.totalorder %s17, 1
    %p143 = por %p141, %p142
    %p145 = scmp.ne.s32.totalorder %s130, %s144
    %p146 = scmp.eq.s32.totalorder %s17, 0
    %p147 = por %p145, %p146
    %s148 = ssub.s32 %s18, %s37
    %s149 = ssub.s32 %s19, %s33
    %s150 = sor.u32 %s148, %s149
    %p151 = scmp.eq.s32.totalorder %s150, 0
    %s153 = sadd.s32 %s152, 1
    %s154 = scalar_select %p151, %s152, %s153
    %p157 = pneg %p151
    %p158 = scmp.eq.s32.totalorder %s11, 1
    %p159 = por %p157, %p158
    %p160 = scmp.ne.s32.totalorder %s152, %s155
    %p161 = scmp.eq.s32.totalorder %s11, 0
    %p162 = por %p160, %p161
    %p163 = scmp.ne.s32.totalorder %s152, %s155
    %p164 = scmp.eq.s32.totalorder %s16, 1
    %p165 = por %p163, %p164
    %p166 = scmp.ne.s32.totalorder %s155, %s156
    %p167 = scmp.eq.s32.totalorder %s16, 0
    %p168 = por %p166, %p167
    %p169 = scmp.ne.s32.totalorder %s155, %s156
    %p170 = scmp.eq.s32.totalorder %s17, 1
    %p171 = por %p169, %p170
    %p173 = scmp.ne.s32.totalorder %s156, %s172
    %p174 = scmp.eq.s32.totalorder %s17, 0
    %p175 = por %p173, %p174
    %p176 = scmp.le.s32.totalorder 1, %s11
    %p177 = scmp.lt.s32.totalorder %s11, 3
    %p178 = pnand %p176, %p177
    %p179 = pneg %p178
    // Predicated region
    $region9: #{tpu_custom_call.1} parent=5 // pred_check
      _
    $region10: #{tpu_custom_call.1} parent=5 // pred_check_branch
      %181 = sbr.rel (%p178) target = $region12
    $region11: #{tpu_custom_call.1} parent=5 // pred_region
      %s182 = ssub.s32 %s11, 1
      // Predicated region
      $region13: #{tpu_custom_call.1} parent=11 // pred_check
        %p183 = pneg %p77
      $region14: #{tpu_custom_call.1} parent=11 // pred_check_branch
        %185 = sbr.rel (%p183) target = $region16
      $region15: #{tpu_custom_call.1} parent=11 // pred_region
        _
      $region16: #{tpu_custom_call.1} parent=11 // pred_fallthru
        _
      // Predicated region
      $region17: #{tpu_custom_call.1} parent=11 // pred_check
        %p186 = pneg %p98
      $region18: #{tpu_custom_call.1} parent=11 // pred_check_branch
        %188 = sbr.rel (%p186) target = $region20
      $region19: #{tpu_custom_call.1} parent=11 // pred_region
        _
      $region20: #{tpu_custom_call.1} parent=11 // pred_fallthru
        _
      // Predicated region
      $region21: #{tpu_custom_call.1} parent=11 // pred_check
        %p189 = pneg %p119
      $region22: #{tpu_custom_call.1} parent=11 // pred_check_branch
        %191 = sbr.rel (%p189) target = $region24
      $region23: #{tpu_custom_call.1} parent=11 // pred_region
        _
      $region24: #{tpu_custom_call.1} parent=11 // pred_fallthru
        _
      // Predicated region
      $region25: #{tpu_custom_call.1} parent=11 // pred_check
        %p192 = pneg %p140
      $region26: #{tpu_custom_call.1} parent=11 // pred_check_branch
        %194 = sbr.rel (%p192) target = $region28
      $region27: #{tpu_custom_call.1} parent=11 // pred_region
        _
      $region28: #{tpu_custom_call.1} parent=11 // pred_fallthru
        _
    $region12: #{tpu_custom_call.1} parent=5 // pred_fallthru
      _
    %p195 = scmp.lt.s32.totalorder %s11, 2
    // Predicated region
    $region29: #{tpu_custom_call.1} parent=5 // pred_check
      %p196 = pneg %p195
    $region30: #{tpu_custom_call.1} parent=5 // pred_check_branch
      %198 = sbr.rel (%p196) target = $region32
    $region31: #{tpu_custom_call.1} parent=5 // pred_region
      // Predicated region
      $region33: #{tpu_custom_call.1} parent=31 // pred_check
        %p199 = pneg %p50
      $region34: #{tpu_custom_call.1} parent=31 // pred_check_branch
        %201 = sbr.rel (%p199) target = $region36
      $region35: #{tpu_custom_call.1} parent=31 // pred_region
        %p202 = scmp.lt.s32.totalorder %s18, 1
        %s203 = scalar_select %p202, %s18, 1
        %s204 = smul.addr %s203, 16
        %s205 = smul.addr %s204, 4
        %s206 = scalar_lea.vmem %s0, %s205
      $region36: #{tpu_custom_call.1} parent=31 // pred_fallthru
        _
    $region32: #{tpu_custom_call.1} parent=5 // pred_fallthru
      _
    %p207 = scmp.le.s32.totalorder 1, %s11
    %p208 = scmp.lt.s32.totalorder %s11, 3
    %p209 = pnand %p207, %p208
    %p210 = pneg %p209
    // Predicated region
    $region37: #{tpu_custom_call.1} parent=5 // pred_check
      _
    $region38: #{tpu_custom_call.1} parent=5 // pred_check_branch
      %212 = sbr.rel (%p209) target = $region40
    $region39: #{tpu_custom_call.1} parent=5 // pred_region
      %s213 = ssub.s32 %s11, 1
      %p214 = scmp.lt.s32.totalorder %s21, 1
      %s215 = scalar_select %p214, %s21, 1
      %s216 = smul.addr %s215, 16
      %s217 = smul.addr %s216, 4
      %s218 = scalar_lea.vmem %s0, %s217
      %p219 = pneg %p56
      %p220 = pneg %p53
      %p221 = pneg %p77
      %p222 = pneg %p74
      %p223 = pneg %p98
      %p224 = pneg %p95
      %p225 = pneg %p119
      %p226 = pneg %p116
      %p227 = pneg %p140
      %p228 = pneg %p137
      %p229 = pneg %p168
      %p230 = pneg %p165
      %s231 = smul.u32 16, %s22
      %p232 = scmp.lt.s32.totalorder %s21, 1
      %s233 = scalar_select %p232, %s21, 1
      %p234 = scmp.lt.s32.totalorder %s231, 15
      %s235 = scalar_select %p234, %s231, 15
      %s236 = smul.addr %s233, 16
      %s237 = sadd.s32 %s235, %s236
      %s238 = smul.addr %s237, 8
      %s239 = scalar_lea.vmem %s5, %s238
      %p240 = scmp.lt.s32.totalorder %s21, 1
      %s241 = scalar_select %p240, %s21, 1
      %s242 = smul.addr %s241, 16
      %s243 = smul.addr %s242, 4
      %s244 = scalar_lea.vmem %s0, %s243
      %s245 = smul.u32 16, %s22
      %p246 = scmp.lt.s32.totalorder %s21, 1
      %s247 = scalar_select %p246, %s21, 1
      %p248 = scmp.lt.s32.totalorder %s245, 15
      %s249 = scalar_select %p248, %s245, 15
      %s250 = smul.addr %s247, 16
      %s251 = sadd.s32 %s249, %s250
      %s252 = smul.addr %s251, 8
      %s253 = scalar_lea.vmem %s5, %s252
      %s254 = smul.u32 16, %s22
      %v256 = vld [vmem:[%s244] sm:$0xf]
      %v257 = vld [vmem:[%s244 + $0x4] sm:$0xf]
      %v258 = vld [vmem:[%s244 + $0x8] sm:$0xf]
      %v259 = vld [vmem:[%s244 + $0xc] sm:$0xf]
      %v260 = vld [vmem:[%s244 + $0x10] sm:$0xf]
      %v261 = vld [vmem:[%s244 + $0x14] sm:$0xf]
      %v262 = vld [vmem:[%s244 + $0x18] sm:$0xf]
      %v263 = vld [vmem:[%s244 + $0x1c] sm:$0xf]
      %v264 = vld [vmem:[%s244 + $0x20] sm:$0xf]
      %v265 = vld [vmem:[%s244 + $0x24] sm:$0xf]
      %v266 = vld [vmem:[%s244 + $0x28] sm:$0xf]
      %v267 = vld [vmem:[%s244 + $0x2c] sm:$0xf]
      %v268 = vld [vmem:[%s244 + $0x30] sm:$0xf]
      %v269 = vld [vmem:[%s244 + $0x34] sm:$0xf]
      %v270 = vld [vmem:[%s244 + $0x38] sm:$0xf]
      %v271 = vld [vmem:[%s244 + $0x3c] sm:$0xf]
      %s272 = smul.u32 %s23, 4
      %s273 = smul.addr %s272, 4
      %s274 = scalar_lea.vmem %s1, %s273
      %v275 = vld [vmem:[%s274] sm:$0xf]
      %v276 = vld [vmem:[%s274 + $0x4] sm:$0xf]
      %v277 = vld [vmem:[%s274 + $0x8] sm:$0xf]
      %v278 = vld [vmem:[%s274 + $0xc] sm:$0xf]
      %s279 = smul.addr %s272, 4
      %s280 = scalar_lea.vmem %s2, %s279
      %v281 = vld [vmem:[%s280] sm:$0xf]
      %v282 = vld [vmem:[%s280 + $0x4] sm:$0xf]
      %v283 = vld [vmem:[%s280 + $0x8] sm:$0xf]
      %v284 = vld [vmem:[%s280 + $0xc] sm:$0xf]
      %s285 = smul.addr %s272, 4
      %s286 = scalar_lea.vmem %s3, %s285
      %v287 = vld [vmem:[%s286] sm:$0xf]
      %v288 = vld [vmem:[%s286 + $0x4] sm:$0xf]
      %v289 = vld [vmem:[%s286 + $0x8] sm:$0xf]
      %v290 = vld [vmem:[%s286 + $0xc] sm:$0xf]
      %v307 = vunpack.c.l.b16 %v256
      %v308 = vunpack.c.l.b16 %v257
      %v309 = vunpack.c.l.b16 %v258
      %v310 = vunpack.c.l.b16 %v259
      %v311 = vunpack.c.l.b16 %v260
      %v312 = vunpack.c.l.b16 %v261
      %v313 = vunpack.c.l.b16 %v262
      %v314 = vunpack.c.l.b16 %v263
      %v315 = vunpack.c.l.b16 %v264
      %v316 = vunpack.c.l.b16 %v265
      %v317 = vunpack.c.l.b16 %v266
      %v318 = vunpack.c.l.b16 %v267
      %v319 = vunpack.c.l.b16 %v268
      %v320 = vunpack.c.l.b16 %v269
      %v321 = vunpack.c.l.b16 %v270
      %v322 = vunpack.c.l.b16 %v271
      %v323 = vpack.c.b16 %v308, %v307
      %v324 = vpack.c.b16 %v310, %v309
      %v325 = vpack.c.b16 %v312, %v311
      %v326 = vpack.c.b16 %v314, %v313
      %v327 = vpack.c.b16 %v316, %v315
      %v328 = vpack.c.b16 %v318, %v317
      %v329 = vpack.c.b16 %v320, %v319
      %v330 = vpack.c.b16 %v322, %v321
      %v335 = vunpack.c.l.b16 %v275
      %v336 = vunpack.c.l.b16 %v276
      %v337 = vunpack.c.l.b16 %v277
      %v338 = vunpack.c.l.b16 %v278
      %v339 = vpack.c.b16 %v336, %v335
      %v340 = vpack.c.b16 %v338, %v337
      %vm343 = vcmask 261120
      %v345 = vsel %vm343, %v323, 0
      %v348 = vsel %vm343, %v324, 0
      %v351 = vsel %vm343, %v325, 0
      %v354 = vsel %vm343, %v326, 0
      %v357 = vsel %vm343, %v327, 0
      %v360 = vsel %vm343, %v328, 0
      %v363 = vsel %vm343, %v329, 0
      %v366 = vsel %vm343, %v330, 0
      %368 = vmatprep.subr.bf16.mxu0 0
      %369 = vmatpush1.bf16.msra.mxu0 %v339
      %370 = vmatprep.subr.bf16.mxu0 0
      %371 = vmatpush1.bf16.msra.mxu0 %v340
      %372 = vmatprep.subr.bf16.mxu0 0
      %373 = vmatpush1.bf16.msra.mxu0 0
      %374 = vmatprep.subr.bf16.mxu0 0
      %375 = vmatpush1.bf16.msra.mxu0 0
      %376 = vmatprep.subr.bf16.mxu0 0
      %377 = vmatpush1.bf16.msra.mxu0 0
      %378 = vmatprep.subr.bf16.mxu0 0
      %379 = vmatpush1.bf16.msra.mxu0 0
      %380 = vmatprep.subr.bf16.mxu0 0
      %381 = vmatpush1.bf16.msra.mxu0 0
      %382 = vmatprep.subr.bf16.mxu0 0
      %383 = vmatpush1.bf16.msra.mxu0 0
      %384 = vmatprep.subr.bf16.mxu0 0
      %385 = vmatpush1.bf16.msra.mxu0 0
      %386 = vmatprep.subr.bf16.mxu0 0
      %387 = vmatpush1.bf16.msra.mxu0 0
      %388 = vmatprep.subr.bf16.mxu0 0
      %389 = vmatpush1.bf16.msra.mxu0 0
      %390 = vmatprep.subr.bf16.mxu0 0
      %391 = vmatpush1.bf16.msra.mxu0 0
      %392 = vmatprep.subr.bf16.mxu0 0
      %393 = vmatpush1.bf16.msra.mxu0 0
      %394 = vmatprep.subr.bf16.mxu0 0
      %395 = vmatpush1.bf16.msra.mxu0 0
      %396 = vmatprep.subr.bf16.mxu0 0
      %397 = vmatpush1.bf16.msra.mxu0 0
      %398 = vmatprep.subr.bf16.mxu0 0
      %399 = vmatpush1.bf16.msra.mxu0 0
      %400 = vmatprep.mubr.bf16.mxu0 0
      %401 = vmatmul.mubr.bf16.gmra.mrb[0].mxu0 %v345
      %v402 = vpop.f32.mrb[0].mxu0
      %v403 = vadd.f32 0.0, %v402
      %v404 = vpop.f32.mrb[0].mxu0
      %v405 = vpop.f32.mrb[0].mxu0
      %v406 = vadd.f32 0.0, %v405
      %v407 = vpop.f32.mrb[0].mxu0
      %408 = vmatprep.mubr.bf16.mxu0 0
      %409 = vmatmul.mubr.bf16.gmra.mrb[0].mxu0 %v348
      %v410 = vpop.f32.mrb[0].mxu0
      %v411 = vadd.f32 0.0, %v410
      %v412 = vpop.f32.mrb[0].mxu0
      %v413 = vpop.f32.mrb[0].mxu0
      %v414 = vadd.f32 0.0, %v413
      %v415 = vpop.f32.mrb[0].mxu0
      %416 = vmatprep.mubr.bf16.mxu0 0
      %417 = vmatmul.mubr.bf16.gmra.mrb[0].mxu0 %v351
      %v418 = vpop.f32.mrb[0].mxu0
      %v419 = vadd.f32 0.0, %v418
      %v420 = vpop.f32.mrb[0].mxu0
      %v421 = vpop.f32.mrb[0].mxu0
      %v422 = vadd.f32 0.0, %v421
      %v423 = vpop.f32.mrb[0].mxu0
      %424 = vmatprep.mubr.bf16.mxu0 0
      %425 = vmatmul.mubr.bf16.gmra.mrb[0].mxu0 %v354
      %v426 = vpop.f32.mrb[0].mxu0
      %v427 = vadd.f32 0.0, %v426
      %v428 = vpop.f32.mrb[0].mxu0
      %v429 = vpop.f32.mrb[0].mxu0
      %v430 = vadd.f32 0.0, %v429
      %v431 = vpop.f32.mrb[0].mxu0
      %432 = vmatprep.mubr.bf16.mxu0 0
      %433 = vmatmul.mubr.bf16.gmra.mrb[0].mxu0 %v357
      %v434 = vpop.f32.mrb[0].mxu0
      %v435 = vadd.f32 0.0, %v434
      %v436 = vpop.f32.mrb[0].mxu0
      %v437 = vpop.f32.mrb[0].mxu0
      %v438 = vadd.f32 0.0, %v437
      %v439 = vpop.f32.mrb[0].mxu0
      %440 = vmatprep.mubr.bf16.mxu0 0
      %441 = vmatmul.mubr.bf16.gmra.mrb[0].mxu0 %v360
      %v442 = vpop.f32.mrb[0].mxu0
      %v443 = vadd.f32 0.0, %v442
      %v444 = vpop.f32.mrb[0].mxu0
      %v445 = vpop.f32.mrb[0].mxu0
      %v446 = vadd.f32 0.0, %v445
      %v447 = vpop.f32.mrb[0].mxu0
      %448 = vmatprep.mubr.bf16.mxu0 0
      %449 = vmatmul.mubr.bf16.gmra.mrb[0].mxu0 %v363
      %v450 = vpop.f32.mrb[0].mxu0
      %v451 = vadd.f32 0.0, %v450
      %v452 = vpop.f32.mrb[0].mxu0
      %v453 = vpop.f32.mrb[0].mxu0
      %v454 = vadd.f32 0.0, %v453
      %v455 = vpop.f32.mrb[0].mxu0
      %456 = vmatprep.mubr.bf16.mxu0 0
      %457 = vmatmul.mubr.bf16.gmra.mrb[0].mxu0 %v366
      %v458 = vpop.f32.mrb[0].mxu0
      %v459 = vadd.f32 0.0, %v458
      %v460 = vpop.f32.mrb[0].mxu0
      %v461 = vpop.f32.mrb[0].mxu0
      %v462 = vadd.f32 0.0, %v461
      %v463 = vpop.f32.mrb[0].mxu0
      %464 = vdwg.mxu0
      %v465 = vmul.f32 %v403, 0.5
      %v466 = vmul.f32 %v406, 0.5
      %v467 = vmul.f32 %v411, 0.5
      %v468 = vmul.f32 %v414, 0.5
      %v469 = vmul.f32 %v419, 0.5
      %v470 = vmul.f32 %v422, 0.5
      %v471 = vmul.f32 %v427, 0.5
      %v472 = vmul.f32 %v430, 0.5
      %v473 = vmul.f32 %v435, 0.5
      %v474 = vmul.f32 %v438, 0.5
      %v475 = vmul.f32 %v443, 0.5
      %v476 = vmul.f32 %v446, 0.5
      %v477 = vmul.f32 %v451, 0.5
      %v478 = vmul.f32 %v454, 0.5
      %v479 = vmul.f32 %v459, 0.5
      %v480 = vmul.f32 %v462, 0.5
      %v481 = vpack.c.bf16 %v466, %v465
      %v482 = vpack.c.bf16 %v468, %v467
      %v483 = vpack.c.bf16 %v470, %v469
      %v484 = vpack.c.bf16 %v472, %v471
      %v485 = vpack.c.bf16 %v474, %v473
      %v486 = vpack.c.bf16 %v476, %v475
      %v487 = vpack.c.bf16 %v478, %v477
      %v488 = vpack.c.bf16 %v480, %v479
      %v493 = vunpack.c.l.b16 %v281
      %v494 = vunpack.c.l.b16 %v282
      %v495 = vunpack.c.l.b16 %v283
      %v496 = vunpack.c.l.b16 %v284
      %v497 = vpack.c.b16 %v494, %v493
      %v498 = vpack.c.b16 %v496, %v495
      %501 = vmatprep.subr.bf16.mxu0 0
      %502 = vmatpush1.bf16.msra.mxu0 %v497
      %503 = vmatprep.subr.bf16.mxu0 0
      %504 = vmatpush1.bf16.msra.mxu0 %v498
      %505 = vmatprep.subr.bf16.mxu0 0
      %506 = vmatpush1.bf16.msra.mxu0 0
      %507 = vmatprep.subr.bf16.mxu0 0
      %508 = vmatpush1.bf16.msra.mxu0 0
      %509 = vmatprep.subr.bf16.mxu0 0
      %510 = vmatpush1.bf16.msra.mxu0 0
      %511 = vmatprep.subr.bf16.mxu0 0
      %512 = vmatpush1.bf16.msra.mxu0 0
      %513 = vmatprep.subr.bf16.mxu0 0
      %514 = vmatpush1.bf16.msra.mxu0 0
      %515 = vmatprep.subr.bf16.mxu0 0
      %516 = vmatpush1.bf16.msra.mxu0 0
      %517 = vmatprep.subr.bf16.mxu0 0
      %518 = vmatpush1.bf16.msra.mxu0 0
      %519 = vmatprep.subr.bf16.mxu0 0
      %520 = vmatpush1.bf16.msra.mxu0 0
      %521 = vmatprep.subr.bf16.mxu0 0
      %522 = vmatpush1.bf16.msra.mxu0 0
      %523 = vmatprep.subr.bf16.mxu0 0
      %524 = vmatpush1.bf16.msra.mxu0 0
      %525 = vmatprep.subr.bf16.mxu0 0
      %526 = vmatpush1.bf16.msra.mxu0 0
      %527 = vmatprep.subr.bf16.mxu0 0
      %528 = vmatpush1.bf16.msra.mxu0 0
      %529 = vmatprep.subr.bf16.mxu0 0
      %530 = vmatpush1.bf16.msra.mxu0 0
      %531 = vmatprep.subr.bf16.mxu0 0
      %532 = vmatpush1.bf16.msra.mxu0 0
      %533 = vmatprep.mubr.bf16.mxu0 0
      %534 = vmatmul.mubr.bf16.gmra.mrb[0].mxu0 %v345
      %v535 = vpop.f32.mrb[0].mxu0
      %v536 = vadd.f32 0.0, %v535
      %v537 = vpop.f32.mrb[0].mxu0
      %v538 = vpop.f32.mrb[0].mxu0
      %v539 = vadd.f32 0.0, %v538
      %v540 = vpop.f32.mrb[0].mxu0
      %541 = vmatprep.mubr.bf16.mxu0 0
      %542 = vmatmul.mubr.bf16.gmra.mrb[0].mxu0 %v348
      %v543 = vpop.f32.mrb[0].mxu0
      %v544 = vadd.f32 0.0, %v543
      %v545 = vpop.f32.mrb[0].mxu0
      %v546 = vpop.f32.mrb[0].mxu0
      %v547 = vadd.f32 0.0, %v546
      %v548 = vpop.f32.mrb[0].mxu0
      %549 = vmatprep.mubr.bf16.mxu0 0
      %550 = vmatmul.mubr.bf16.gmra.mrb[0].mxu0 %v351
      %v551 = vpop.f32.mrb[0].mxu0
      %v552 = vadd.f32 0.0, %v551
      %v553 = vpop.f32.mrb[0].mxu0
      %v554 = vpop.f32.mrb[0].mxu0
      %v555 = vadd.f32 0.0, %v554
      %v556 = vpop.f32.mrb[0].mxu0
      %557 = vmatprep.mubr.bf16.mxu0 0
      %558 = vmatmul.mubr.bf16.gmra.mrb[0].mxu0 %v354
      %v559 = vpop.f32.mrb[0].mxu0
      %v560 = vadd.f32 0.0, %v559
      %v561 = vpop.f32.mrb[0].mxu0
      %v562 = vpop.f32.mrb[0].mxu0
      %v563 = vadd.f32 0.0, %v562
      %v564 = vpop.f32.mrb[0].mxu0
      %565 = vmatprep.mubr.bf16.mxu0 0
      %566 = vmatmul.mubr.bf16.gmra.mrb[0].mxu0 %v357
      %v567 = vpop.f32.mrb[0].mxu0
      %v568 = vadd.f32 0.0, %v567
      %v569 = vpop.f32.mrb[0].mxu0
      %v570 = vpop.f32.mrb[0].mxu0
      %v571 = vadd.f32 0.0, %v570
      %v572 = vpop.f32.mrb[0].mxu0
      %573 = vmatprep.mubr.bf16.mxu0 0
      %574 = vmatmul.mubr.bf16.gmra.mrb[0].mxu0 %v360
      %v575 = vpop.f32.mrb[0].mxu0
      %v576 = vadd.f32 0.0, %v575
      %v577 = vpop.f32.mrb[0].mxu0
      %v578 = vpop.f32.mrb[0].mxu0
      %v579 = vadd.f32 0.0, %v578
      %v580 = vpop.f32.mrb[0].mxu0
      %581 = vmatprep.mubr.bf16.mxu0 0
      %582 = vmatmul.mubr.bf16.gmra.mrb[0].mxu0 %v363
      %v583 = vpop.f32.mrb[0].mxu0
      %v584 = vadd.f32 0.0, %v583
      %v585 = vpop.f32.mrb[0].mxu0
      %v586 = vpop.f32.mrb[0].mxu0
      %v587 = vadd.f32 0.0, %v586
      %v588 = vpop.f32.mrb[0].mxu0
      %589 = vmatprep.mubr.bf16.mxu0 0
      %590 = vmatmul.mubr.bf16.gmra.mrb[0].mxu0 %v366
      %v591 = vpop.f32.mrb[0].mxu0
      %v592 = vadd.f32 0.0, %v591
      %v593 = vpop.f32.mrb[0].mxu0
      %v594 = vpop.f32.mrb[0].mxu0
      %v595 = vadd.f32 0.0, %v594
      %v596 = vpop.f32.mrb[0].mxu0
      %597 = vdwg.mxu0
      %v598 = vpack.c.bf16 %v539, %v536
      %v599 = vpack.c.bf16 %v547, %v544
      %v600 = vpack.c.bf16 %v555, %v552
      %v601 = vpack.c.bf16 %v563, %v560
      %v602 = vpack.c.bf16 %v571, %v568
      %v603 = vpack.c.bf16 %v579, %v576
      %v604 = vpack.c.bf16 %v587, %v584
      %v605 = vpack.c.bf16 %v595, %v592
      %v606 = vlaneseq
      %v607 = vand.u32 %v606, 127
      %vm608 = vcmp.lt.s32.totalorder %v607, 8
      %v609 = vsel %vm608, 0.0, -1e+30
      %vm610 = vcmask 31744
      %v612 = vsel %vm610, %v481, 0
      %v615 = vsel %vm610, %v482, 0
      %v618 = vsel %vm610, %v483, 0
      %v621 = vsel %vm610, %v484, 0
      %v624 = vsel %vm610, %v485, 0
      %v627 = vsel %vm610, %v486, 0
      %v630 = vsel %vm610, %v487, 0
      %v633 = vsel %vm610, %v488, 0
      %v636 = vsel %vm610, %v598, 0
      %v639 = vsel %vm610, %v599, 0
      %v642 = vsel %vm610, %v600, 0
      %v645 = vsel %vm610, %v601, 0
      %v648 = vsel %vm610, %v602, 0
      %v651 = vsel %vm610, %v603, 0
      %v654 = vsel %vm610, %v604, 0
      %v657 = vsel %vm610, %v605, 0
      %659 = vmatprep.subr.bf16.mxu0 0
      %660 = vmatpush1.bf16.xpose.msra.mxu0 %v636
      %661 = vmatprep.subr.bf16.mxu0 0
      %662 = vmatpush1.bf16.xpose.msra.mxu0 %v639
      %663 = vmatprep.subr.bf16.mxu0 0
      %664 = vmatpush1.bf16.xpose.msra.mxu0 %v642
      %665 = vmatprep.subr.bf16.mxu0 0
      %666 = vmatpush1.bf16.xpose.msra.mxu0 %v645
      %667 = vmatprep.subr.bf16.mxu0 0
      %668 = vmatpush1.bf16.xpose.msra.mxu0 %v648
      %669 = vmatprep.subr.bf16.mxu0 0
      %670 = vmatpush1.bf16.xpose.msra.mxu0 %v651
      %671 = vmatprep.subr.bf16.mxu0 0
      %672 = vmatpush1.bf16.xpose.msra.mxu0 %v654
      %673 = vmatprep.subr.bf16.mxu0 0
      %674 = vmatpush1.bf16.xpose.msra.mxu0 %v657
      %675 = vmatprep.subr.bf16.mxu0 0
      %676 = vmatpush1.bf16.xpose.msra.mxu0 0
      %677 = vmatprep.subr.bf16.mxu0 0
      %678 = vmatpush1.bf16.xpose.msra.mxu0 0
      %679 = vmatprep.subr.bf16.mxu0 0
      %680 = vmatpush1.bf16.xpose.msra.mxu0 0
      %681 = vmatprep.subr.bf16.mxu0 0
      %682 = vmatpush1.bf16.xpose.msra.mxu0 0
      %683 = vmatprep.subr.bf16.mxu0 0
      %684 = vmatpush1.bf16.xpose.msra.mxu0 0
      %685 = vmatprep.subr.bf16.mxu0 0
      %686 = vmatpush1.bf16.xpose.msra.mxu0 0
      %687 = vmatprep.subr.bf16.mxu0 0
      %688 = vmatpush1.bf16.xpose.msra.mxu0 0
      %689 = vmatprep.subr.bf16.mxu0 0
      %690 = vmatpush1.bf16.xpose.msra.mxu0 0
      %691 = vmatprep.mubr.bf16.mxu0 0
      %692 = vmatmul.mubr.bf16.gmra.mrb[0].mxu0 %v612
      %v693 = vpop.f32.mrb[0].mxu0
      %v694 = vadd.f32 %v609, %v693
      %v695 = vpop.f32.mrb[0].mxu0
      %v696 = vpop.f32.mrb[0].mxu0
      %v697 = vadd.f32 %v609, %v696
      %v698 = vpop.f32.mrb[0].mxu0
      %699 = vmatprep.mubr.bf16.mxu0 0
      %700 = vmatmul.mubr.bf16.gmra.mrb[0].mxu0 %v615
      %v701 = vpop.f32.mrb[0].mxu0
      %v702 = vadd.f32 %v609, %v701
      %v703 = vpop.f32.mrb[0].mxu0
      %v704 = vpop.f32.mrb[0].mxu0
      %v705 = vadd.f32 %v609, %v704
      %v706 = vpop.f32.mrb[0].mxu0
      %707 = vmatprep.mubr.bf16.mxu0 0
      %708 = vmatmul.mubr.bf16.gmra.mrb[0].mxu0 %v618
      %v709 = vpop.f32.mrb[0].mxu0
      %v710 = vadd.f32 %v609, %v709
      %v711 = vpop.f32.mrb[0].mxu0
      %v712 = vpop.f32.mrb[0].mxu0
      %v713 = vadd.f32 %v609, %v712
      %v714 = vpop.f32.mrb[0].mxu0
      %715 = vmatprep.mubr.bf16.mxu0 0
      %716 = vmatmul.mubr.bf16.gmra.mrb[0].mxu0 %v621
      %v717 = vpop.f32.mrb[0].mxu0
      %v718 = vadd.f32 %v609, %v717
      %v719 = vpop.f32.mrb[0].mxu0
      %v720 = vpop.f32.mrb[0].mxu0
      %v721 = vadd.f32 %v609, %v720
      %v722 = vpop.f32.mrb[0].mxu0
      %723 = vmatprep.mubr.bf16.mxu0 0
      %724 = vmatmul.mubr.bf16.gmra.mrb[0].mxu0 %v624
      %v725 = vpop.f32.mrb[0].mxu0
      %v726 = vadd.f32 %v609, %v725
      %v727 = vpop.f32.mrb[0].mxu0
      %v728 = vpop.f32.mrb[0].mxu0
      %v729 = vadd.f32 %v609, %v728
      %v730 = vpop.f32.mrb[0].mxu0
      %731 = vmatprep.mubr.bf16.mxu0 0
      %732 = vmatmul.mubr.bf16.gmra.mrb[0].mxu0 %v627
      %v733 = vpop.f32.mrb[0].mxu0
      %v734 = vadd.f32 %v609, %v733
      %v735 = vpop.f32.mrb[0].mxu0
      %v736 = vpop.f32.mrb[0].mxu0
      %v737 = vadd.f32 %v609, %v736
      %v738 = vpop.f32.mrb[0].mxu0
      %739 = vmatprep.mubr.bf16.mxu0 0
      %740 = vmatmul.mubr.bf16.gmra.mrb[0].mxu0 %v630
      %v741 = vpop.f32.mrb[0].mxu0
      %v742 = vadd.f32 %v609, %v741
      %v743 = vpop.f32.mrb[0].mxu0
      %v744 = vpop.f32.mrb[0].mxu0
      %v745 = vadd.f32 %v609, %v744
      %v746 = vpop.f32.mrb[0].mxu0
      %747 = vmatprep.mubr.bf16.mxu0 0
      %748 = vmatmul.mubr.bf16.gmra.mrb[0].mxu0 %v633
      %v749 = vpop.f32.mrb[0].mxu0
      %v750 = vadd.f32 %v609, %v749
      %v751 = vpop.f32.mrb[0].mxu0
      %v752 = vpop.f32.mrb[0].mxu0
      %v753 = vadd.f32 %v609, %v752
      %v754 = vpop.f32.mrb[0].mxu0
      %755 = vdwg.mxu0
      %756 = vmax.xlane.f32.xlu0 %v694
      %v757 = vpop.xlane.xlu0 %756
      %758 = vmax.xlane.f32.xlu0 %v697
      %v759 = vpop.xlane.xlu0 %758
      %760 = vmax.xlane.f32.xlu0 %v702
      %v761 = vpop.xlane.xlu0 %760
      %762 = vmax.xlane.f32.xlu0 %v705
      %v763 = vpop.xlane.xlu0 %762
      %764 = vmax.xlane.f32.xlu0 %v710
      %v765 = vpop.xlane.xlu0 %764
      %766 = vmax.xlane.f32.xlu0 %v713
      %v767 = vpop.xlane.xlu0 %766
      %768 = vmax.xlane.f32.xlu0 %v718
      %v769 = vpop.xlane.xlu0 %768
      %770 = vmax.xlane.f32.xlu0 %v721
      %v771 = vpop.xlane.xlu0 %770
      %772 = vmax.xlane.f32.xlu0 %v726
      %v773 = vpop.xlane.xlu0 %772
      %774 = vmax.xlane.f32.xlu0 %v729
      %v775 = vpop.xlane.xlu0 %774
      %776 = vmax.xlane.f32.xlu0 %v734
      %v777 = vpop.xlane.xlu0 %776
      %778 = vmax.xlane.f32.xlu0 %v737
      %v779 = vpop.xlane.xlu0 %778
      %780 = vmax.xlane.f32.xlu0 %v742
      %v781 = vpop.xlane.xlu0 %780
      %782 = vmax.xlane.f32.xlu0 %v745
      %v783 = vpop.xlane.xlu0 %782
      %784 = vmax.xlane.f32.xlu0 %v750
      %v785 = vpop.xlane.xlu0 %784
      %786 = vmax.xlane.f32.xlu0 %v753
      %v787 = vpop.xlane.xlu0 %786
      %v788 = vsub.f32 %v694, %v757
      %v789 = vsub.f32 %v697, %v759
      %v790 = vsub.f32 %v702, %v761
      %v791 = vsub.f32 %v705, %v763
      %v792 = vsub.f32 %v710, %v765
      %v793 = vsub.f32 %v713, %v767
      %v794 = vsub.f32 %v718, %v769
      %v795 = vsub.f32 %v721, %v771
      %v796 = vsub.f32 %v726, %v773
      %v797 = vsub.f32 %v729, %v775
      %v798 = vsub.f32 %v734, %v777
      %v799 = vsub.f32 %v737, %v779
      %v800 = vsub.f32 %v742, %v781
      %v801 = vsub.f32 %v745, %v783
      %v802 = vsub.f32 %v750, %v785
      %v803 = vsub.f32 %v753, %v787
      %v804 = vmul.f32 %v788, 1.442695
      %v805 = vpow.pop %v804
      %v806 = vmul.f32 %v789, 1.442695
      %v807 = vpow.pop %v806
      %v808 = vmul.f32 %v790, 1.442695
      %v809 = vpow.pop %v808
      %v810 = vmul.f32 %v791, 1.442695
      %v811 = vpow.pop %v810
      %v812 = vmul.f32 %v792, 1.442695
      %v813 = vpow.pop %v812
      %v814 = vmul.f32 %v793, 1.442695
      %v815 = vpow.pop %v814
      %v816 = vmul.f32 %v794, 1.442695
      %v817 = vpow.pop %v816
      %v818 = vmul.f32 %v795, 1.442695
      %v819 = vpow.pop %v818
      %v820 = vmul.f32 %v796, 1.442695
      %v821 = vpow.pop %v820
      %v822 = vmul.f32 %v797, 1.442695
      %v823 = vpow.pop %v822
      %v824 = vmul.f32 %v798, 1.442695
      %v825 = vpow.pop %v824
      %v826 = vmul.f32 %v799, 1.442695
      %v827 = vpow.pop %v826
      %v828 = vmul.f32 %v800, 1.442695
      %v829 = vpow.pop %v828
      %v830 = vmul.f32 %v801, 1.442695
      %v831 = vpow.pop %v830
      %v832 = vmul.f32 %v802, 1.442695
      %v833 = vpow.pop %v832
      %v834 = vmul.f32 %v803, 1.442695
      %v835 = vpow.pop %v834
      %836 = vadd.xlane.f32.xlu0 %v805
      %v837 = vpop.xlane.xlu0 %836
      %838 = vadd.xlane.f32.xlu0 %v807
      %v839 = vpop.xlane.xlu0 %838
      %840 = vadd.xlane.f32.xlu0 %v809
      %v841 = vpop.xlane.xlu0 %840
      %842 = vadd.xlane.f32.xlu0 %v811
      %v843 = vpop.xlane.xlu0 %842
      %844 = vadd.xlane.f32.xlu0 %v813
      %v845 = vpop.xlane.xlu0 %844
      %846 = vadd.xlane.f32.xlu0 %v815
      %v847 = vpop.xlane.xlu0 %846
      %848 = vadd.xlane.f32.xlu0 %v817
      %v849 = vpop.xlane.xlu0 %848
      %850 = vadd.xlane.f32.xlu0 %v819
      %v851 = vpop.xlane.xlu0 %850
      %852 = vadd.xlane.f32.xlu0 %v821
      %v853 = vpop.xlane.xlu0 %852
      %854 = vadd.xlane.f32.xlu0 %v823
      %v855 = vpop.xlane.xlu0 %854
      %856 = vadd.xlane.f32.xlu0 %v825
      %v857 = vpop.xlane.xlu0 %856
      %858 = vadd.xlane.f32.xlu0 %v827
      %v859 = vpop.xlane.xlu0 %858
      %860 = vadd.xlane.f32.xlu0 %v829
      %v861 = vpop.xlane.xlu0 %860
      %862 = vadd.xlane.f32.xlu0 %v831
      %v863 = vpop.xlane.xlu0 %862
      %864 = vadd.xlane.f32.xlu0 %v833
      %v865 = vpop.xlane.xlu0 %864
      %866 = vadd.xlane.f32.xlu0 %v835
      %v867 = vpop.xlane.xlu0 %866
      %v868 = vrcp.pop %v837
      %v869 = vrcp.pop %v839
      %v870 = vrcp.pop %v841
      %v871 = vrcp.pop %v843
      %v872 = vrcp.pop %v845
      %v873 = vrcp.pop %v847
      %v874 = vrcp.pop %v849
      %v875 = vrcp.pop %v851
      %v876 = vrcp.pop %v853
      %v877 = vrcp.pop %v855
      %v878 = vrcp.pop %v857
      %v879 = vrcp.pop %v859
      %v880 = vrcp.pop %v861
      %v881 = vrcp.pop %v863
      %v882 = vrcp.pop %v865
      %v883 = vrcp.pop %v867
      %v884 = vpack.c.bf16 %v807, %v805
      %v885 = vpack.c.bf16 %v811, %v809
      %v886 = vpack.c.bf16 %v815, %v813
      %v887 = vpack.c.bf16 %v819, %v817
      %v888 = vpack.c.bf16 %v823, %v821
      %v889 = vpack.c.bf16 %v827, %v825
      %v890 = vpack.c.bf16 %v831, %v829
      %v891 = vpack.c.bf16 %v835, %v833
      %900 = vrot.lane.b32.xlu0 %v598, 96
      %v901 = vpop.permute.xlu0 %900
      %902 = vrot.lane.b32.xlu0 %v599, 96
      %v903 = vpop.permute.xlu0 %902
      %904 = vrot.lane.b32.xlu0 %v600, 96
      %v905 = vpop.permute.xlu0 %904
      %906 = vrot.lane.b32.xlu0 %v601, 96
      %v907 = vpop.permute.xlu0 %906
      %908 = vrot.lane.b32.xlu0 %v602, 96
      %v909 = vpop.permute.xlu0 %908
      %910 = vrot.lane.b32.xlu0 %v603, 96
      %v911 = vpop.permute.xlu0 %910
      %912 = vrot.lane.b32.xlu0 %v604, 96
      %v913 = vpop.permute.xlu0 %912
      %914 = vrot.lane.b32.xlu0 %v605, 96
      %v915 = vpop.permute.xlu0 %914
      %924 = vmatprep.subr.bf16.mxu0 0
      %925 = vmatpush1.bf16.msra.mxu0 %v901
      %926 = vmatprep.subr.bf16.mxu0 0
      %927 = vmatpush1.bf16.msra.mxu0 %v903
      %928 = vmatprep.subr.bf16.mxu0 0
      %929 = vmatpush1.bf16.msra.mxu0 %v905
      %930 = vmatprep.subr.bf16.mxu0 0
      %931 = vmatpush1.bf16.msra.mxu0 %v907
      %932 = vmatprep.subr.bf16.mxu0 0
      %933 = vmatpush1.bf16.msra.mxu0 %v909
      %934 = vmatprep.subr.bf16.mxu0 0
      %935 = vmatpush1.bf16.msra.mxu0 %v911
      %936 = vmatprep.subr.bf16.mxu0 0
      %937 = vmatpush1.bf16.msra.mxu0 %v913
      %938 = vmatprep.subr.bf16.mxu0 0
      %939 = vmatpush1.bf16.msra.mxu0 %v915
      %940 = vmatprep.subr.bf16.mxu0 0
      %941 = vmatpush1.bf16.msra.mxu0 0
      %942 = vmatprep.subr.bf16.mxu0 0
      %943 = vmatpush1.bf16.msra.mxu0 0
      %944 = vmatprep.subr.bf16.mxu0 0
      %945 = vmatpush1.bf16.msra.mxu0 0
      %946 = vmatprep.subr.bf16.mxu0 0
      %947 = vmatpush1.bf16.msra.mxu0 0
      %948 = vmatprep.subr.bf16.mxu0 0
      %949 = vmatpush1.bf16.msra.mxu0 0
      %950 = vmatprep.subr.bf16.mxu0 0
      %951 = vmatpush1.bf16.msra.mxu0 0
      %952 = vmatprep.subr.bf16.mxu0 0
      %953 = vmatpush1.bf16.msra.mxu0 0
      %954 = vmatprep.subr.bf16.mxu0 0
      %955 = vmatpush1.bf16.msra.mxu0 0
      %956 = vmatprep.mubr.bf16.mxu0 0
      %957 = vmatmul.mubr.bf16.gmra.mrb[0].mxu0 %v884
      %v958 = vpop.f32.mrb[0].mxu0
      %v959 = vadd.f32 0.0, %v958
      %v960 = vpop.f32.mrb[0].mxu0
      %v961 = vpop.f32.mrb[0].mxu0
      %v962 = vadd.f32 0.0, %v961
      %v963 = vpop.f32.mrb[0].mxu0
      %964 = vmatprep.mubr.bf16.mxu0 0
      %965 = vmatmul.mubr.bf16.gmra.mrb[0].mxu0 %v885
      %v966 = vpop.f32.mrb[0].mxu0
      %v967 = vadd.f32 0.0, %v966
      %v968 = vpop.f32.mrb[0].mxu0
      %v969 = vpop.f32.mrb[0].mxu0
      %v970 = vadd.f32 0.0, %v969
      %v971 = vpop.f32.mrb[0].mxu0
      %972 = vmatprep.mubr.bf16.mxu0 0
      %973 = vmatmul.mubr.bf16.gmra.mrb[0].mxu0 %v886
      %v974 = vpop.f32.mrb[0].mxu0
      %v975 = vadd.f32 0.0, %v974
      %v976 = vpop.f32.mrb[0].mxu0
      %v977 = vpop.f32.mrb[0].mxu0
      %v978 = vadd.f32 0.0, %v977
      %v979 = vpop.f32.mrb[0].mxu0
      %980 = vmatprep.mubr.bf16.mxu0 0
      %981 = vmatmul.mubr.bf16.gmra.mrb[0].mxu0 %v887
      %v982 = vpop.f32.mrb[0].mxu0
      %v983 = vadd.f32 0.0, %v982
      %v984 = vpop.f32.mrb[0].mxu0
      %v985 = vpop.f32.mrb[0].mxu0
      %v986 = vadd.f32 0.0, %v985
      %v987 = vpop.f32.mrb[0].mxu0
      %988 = vmatprep.mubr.bf16.mxu0 0
      %989 = vmatmul.mubr.bf16.gmra.mrb[0].mxu0 %v888
      %v990 = vpop.f32.mrb[0].mxu0
      %v991 = vadd.f32 0.0, %v990
      %v992 = vpop.f32.mrb[0].mxu0
      %v993 = vpop.f32.mrb[0].mxu0
      %v994 = vadd.f32 0.0, %v993
      %v995 = vpop.f32.mrb[0].mxu0
      %996 = vmatprep.mubr.bf16.mxu0 0
      %997 = vmatmul.mubr.bf16.gmra.mrb[0].mxu0 %v889
      %v998 = vpop.f32.mrb[0].mxu0
      %v999 = vadd.f32 0.0, %v998
      %v1000 = vpop.f32.mrb[0].mxu0
      %v1001 = vpop.f32.mrb[0].mxu0
      %v1002 = vadd.f32 0.0, %v1001
      %v1003 = vpop.f32.mrb[0].mxu0
      %1004 = vmatprep.mubr.bf16.mxu0 0
      %1005 = vmatmul.mubr.bf16.gmra.mrb[0].mxu0 %v890
      %v1006 = vpop.f32.mrb[0].mxu0
      %v1007 = vadd.f32 0.0, %v1006
      %v1008 = vpop.f32.mrb[0].mxu0
      %v1009 = vpop.f32.mrb[0].mxu0
      %v1010 = vadd.f32 0.0, %v1009
      %v1011 = vpop.f32.mrb[0].mxu0
      %1012 = vmatprep.mubr.bf16.mxu0 0
      %1013 = vmatmul.mubr.bf16.gmra.mrb[0].mxu0 %v891
      %v1014 = vpop.f32.mrb[0].mxu0
      %v1015 = vadd.f32 0.0, %v1014
      %v1016 = vpop.f32.mrb[0].mxu0
      %v1017 = vpop.f32.mrb[0].mxu0
      %v1018 = vadd.f32 0.0, %v1017
      %v1019 = vpop.f32.mrb[0].mxu0
      %1020 = vdwg.mxu0
      %v1021 = vmul.f32 %v959, %v868
      %v1022 = vmul.f32 %v962, %v869
      %v1023 = vmul.f32 %v967, %v870
      %v1024 = vmul.f32 %v970, %v871
      %v1025 = vmul.f32 %v975, %v872
      %v1026 = vmul.f32 %v978, %v873
      %v1027 = vmul.f32 %v983, %v874
      %v1028 = vmul.f32 %v986, %v875
      %v1029 = vmul.f32 %v991, %v876
      %v1030 = vmul.f32 %v994, %v877
      %v1031 = vmul.f32 %v999, %v878
      %v1032 = vmul.f32 %v1002, %v879
      %v1033 = vmul.f32 %v1007, %v880
      %v1034 = vmul.f32 %v1010, %v881
      %v1035 = vmul.f32 %v1015, %v882
      %v1036 = vmul.f32 %v1018, %v883
      %v1037 = vpack.c.bf16 %v1022, %v1021
      %v1038 = vpack.c.bf16 %v1024, %v1023
      %v1039 = vpack.c.bf16 %v1026, %v1025
      %v1040 = vpack.c.bf16 %v1028, %v1027
      %v1041 = vpack.c.bf16 %v1030, %v1029
      %v1042 = vpack.c.bf16 %v1032, %v1031
      %v1043 = vpack.c.bf16 %v1034, %v1033
      %v1044 = vpack.c.bf16 %v1036, %v1035
      %1053 = vrot.lane.b32.xlu0 %v481, 124
      %v1054 = vpop.permute.xlu0 %1053
      %1055 = vrot.lane.b32.xlu0 %v482, 124
      %v1056 = vpop.permute.xlu0 %1055
      %1057 = vrot.lane.b32.xlu0 %v483, 124
      %v1058 = vpop.permute.xlu0 %1057
      %1059 = vrot.lane.b32.xlu0 %v484, 124
      %v1060 = vpop.permute.xlu0 %1059
      %1061 = vrot.lane.b32.xlu0 %v485, 124
      %v1062 = vpop.permute.xlu0 %1061
      %1063 = vrot.lane.b32.xlu0 %v486, 124
      %v1064 = vpop.permute.xlu0 %1063
      %1065 = vrot.lane.b32.xlu0 %v487, 124
      %v1066 = vpop.permute.xlu0 %1065
      %1067 = vrot.lane.b32.xlu0 %v488, 124
      %v1068 = vpop.permute.xlu0 %1067
      %1069 = vrot.lane.b32.xlu0 %v598, 124
      %v1070 = vpop.permute.xlu0 %1069
      %1071 = vrot.lane.b32.xlu0 %v599, 124
      %v1072 = vpop.permute.xlu0 %1071
      %1073 = vrot.lane.b32.xlu0 %v600, 124
      %v1074 = vpop.permute.xlu0 %1073
      %1075 = vrot.lane.b32.xlu0 %v601, 124
      %v1076 = vpop.permute.xlu0 %1075
      %1077 = vrot.lane.b32.xlu0 %v602, 124
      %v1078 = vpop.permute.xlu0 %1077
      %1079 = vrot.lane.b32.xlu0 %v603, 124
      %v1080 = vpop.permute.xlu0 %1079
      %1081 = vrot.lane.b32.xlu0 %v604, 124
      %v1082 = vpop.permute.xlu0 %1081
      %1083 = vrot.lane.b32.xlu0 %v605, 124
      %v1084 = vpop.permute.xlu0 %1083
      %v1086 = vsel %vm610, %v1054, 0
      %v1089 = vsel %vm610, %v1056, 0
      %v1092 = vsel %vm610, %v1058, 0
      %v1095 = vsel %vm610, %v1060, 0
      %v1098 = vsel %vm610, %v1062, 0
      %v1101 = vsel %vm610, %v1064, 0
      %v1104 = vsel %vm610, %v1066, 0
      %v1107 = vsel %vm610, %v1068, 0
      %v1110 = vsel %vm610, %v1070, 0
      %v1113 = vsel %vm610, %v1072, 0
      %v1116 = vsel %vm610, %v1074, 0
      %v1119 = vsel %vm610, %v1076, 0
      %v1122 = vsel %vm610, %v1078, 0
      %v1125 = vsel %vm610, %v1080, 0
      %v1128 = vsel %vm610, %v1082, 0
      %v1131 = vsel %vm610, %v1084, 0
      %1133 = vmatprep.subr.bf16.mxu0 0
      %1134 = vmatpush1.bf16.xpose.msra.mxu0 %v1110
      %1135 = vmatprep.subr.bf16.mxu0 0
      %1136 = vmatpush1.bf16.xpose.msra.mxu0 %v1113
      %1137 = vmatprep.subr.bf16.mxu0 0
      %1138 = vmatpush1.bf16.xpose.msra.mxu0 %v1116
      %1139 = vmatprep.subr.bf16.mxu0 0
      %1140 = vmatpush1.bf16.xpose.msra.mxu0 %v1119
      %1141 = vmatprep.subr.bf16.mxu0 0
      %1142 = vmatpush1.bf16.xpose.msra.mxu0 %v1122
      %1143 = vmatprep.subr.bf16.mxu0 0
      %1144 = vmatpush1.bf16.xpose.msra.mxu0 %v1125
      %1145 = vmatprep.subr.bf16.mxu0 0
      %1146 = vmatpush1.bf16.xpose.msra.mxu0 %v1128
      %1147 = vmatprep.subr.bf16.mxu0 0
      %1148 = vmatpush1.bf16.xpose.msra.mxu0 %v1131
      %1149 = vmatprep.subr.bf16.mxu0 0
      %1150 = vmatpush1.bf16.xpose.msra.mxu0 0
      %1151 = vmatprep.subr.bf16.mxu0 0
      %1152 = vmatpush1.bf16.xpose.msra.mxu0 0
      %1153 = vmatprep.subr.bf16.mxu0 0
      %1154 = vmatpush1.bf16.xpose.msra.mxu0 0
      %1155 = vmatprep.subr.bf16.mxu0 0
      %1156 = vmatpush1.bf16.xpose.msra.mxu0 0
      %1157 = vmatprep.subr.bf16.mxu0 0
      %1158 = vmatpush1.bf16.xpose.msra.mxu0 0
      %1159 = vmatprep.subr.bf16.mxu0 0
      %1160 = vmatpush1.bf16.xpose.msra.mxu0 0
      %1161 = vmatprep.subr.bf16.mxu0 0
      %1162 = vmatpush1.bf16.xpose.msra.mxu0 0
      %1163 = vmatprep.subr.bf16.mxu0 0
      %1164 = vmatpush1.bf16.xpose.msra.mxu0 0
      %1165 = vmatprep.mubr.bf16.mxu0 0
      %1166 = vmatmul.mubr.bf16.gmra.mrb[0].mxu0 %v1086
      %v1167 = vpop.f32.mrb[0].mxu0
      %v1168 = vadd.f32 %v609, %v1167
      %v1169 = vpop.f32.mrb[0].mxu0
      %v1170 = vpop.f32.mrb[0].mxu0
      %v1171 = vadd.f32 %v609, %v1170
      %v1172 = vpop.f32.mrb[0].mxu0
      %1173 = vmatprep.mubr.bf16.mxu0 0
      %1174 = vmatmul.mubr.bf16.gmra.mrb[0].mxu0 %v1089
      %v1175 = vpop.f32.mrb[0].mxu0
      %v1176 = vadd.f32 %v609, %v1175
      %v1177 = vpop.f32.mrb[0].mxu0
      %v1178 = vpop.f32.mrb[0].mxu0
      %v1179 = vadd.f32 %v609, %v1178
      %v1180 = vpop.f32.mrb[0].mxu0
      %1181 = vmatprep.mubr.bf16.mxu0 0
      %1182 = vmatmul.mubr.bf16.gmra.mrb[0].mxu0 %v1092
      %v1183 = vpop.f32.mrb[0].mxu0
      %v1184 = vadd.f32 %v609, %v1183
      %v1185 = vpop.f32.mrb[0].mxu0
      %v1186 = vpop.f32.mrb[0].mxu0
      %v1187 = vadd.f32 %v609, %v1186
      %v1188 = vpop.f32.mrb[0].mxu0
      %1189 = vmatprep.mubr.bf16.mxu0 0
      %1190 = vmatmul.mubr.bf16.gmra.mrb[0].mxu0 %v1095
      %v1191 = vpop.f32.mrb[0].mxu0
      %v1192 = vadd.f32 %v609, %v1191
      %v1193 = vpop.f32.mrb[0].mxu0
      %v1194 = vpop.f32.mrb[0].mxu0
      %v1195 = vadd.f32 %v609, %v1194
      %v1196 = vpop.f32.mrb[0].mxu0
      %1197 = vmatprep.mubr.bf16.mxu0 0
      %1198 = vmatmul.mubr.bf16.gmra.mrb[0].mxu0 %v1098
      %v1199 = vpop.f32.mrb[0].mxu0
      %v1200 = vadd.f32 %v609, %v1199
      %v1201 = vpop.f32.mrb[0].mxu0
      %v1202 = vpop.f32.mrb[0].mxu0
      %v1203 = vadd.f32 %v609, %v1202
      %v1204 = vpop.f32.mrb[0].mxu0
      %1205 = vmatprep.mubr.bf16.mxu0 0
      %1206 = vmatmul.mubr.bf16.gmra.mrb[0].mxu0 %v1101
      %v1207 = vpop.f32.mrb[0].mxu0
      %v1208 = vadd.f32 %v609, %v1207
      %v1209 = vpop.f32.mrb[0].mxu0
      %v1210 = vpop.f32.mrb[0].mxu0
      %v1211 = vadd.f32 %v609, %v1210
      %v1212 = vpop.f32.mrb[0].mxu0
      %1213 = vmatprep.mubr.bf16.mxu0 0
      %1214 = vmatmul.mubr.bf16.gmra.mrb[0].mxu0 %v1104
      %v1215 = vpop.f32.mrb[0].mxu0
      %v1216 = vadd.f32 %v609, %v1215
      %v1217 = vpop.f32.mrb[0].mxu0
      %v1218 = vpop.f32.mrb[0].mxu0
      %v1219 = vadd.f32 %v609, %v1218
      %v1220 = vpop.f32.mrb[0].mxu0
      %1221 = vmatprep.mubr.bf16.mxu0 0
      %1222 = vmatmul.mubr.bf16.gmra.mrb[0].mxu0 %v1107
      %v1223 = vpop.f32.mrb[0].mxu0
      %v1224 = vadd.f32 %v609, %v1223
      %v1225 = vpop.f32.mrb[0].mxu0
      %v1226 = vpop.f32.mrb[0].mxu0
      %v1227 = vadd.f32 %v609, %v1226
      %v1228 = vpop.f32.mrb[0].mxu0
      %1229 = vdwg.mxu0
      %1230 = vmax.xlane.f32.xlu0 %v1168
      %v1231 = vpop.xlane.xlu0 %1230
      %1232 = vmax.xlane.f32.xlu0 %v1171
      %v1233 = vpop.xlane.xlu0 %1232
      %1234 = vmax.xlane.f32.xlu0 %v1176
      %v1235 = vpop.xlane.xlu0 %1234
      %1236 = vmax.xlane.f32.xlu0 %v1179
      %v1237 = vpop.xlane.xlu0 %1236
      %1238 = vmax.xlane.f32.xlu0 %v1184
      %v1239 = vpop.xlane.xlu0 %1238
      %1240 = vmax.xlane.f32.xlu0 %v1187
      %v1241 = vpop.xlane.xlu0 %1240
      %1242 = vmax.xlane.f32.xlu0 %v1192
      %v1243 = vpop.xlane.xlu0 %1242
      %1244 = vmax.xlane.f32.xlu0 %v1195
      %v1245 = vpop.xlane.xlu0 %1244
      %1246 = vmax.xlane.f32.xlu0 %v1200
      %v1247 = vpop.xlane.xlu0 %1246
      %1248 = vmax.xlane.f32.xlu0 %v1203
      %v1249 = vpop.xlane.xlu0 %1248
      %1250 = vmax.xlane.f32.xlu0 %v1208
      %v1251 = vpop.xlane.xlu0 %1250
      %1252 = vmax.xlane.f32.xlu0 %v1211
      %v1253 = vpop.xlane.xlu0 %1252
      %1254 = vmax.xlane.f32.xlu0 %v1216
      %v1255 = vpop.xlane.xlu0 %1254
      %1256 = vmax.xlane.f32.xlu0 %v1219
      %v1257 = vpop.xlane.xlu0 %1256
      %1258 = vmax.xlane.f32.xlu0 %v1224
      %v1259 = vpop.xlane.xlu0 %1258
      %1260 = vmax.xlane.f32.xlu0 %v1227
      %v1261 = vpop.xlane.xlu0 %1260
      %v1262 = vsub.f32 %v1168, %v1231
      %v1263 = vsub.f32 %v1171, %v1233
      %v1264 = vsub.f32 %v1176, %v1235
      %v1265 = vsub.f32 %v1179, %v1237
      %v1266 = vsub.f32 %v1184, %v1239
      %v1267 = vsub.f32 %v1187, %v1241
      %v1268 = vsub.f32 %v1192, %v1243
      %v1269 = vsub.f32 %v1195, %v1245
      %v1270 = vsub.f32 %v1200, %v1247
      %v1271 = vsub.f32 %v1203, %v1249
      %v1272 = vsub.f32 %v1208, %v1251
      %v1273 = vsub.f32 %v1211, %v1253
      %v1274 = vsub.f32 %v1216, %v1255
      %v1275 = vsub.f32 %v1219, %v1257
      %v1276 = vsub.f32 %v1224, %v1259
      %v1277 = vsub.f32 %v1227, %v1261
      %v1278 = vmul.f32 %v1262, 1.442695
      %v1279 = vpow.pop %v1278
      %v1280 = vmul.f32 %v1263, 1.442695
      %v1281 = vpow.pop %v1280
      %v1282 = vmul.f32 %v1264, 1.442695
      %v1283 = vpow.pop %v1282
      %v1284 = vmul.f32 %v1265, 1.442695
      %v1285 = vpow.pop %v1284
      %v1286 = vmul.f32 %v1266, 1.442695
      %v1287 = vpow.pop %v1286
      %v1288 = vmul.f32 %v1267, 1.442695
      %v1289 = vpow.pop %v1288
      %v1290 = vmul.f32 %v1268, 1.442695
      %v1291 = vpow.pop %v1290
      %v1292 = vmul.f32 %v1269, 1.442695
      %v1293 = vpow.pop %v1292
      %v1294 = vmul.f32 %v1270, 1.442695
      %v1295 = vpow.pop %v1294
      %v1296 = vmul.f32 %v1271, 1.442695
      %v1297 = vpow.pop %v1296
      %v1298 = vmul.f32 %v1272, 1.442695
      %v1299 = vpow.pop %v1298
      %v1300 = vmul.f32 %v1273, 1.442695
      %v1301 = vpow.pop %v1300
      %v1302 = vmul.f32 %v1274, 1.442695
      %v1303 = vpow.pop %v1302
      %v1304 = vmul.f32 %v1275, 1.442695
      %v1305 = vpow.pop %v1304
      %v1306 = vmul.f32 %v1276, 1.442695
      %v1307 = vpow.pop %v1306
      %v1308 = vmul.f32 %v1277, 1.442695
      %v1309 = vpow.pop %v1308
      %1310 = vadd.xlane.f32.xlu0 %v1279
      %v1311 = vpop.xlane.xlu0 %1310
      %1312 = vadd.xlane.f32.xlu0 %v1281
      %v1313 = vpop.xlane.xlu0 %1312
      %1314 = vadd.xlane.f32.xlu0 %v1283
      %v1315 = vpop.xlane.xlu0 %1314
      %1316 = vadd.xlane.f32.xlu0 %v1285
      %v1317 = vpop.xlane.xlu0 %1316
      %1318 = vadd.xlane.f32.xlu0 %v1287
      %v1319 = vpop.xlane.xlu0 %1318
      %1320 = vadd.xlane.f32.xlu0 %v1289
      %v1321 = vpop.xlane.xlu0 %1320
      %1322 = vadd.xlane.f32.xlu0 %v1291
      %v1323 = vpop.xlane.xlu0 %1322
      %1324 = vadd.xlane.f32.xlu0 %v1293
      %v1325 = vpop.xlane.xlu0 %1324
      %1326 = vadd.xlane.f32.xlu0 %v1295
      %v1327 = vpop.xlane.xlu0 %1326
      %1328 = vadd.xlane.f32.xlu0 %v1297
      %v1329 = vpop.xlane.xlu0 %1328
      %1330 = vadd.xlane.f32.xlu0 %v1299
      %v1331 = vpop.xlane.xlu0 %1330
      %1332 = vadd.xlane.f32.xlu0 %v1301
      %v1333 = vpop.xlane.xlu0 %1332
      %1334 = vadd.xlane.f32.xlu0 %v1303
      %v1335 = vpop.xlane.xlu0 %1334
      %1336 = vadd.xlane.f32.xlu0 %v1305
      %v1337 = vpop.xlane.xlu0 %1336
      %1338 = vadd.xlane.f32.xlu0 %v1307
      %v1339 = vpop.xlane.xlu0 %1338
      %1340 = vadd.xlane.f32.xlu0 %v1309
      %v1341 = vpop.xlane.xlu0 %1340
      %v1342 = vrcp.pop %v1311
      %v1343 = vrcp.pop %v1313
      %v1344 = vrcp.pop %v1315
      %v1345 = vrcp.pop %v1317
      %v1346 = vrcp.pop %v1319
      %v1347 = vrcp.pop %v1321
      %v1348 = vrcp.pop %v1323
      %v1349 = vrcp.pop %v1325
      %v1350 = vrcp.pop %v1327
      %v1351 = vrcp.pop %v1329
      %v1352 = vrcp.pop %v1331
      %v1353 = vrcp.pop %v1333
      %v1354 = vrcp.pop %v1335
      %v1355 = vrcp.pop %v1337
      %v1356 = vrcp.pop %v1339
      %v1357 = vrcp.pop %v1341
      %v1358 = vpack.c.bf16 %v1281, %v1279
      %v1359 = vpack.c.bf16 %v1285, %v1283
      %v1360 = vpack.c.bf16 %v1289, %v1287
      %v1361 = vpack.c.bf16 %v1293, %v1291
      %v1362 = vpack.c.bf16 %v1297, %v1295
      %v1363 = vpack.c.bf16 %v1301, %v1299
      %v1364 = vpack.c.bf16 %v1305, %v1303
      %v1365 = vpack.c.bf16 %v1309, %v1307
      %1366 = vrot.lane.b32.xlu0 %v598, 92
      %v1367 = vpop.permute.xlu0 %1366
      %1368 = vrot.lane.b32.xlu0 %v599, 92
      %v1369 = vpop.permute.xlu0 %1368
      %1370 = vrot.lane.b32.xlu0 %v600, 92
      %v1371 = vpop.permute.xlu0 %1370
      %1372 = vrot.lane.b32.xlu0 %v601, 92
      %v1373 = vpop.permute.xlu0 %1372
      %1374 = vrot.lane.b32.xlu0 %v602, 92
      %v1375 = vpop.permute.xlu0 %1374
      %1376 = vrot.lane.b32.xlu0 %v603, 92
      %v1377 = vpop.permute.xlu0 %1376
      %1378 = vrot.lane.b32.xlu0 %v604, 92
      %v1379 = vpop.permute.xlu0 %1378
      %1380 = vrot.lane.b32.xlu0 %v605, 92
      %v1381 = vpop.permute.xlu0 %1380
      %1390 = vmatprep.subr.bf16.mxu0 0
      %1391 = vmatpush1.bf16.msra.mxu0 %v1367
      %1392 = vmatprep.subr.bf16.mxu0 0
      %1393 = vmatpush1.bf16.msra.mxu0 %v1369
      %1394 = vmatprep.subr.bf16.mxu0 0
      %1395 = vmatpush1.bf16.msra.mxu0 %v1371
      %1396 = vmatprep.subr.bf16.mxu0 0
      %1397 = vmatpush1.bf16.msra.mxu0 %v1373
      %1398 = vmatprep.subr.bf16.mxu0 0
      %1399 = vmatpush1.bf16.msra.mxu0 %v1375
      %1400 = vmatprep.subr.bf16.mxu0 0
      %1401 = vmatpush1.bf16.msra.mxu0 %v1377
      %1402 = vmatprep.subr.bf16.mxu0 0
      %1403 = vmatpush1.bf16.msra.mxu0 %v1379
      %1404 = vmatprep.subr.bf16.mxu0 0
      %1405 = vmatpush1.bf16.msra.mxu0 %v1381
      %1406 = vmatprep.subr.bf16.mxu0 0
      %1407 = vmatpush1.bf16.msra.mxu0 0
      %1408 = vmatprep.subr.bf16.mxu0 0
      %1409 = vmatpush1.bf16.msra.mxu0 0
      %1410 = vmatprep.subr.bf16.mxu0 0
      %1411 = vmatpush1.bf16.msra.mxu0 0
      %1412 = vmatprep.subr.bf16.mxu0 0
      %1413 = vmatpush1.bf16.msra.mxu0 0
      %1414 = vmatprep.subr.bf16.mxu0 0
      %1415 = vmatpush1.bf16.msra.mxu0 0
      %1416 = vmatprep.subr.bf16.mxu0 0
      %1417 = vmatpush1.bf16.msra.mxu0 0
      %1418 = vmatprep.subr.bf16.mxu0 0
      %1419 = vmatpush1.bf16.msra.mxu0 0
      %1420 = vmatprep.subr.bf16.mxu0 0
      %1421 = vmatpush1.bf16.msra.mxu0 0
      %1422 = vmatprep.mubr.bf16.mxu0 0
      %1423 = vmatmul.mubr.bf16.gmra.mrb[0].mxu0 %v1358
      %v1424 = vpop.f32.mrb[0].mxu0
      %v1425 = vadd.f32 0.0, %v1424
      %v1426 = vpop.f32.mrb[0].mxu0
      %v1427 = vpop.f32.mrb[0].mxu0
      %v1428 = vadd.f32 0.0, %v1427
      %v1429 = vpop.f32.mrb[0].mxu0
      %1430 = vmatprep.mubr.bf16.mxu0 0
      %1431 = vmatmul.mubr.bf16.gmra.mrb[0].mxu0 %v1359
      %v1432 = vpop.f32.mrb[0].mxu0
      %v1433 = vadd.f32 0.0, %v1432
      %v1434 = vpop.f32.mrb[0].mxu0
      %v1435 = vpop.f32.mrb[0].mxu0
      %v1436 = vadd.f32 0.0, %v1435
      %v1437 = vpop.f32.mrb[0].mxu0
      %1438 = vmatprep.mubr.bf16.mxu0 0
      %1439 = vmatmul.mubr.bf16.gmra.mrb[0].mxu0 %v1360
      %v1440 = vpop.f32.mrb[0].mxu0
      %v1441 = vadd.f32 0.0, %v1440
      %v1442 = vpop.f32.mrb[0].mxu0
      %v1443 = vpop.f32.mrb[0].mxu0
      %v1444 = vadd.f32 0.0, %v1443
      %v1445 = vpop.f32.mrb[0].mxu0
      %1446 = vmatprep.mubr.bf16.mxu0 0
      %1447 = vmatmul.mubr.bf16.gmra.mrb[0].mxu0 %v1361
      %v1448 = vpop.f32.mrb[0].mxu0
      %v1449 = vadd.f32 0.0, %v1448
      %v1450 = vpop.f32.mrb[0].mxu0
      %v1451 = vpop.f32.mrb[0].mxu0
      %v1452 = vadd.f32 0.0, %v1451
      %v1453 = vpop.f32.mrb[0].mxu0
      %1454 = vmatprep.mubr.bf16.mxu0 0
      %1455 = vmatmul.mubr.bf16.gmra.mrb[0].mxu0 %v1362
      %v1456 = vpop.f32.mrb[0].mxu0
      %v1457 = vadd.f32 0.0, %v1456
      %v1458 = vpop.f32.mrb[0].mxu0
      %v1459 = vpop.f32.mrb[0].mxu0
      %v1460 = vadd.f32 0.0, %v1459
      %v1461 = vpop.f32.mrb[0].mxu0
      %1462 = vmatprep.mubr.bf16.mxu0 0
      %1463 = vmatmul.mubr.bf16.gmra.mrb[0].mxu0 %v1363
      %v1464 = vpop.f32.mrb[0].mxu0
      %v1465 = vadd.f32 0.0, %v1464
      %v1466 = vpop.f32.mrb[0].mxu0
      %v1467 = vpop.f32.mrb[0].mxu0
      %v1468 = vadd.f32 0.0, %v1467
      %v1469 = vpop.f32.mrb[0].mxu0
      %1470 = vmatprep.mubr.bf16.mxu0 0
      %1471 = vmatmul.mubr.bf16.gmra.mrb[0].mxu0 %v1364
      %v1472 = vpop.f32.mrb[0].mxu0
      %v1473 = vadd.f32 0.0, %v1472
      %v1474 = vpop.f32.mrb[0].mxu0
      %v1475 = vpop.f32.mrb[0].mxu0
      %v1476 = vadd.f32 0.0, %v1475
      %v1477 = vpop.f32.mrb[0].mxu0
      %1478 = vmatprep.mubr.bf16.mxu0 0
      %1479 = vmatmul.mubr.bf16.gmra.mrb[0].mxu0 %v1365
      %v1480 = vpop.f32.mrb[0].mxu0
      %v1481 = vadd.f32 0.0, %v1480
      %v1482 = vpop.f32.mrb[0].mxu0
      %v1483 = vpop.f32.mrb[0].mxu0
      %v1484 = vadd.f32 0.0, %v1483
      %v1485 = vpop.f32.mrb[0].mxu0
      %1486 = vdwg.mxu0
      %v1487 = vmul.f32 %v1425, %v1342
      %v1488 = vmul.f32 %v1428, %v1343
      %v1489 = vmul.f32 %v1433, %v1344
      %v1490 = vmul.f32 %v1436, %v1345
      %v1491 = vmul.f32 %v1441, %v1346
      %v1492 = vmul.f32 %v1444, %v1347
      %v1493 = vmul.f32 %v1449, %v1348
      %v1494 = vmul.f32 %v1452, %v1349
      %v1495 = vmul.f32 %v1457, %v1350
      %v1496 = vmul.f32 %v1460, %v1351
      %v1497 = vmul.f32 %v1465, %v1352
      %v1498 = vmul.f32 %v1468, %v1353
      %v1499 = vmul.f32 %v1473, %v1354
      %v1500 = vmul.f32 %v1476, %v1355
      %v1501 = vmul.f32 %v1481, %v1356
      %v1502 = vmul.f32 %v1484, %v1357
      %v1503 = vpack.c.bf16 %v1488, %v1487
      %v1504 = vpack.c.bf16 %v1490, %v1489
      %v1505 = vpack.c.bf16 %v1492, %v1491
      %v1506 = vpack.c.bf16 %v1494, %v1493
      %v1507 = vpack.c.bf16 %v1496, %v1495
      %v1508 = vpack.c.bf16 %v1498, %v1497
      %v1509 = vpack.c.bf16 %v1500, %v1499
      %v1510 = vpack.c.bf16 %v1502, %v1501
      %1511 = vrot.lane.b32.xlu0 %v481, 120
      %v1512 = vpop.permute.xlu0 %1511
      %1513 = vrot.lane.b32.xlu0 %v482, 120
      %v1514 = vpop.permute.xlu0 %1513
      %1515 = vrot.lane.b32.xlu0 %v483, 120
      %v1516 = vpop.permute.xlu0 %1515
      %1517 = vrot.lane.b32.xlu0 %v484, 120
      %v1518 = vpop.permute.xlu0 %1517
      %1519 = vrot.lane.b32.xlu0 %v485, 120
      %v1520 = vpop.permute.xlu0 %1519
      %1521 = vrot.lane.b32.xlu0 %v486, 120
      %v1522 = vpop.permute.xlu0 %1521
      %1523 = vrot.lane.b32.xlu0 %v487, 120
      %v1524 = vpop.permute.xlu0 %1523
      %1525 = vrot.lane.b32.xlu0 %v488, 120
      %v1526 = vpop.permute.xlu0 %1525
      %1527 = vrot.lane.b32.xlu0 %v598, 120
      %v1528 = vpop.permute.xlu0 %1527
      %1529 = vrot.lane.b32.xlu0 %v599, 120
      %v1530 = vpop.permute.xlu0 %1529
      %1531 = vrot.lane.b32.xlu0 %v600, 120
      %v1532 = vpop.permute.xlu0 %1531
      %1533 = vrot.lane.b32.xlu0 %v601, 120
      %v1534 = vpop.permute.xlu0 %1533
      %1535 = vrot.lane.b32.xlu0 %v602, 120
      %v1536 = vpop.permute.xlu0 %1535
      %1537 = vrot.lane.b32.xlu0 %v603, 120
      %v1538 = vpop.permute.xlu0 %1537
      %1539 = vrot.lane.b32.xlu0 %v604, 120
      %v1540 = vpop.permute.xlu0 %1539
      %1541 = vrot.lane.b32.xlu0 %v605, 120
      %v1542 = vpop.permute.xlu0 %1541
      %v1544 = vsel %vm610, %v1512, 0
      %v1547 = vsel %vm610, %v1514, 0
      %v1550 = vsel %vm610, %v1516, 0
      %v1553 = vsel %vm610, %v1518, 0
      %v1556 = vsel %vm610, %v1520, 0
      %v1559 = vsel %vm610, %v1522, 0
      %v1562 = vsel %vm610, %v1524, 0
      %v1565 = vsel %vm610, %v1526, 0
      %v1568 = vsel %vm610, %v1528, 0
      %v1571 = vsel %vm610, %v1530, 0
      %v1574 = vsel %vm610, %v1532, 0
      %v1577 = vsel %vm610, %v1534, 0
      %v1580 = vsel %vm610, %v1536, 0
      %v1583 = vsel %vm610, %v1538, 0
      %v1586 = vsel %vm610, %v1540, 0
      %v1589 = vsel %vm610, %v1542, 0
      %1591 = vmatprep.subr.bf16.mxu0 0
      %1592 = vmatpush1.bf16.xpose.msra.mxu0 %v1568
      %1593 = vmatprep.subr.bf16.mxu0 0
      %1594 = vmatpush1.bf16.xpose.msra.mxu0 %v1571
      %1595 = vmatprep.subr.bf16.mxu0 0
      %1596 = vmatpush1.bf16.xpose.msra.mxu0 %v1574
      %1597 = vmatprep.subr.bf16.mxu0 0
      %1598 = vmatpush1.bf16.xpose.msra.mxu0 %v1577
      %1599 = vmatprep.subr.bf16.mxu0 0
      %1600 = vmatpush1.bf16.xpose.msra.mxu0 %v1580
      %1601 = vmatprep.subr.bf16.mxu0 0
      %1602 = vmatpush1.bf16.xpose.msra.mxu0 %v1583
      %1603 = vmatprep.subr.bf16.mxu0 0
      %1604 = vmatpush1.bf16.xpose.msra.mxu0 %v1586
      %1605 = vmatprep.subr.bf16.mxu0 0
      %1606 = vmatpush1.bf16.xpose.msra.mxu0 %v1589
      %1607 = vmatprep.subr.bf16.mxu0 0
      %1608 = vmatpush1.bf16.xpose.msra.mxu0 0
      %1609 = vmatprep.subr.bf16.mxu0 0
      %1610 = vmatpush1.bf16.xpose.msra.mxu0 0
      %1611 = vmatprep.subr.bf16.mxu0 0
      %1612 = vmatpush1.bf16.xpose.msra.mxu0 0
      %1613 = vmatprep.subr.bf16.mxu0 0
      %1614 = vmatpush1.bf16.xpose.msra.mxu0 0
      %1615 = vmatprep.subr.bf16.mxu0 0
      %1616 = vmatpush1.bf16.xpose.msra.mxu0 0
      %1617 = vmatprep.subr.bf16.mxu0 0
      %1618 = vmatpush1.bf16.xpose.msra.mxu0 0
      %1619 = vmatprep.subr.bf16.mxu0 0
      %1620 = vmatpush1.bf16.xpose.msra.mxu0 0
      %1621 = vmatprep.subr.bf16.mxu0 0
      %1622 = vmatpush1.bf16.xpose.msra.mxu0 0
      %1623 = vmatprep.mubr.bf16.mxu0 0
      %1624 = vmatmul.mubr.bf16.gmra.mrb[0].mxu0 %v1544
      %v1625 = vpop.f32.mrb[0].mxu0
      %v1626 = vadd.f32 %v609, %v1625
      %v1627 = vpop.f32.mrb[0].mxu0
      %v1628 = vpop.f32.mrb[0].mxu0
      %v1629 = vadd.f32 %v609, %v1628
      %v1630 = vpop.f32.mrb[0].mxu0
      %1631 = vmatprep.mubr.bf16.mxu0 0
      %1632 = vmatmul.mubr.bf16.gmra.mrb[0].mxu0 %v1547
      %v1633 = vpop.f32.mrb[0].mxu0
      %v1634 = vadd.f32 %v609, %v1633
      %v1635 = vpop.f32.mrb[0].mxu0
      %v1636 = vpop.f32.mrb[0].mxu0
      %v1637 = vadd.f32 %v609, %v1636
      %v1638 = vpop.f32.mrb[0].mxu0
      %1639 = vmatprep.mubr.bf16.mxu0 0
      %1640 = vmatmul.mubr.bf16.gmra.mrb[0].mxu0 %v1550
      %v1641 = vpop.f32.mrb[0].mxu0
      %v1642 = vadd.f32 %v609, %v1641
      %v1643 = vpop.f32.mrb[0].mxu0
      %v1644 = vpop.f32.mrb[0].mxu0
      %v1645 = vadd.f32 %v609, %v1644
      %v1646 = vpop.f32.mrb[0].mxu0
      %1647 = vmatprep.mubr.bf16.mxu0 0
      %1648 = vmatmul.mubr.bf16.gmra.mrb[0].mxu0 %v1553
      %v1649 = vpop.f32.mrb[0].mxu0
      %v1650 = vadd.f32 %v609, %v1649
      %v1651 = vpop.f32.mrb[0].mxu0
      %v1652 = vpop.f32.mrb[0].mxu0
      %v1653 = vadd.f32 %v609, %v1652
      %v1654 = vpop.f32.mrb[0].mxu0
      %1655 = vmatprep.mubr.bf16.mxu0 0
      %1656 = vmatmul.mubr.bf16.gmra.mrb[0].mxu0 %v1556
      %v1657 = vpop.f32.mrb[0].mxu0
      %v1658 = vadd.f32 %v609, %v1657
      %v1659 = vpop.f32.mrb[0].mxu0
      %v1660 = vpop.f32.mrb[0].mxu0
      %v1661 = vadd.f32 %v609, %v1660
      %v1662 = vpop.f32.mrb[0].mxu0
      %1663 = vmatprep.mubr.bf16.mxu0 0
      %1664 = vmatmul.mubr.bf16.gmra.mrb[0].mxu0 %v1559
      %v1665 = vpop.f32.mrb[0].mxu0
      %v1666 = vadd.f32 %v609, %v1665
      %v1667 = vpop.f32.mrb[0].mxu0
      %v1668 = vpop.f32.mrb[0].mxu0
      %v1669 = vadd.f32 %v609, %v1668
      %v1670 = vpop.f32.mrb[0].mxu0
      %1671 = vmatprep.mubr.bf16.mxu0 0
      %1672 = vmatmul.mubr.bf16.gmra.mrb[0].mxu0 %v1562
      %v1673 = vpop.f32.mrb[0].mxu0
      %v1674 = vadd.f32 %v609, %v1673
      %v1675 = vpop.f32.mrb[0].mxu0
      %v1676 = vpop.f32.mrb[0].mxu0
      %v1677 = vadd.f32 %v609, %v1676
      %v1678 = vpop.f32.mrb[0].mxu0
      %1679 = vmatprep.mubr.bf16.mxu0 0
      %1680 = vmatmul.mubr.bf16.gmra.mrb[0].mxu0 %v1565
      %v1681 = vpop.f32.mrb[0].mxu0
      %v1682 = vadd.f32 %v609, %v1681
      %v1683 = vpop.f32.mrb[0].mxu0
      %v1684 = vpop.f32.mrb[0].mxu0
      %v1685 = vadd.f32 %v609, %v1684
      %v1686 = vpop.f32.mrb[0].mxu0
      %1687 = vdwg.mxu0
      %1688 = vmax.xlane.f32.xlu0 %v1626
      %v1689 = vpop.xlane.xlu0 %1688
      %1690 = vmax.xlane.f32.xlu0 %v1629
      %v1691 = vpop.xlane.xlu0 %1690
      %1692 = vmax.xlane.f32.xlu0 %v1634
      %v1693 = vpop.xlane.xlu0 %1692
      %1694 = vmax.xlane.f32.xlu0 %v1637
      %v1695 = vpop.xlane.xlu0 %1694
      %1696 = vmax.xlane.f32.xlu0 %v1642
      %v1697 = vpop.xlane.xlu0 %1696
      %1698 = vmax.xlane.f32.xlu0 %v1645
      %v1699 = vpop.xlane.xlu0 %1698
      %1700 = vmax.xlane.f32.xlu0 %v1650
      %v1701 = vpop.xlane.xlu0 %1700
      %1702 = vmax.xlane.f32.xlu0 %v1653
      %v1703 = vpop.xlane.xlu0 %1702
      %1704 = vmax.xlane.f32.xlu0 %v1658
      %v1705 = vpop.xlane.xlu0 %1704
      %1706 = vmax.xlane.f32.xlu0 %v1661
      %v1707 = vpop.xlane.xlu0 %1706
      %1708 = vmax.xlane.f32.xlu0 %v1666
      %v1709 = vpop.xlane.xlu0 %1708
      %1710 = vmax.xlane.f32.xlu0 %v1669
      %v1711 = vpop.xlane.xlu0 %1710
      %1712 = vmax.xlane.f32.xlu0 %v1674
      %v1713 = vpop.xlane.xlu0 %1712
      %1714 = vmax.xlane.f32.xlu0 %v1677
      %v1715 = vpop.xlane.xlu0 %1714
      %1716 = vmax.xlane.f32.xlu0 %v1682
      %v1717 = vpop.xlane.xlu0 %1716
      %1718 = vmax.xlane.f32.xlu0 %v1685
      %v1719 = vpop.xlane.xlu0 %1718
      %v1720 = vsub.f32 %v1626, %v1689
      %v1721 = vsub.f32 %v1629, %v1691
      %v1722 = vsub.f32 %v1634, %v1693
      %v1723 = vsub.f32 %v1637, %v1695
      %v1724 = vsub.f32 %v1642, %v1697
      %v1725 = vsub.f32 %v1645, %v1699
      %v1726 = vsub.f32 %v1650, %v1701
      %v1727 = vsub.f32 %v1653, %v1703
      %v1728 = vsub.f32 %v1658, %v1705
      %v1729 = vsub.f32 %v1661, %v1707
      %v1730 = vsub.f32 %v1666, %v1709
      %v1731 = vsub.f32 %v1669, %v1711
      %v1732 = vsub.f32 %v1674, %v1713
      %v1733 = vsub.f32 %v1677, %v1715
      %v1734 = vsub.f32 %v1682, %v1717
      %v1735 = vsub.f32 %v1685, %v1719
      %v1736 = vmul.f32 %v1720, 1.442695
      %v1737 = vpow.pop %v1736
      %v1738 = vmul.f32 %v1721, 1.442695
      %v1739 = vpow.pop %v1738
      %v1740 = vmul.f32 %v1722, 1.442695
      %v1741 = vpow.pop %v1740
      %v1742 = vmul.f32 %v1723, 1.442695
      %v1743 = vpow.pop %v1742
      %v1744 = vmul.f32 %v1724, 1.442695
      %v1745 = vpow.pop %v1744
      %v1746 = vmul.f32 %v1725, 1.442695
      %v1747 = vpow.pop %v1746
      %v1748 = vmul.f32 %v1726, 1.442695
      %v1749 = vpow.pop %v1748
      %v1750 = vmul.f32 %v1727, 1.442695
      %v1751 = vpow.pop %v1750
      %v1752 = vmul.f32 %v1728, 1.442695
      %v1753 = vpow.pop %v1752
      %v1754 = vmul.f32 %v1729, 1.442695
      %v1755 = vpow.pop %v1754
      %v1756 = vmul.f32 %v1730, 1.442695
      %v1757 = vpow.pop %v1756
      %v1758 = vmul.f32 %v1731, 1.442695
      %v1759 = vpow.pop %v1758
      %v1760 = vmul.f32 %v1732, 1.442695
      %v1761 = vpow.pop %v1760
      %v1762 = vmul.f32 %v1733, 1.442695
      %v1763 = vpow.pop %v1762
      %v1764 = vmul.f32 %v1734, 1.442695
      %v1765 = vpow.pop %v1764
      %v1766 = vmul.f32 %v1735, 1.442695
      %v1767 = vpow.pop %v1766
      %1768 = vadd.xlane.f32.xlu0 %v1737
      %v1769 = vpop.xlane.xlu0 %1768
      %1770 = vadd.xlane.f32.xlu0 %v1739
      %v1771 = vpop.xlane.xlu0 %1770
      %1772 = vadd.xlane.f32.xlu0 %v1741
      %v1773 = vpop.xlane.xlu0 %1772
      %1774 = vadd.xlane.f32.xlu0 %v1743
      %v1775 = vpop.xlane.xlu0 %1774
      %1776 = vadd.xlane.f32.xlu0 %v1745
      %v1777 = vpop.xlane.xlu0 %1776
      %1778 = vadd.xlane.f32.xlu0 %v1747
      %v1779 = vpop.xlane.xlu0 %1778
      %1780 = vadd.xlane.f32.xlu0 %v1749
      %v1781 = vpop.xlane.xlu0 %1780
      %1782 = vadd.xlane.f32.xlu0 %v1751
      %v1783 = vpop.xlane.xlu0 %1782
      %1784 = vadd.xlane.f32.xlu0 %v1753
      %v1785 = vpop.xlane.xlu0 %1784
      %1786 = vadd.xlane.f32.xlu0 %v1755
      %v1787 = vpop.xlane.xlu0 %1786
      %1788 = vadd.xlane.f32.xlu0 %v1757
      %v1789 = vpop.xlane.xlu0 %1788
      %1790 = vadd.xlane.f32.xlu0 %v1759
      %v1791 = vpop.xlane.xlu0 %1790
      %1792 = vadd.xlane.f32.xlu0 %v1761
      %v1793 = vpop.xlane.xlu0 %1792
      %1794 = vadd.xlane.f32.xlu0 %v1763
      %v1795 = vpop.xlane.xlu0 %1794
      %1796 = vadd.xlane.f32.xlu0 %v1765
      %v1797 = vpop.xlane.xlu0 %1796
      %1798 = vadd.xlane.f32.xlu0 %v1767
      %v1799 = vpop.xlane.xlu0 %1798
      %v1800 = vrcp.pop %v1769
      %v1801 = vrcp.pop %v1771
      %v1802 = vrcp.pop %v1773
      %v1803 = vrcp.pop %v1775
      %v1804 = vrcp.pop %v1777
      %v1805 = vrcp.pop %v1779
      %v1806 = vrcp.pop %v1781
      %v1807 = vrcp.pop %v1783
      %v1808 = vrcp.pop %v1785
      %v1809 = vrcp.pop %v1787
      %v1810 = vrcp.pop %v1789
      %v1811 = vrcp.pop %v1791
      %v1812 = vrcp.pop %v1793
      %v1813 = vrcp.pop %v1795
      %v1814 = vrcp.pop %v1797
      %v1815 = vrcp.pop %v1799
      %v1816 = vpack.c.bf16 %v1739, %v1737
      %v1817 = vpack.c.bf16 %v1743, %v1741
      %v1818 = vpack.c.bf16 %v1747, %v1745
      %v1819 = vpack.c.bf16 %v1751, %v1749
      %v1820 = vpack.c.bf16 %v1755, %v1753
      %v1821 = vpack.c.bf16 %v1759, %v1757
      %v1822 = vpack.c.bf16 %v1763, %v1761
      %v1823 = vpack.c.bf16 %v1767, %v1765
      %1824 = vrot.lane.b32.xlu0 %v598, 88
      %v1825 = vpop.permute.xlu0 %1824
      %1826 = vrot.lane.b32.xlu0 %v599, 88
      %v1827 = vpop.permute.xlu0 %1826
      %1828 = vrot.lane.b32.xlu0 %v600, 88
      %v1829 = vpop.permute.xlu0 %1828
      %1830 = vrot.lane.b32.xlu0 %v601, 88
      %v1831 = vpop.permute.xlu0 %1830
      %1832 = vrot.lane.b32.xlu0 %v602, 88
      %v1833 = vpop.permute.xlu0 %1832
      %1834 = vrot.lane.b32.xlu0 %v603, 88
      %v1835 = vpop.permute.xlu0 %1834
      %1836 = vrot.lane.b32.xlu0 %v604, 88
      %v1837 = vpop.permute.xlu0 %1836
      %1838 = vrot.lane.b32.xlu0 %v605, 88
      %v1839 = vpop.permute.xlu0 %1838
      %1848 = vmatprep.subr.bf16.mxu0 0
      %1849 = vmatpush1.bf16.msra.mxu0 %v1825
      %1850 = vmatprep.subr.bf16.mxu0 0
      %1851 = vmatpush1.bf16.msra.mxu0 %v1827
      %1852 = vmatprep.subr.bf16.mxu0 0
      %1853 = vmatpush1.bf16.msra.mxu0 %v1829
      %1854 = vmatprep.subr.bf16.mxu0 0
      %1855 = vmatpush1.bf16.msra.mxu0 %v1831
      %1856 = vmatprep.subr.bf16.mxu0 0
      %1857 = vmatpush1.bf16.msra.mxu0 %v1833
      %1858 = vmatprep.subr.bf16.mxu0 0
      %1859 = vmatpush1.bf16.msra.mxu0 %v1835
      %1860 = vmatprep.subr.bf16.mxu0 0
      %1861 = vmatpush1.bf16.msra.mxu0 %v1837
      %1862 = vmatprep.subr.bf16.mxu0 0
      %1863 = vmatpush1.bf16.msra.mxu0 %v1839
      %1864 = vmatprep.subr.bf16.mxu0 0
      %1865 = vmatpush1.bf16.msra.mxu0 0
      %1866 = vmatprep.subr.bf16.mxu0 0
      %1867 = vmatpush1.bf16.msra.mxu0 0
      %1868 = vmatprep.subr.bf16.mxu0 0
      %1869 = vmatpush1.bf16.msra.mxu0 0
      %1870 = vmatprep.subr.bf16.mxu0 0
      %1871 = vmatpush1.bf16.msra.mxu0 0
      %1872 = vmatprep.subr.bf16.mxu0 0
      %1873 = vmatpush1.bf16.msra.mxu0 0
      %1874 = vmatprep.subr.bf16.mxu0 0
      %1875 = vmatpush1.bf16.msra.mxu0 0
      %1876 = vmatprep.subr.bf16.mxu0 0
      %1877 = vmatpush1.bf16.msra.mxu0 0
      %1878 = vmatprep.subr.bf16.mxu0 0
      %1879 = vmatpush1.bf16.msra.mxu0 0
      %1880 = vmatprep.mubr.bf16.mxu0 0
      %1881 = vmatmul.mubr.bf16.gmra.mrb[0].mxu0 %v1816
      %v1882 = vpop.f32.mrb[0].mxu0
      %v1883 = vadd.f32 0.0, %v1882
      %v1884 = vpop.f32.mrb[0].mxu0
      %v1885 = vpop.f32.mrb[0].mxu0
      %v1886 = vadd.f32 0.0, %v1885
      %v1887 = vpop.f32.mrb[0].mxu0
      %1888 = vmatprep.mubr.bf16.mxu0 0
      %1889 = vmatmul.mubr.bf16.gmra.mrb[0].mxu0 %v1817
      %v1890 = vpop.f32.mrb[0].mxu0
      %v1891 = vadd.f32 0.0, %v1890
      %v1892 = vpop.f32.mrb[0].mxu0
      %v1893 = vpop.f32.mrb[0].mxu0
      %v1894 = vadd.f32 0.0, %v1893
      %v1895 = vpop.f32.mrb[0].mxu0
      %1896 = vmatprep.mubr.bf16.mxu0 0
      %1897 = vmatmul.mubr.bf16.gmra.mrb[0].mxu0 %v1818
      %v1898 = vpop.f32.mrb[0].mxu0
      %v1899 = vadd.f32 0.0, %v1898
      %v1900 = vpop.f32.mrb[0].mxu0
      %v1901 = vpop.f32.mrb[0].mxu0
      %v1902 = vadd.f32 0.0, %v1901
      %v1903 = vpop.f32.mrb[0].mxu0
      %1904 = vmatprep.mubr.bf16.mxu0 0
      %1905 = vmatmul.mubr.bf16.gmra.mrb[0].mxu0 %v1819
      %v1906 = vpop.f32.mrb[0].mxu0
      %v1907 = vadd.f32 0.0, %v1906
      %v1908 = vpop.f32.mrb[0].mxu0
      %v1909 = vpop.f32.mrb[0].mxu0
      %v1910 = vadd.f32 0.0, %v1909
      %v1911 = vpop.f32.mrb[0].mxu0
      %1912 = vmatprep.mubr.bf16.mxu0 0
      %1913 = vmatmul.mubr.bf16.gmra.mrb[0].mxu0 %v1820
      %v1914 = vpop.f32.mrb[0].mxu0
      %v1915 = vadd.f32 0.0, %v1914
      %v1916 = vpop.f32.mrb[0].mxu0
      %v1917 = vpop.f32.mrb[0].mxu0
      %v1918 = vadd.f32 0.0, %v1917
      %v1919 = vpop.f32.mrb[0].mxu0
      %1920 = vmatprep.mubr.bf16.mxu0 0
      %1921 = vmatmul.mubr.bf16.gmra.mrb[0].mxu0 %v1821
      %v1922 = vpop.f32.mrb[0].mxu0
      %v1923 = vadd.f32 0.0, %v1922
      %v1924 = vpop.f32.mrb[0].mxu0
      %v1925 = vpop.f32.mrb[0].mxu0
      %v1926 = vadd.f32 0.0, %v1925
      %v1927 = vpop.f32.mrb[0].mxu0
      %1928 = vmatprep.mubr.bf16.mxu0 0
      %1929 = vmatmul.mubr.bf16.gmra.mrb[0].mxu0 %v1822
      %v1930 = vpop.f32.mrb[0].mxu0
      %v1931 = vadd.f32 0.0, %v1930
      %v1932 = vpop.f32.mrb[0].mxu0
      %v1933 = vpop.f32.mrb[0].mxu0
      %v1934 = vadd.f32 0.0, %v1933
      %v1935 = vpop.f32.mrb[0].mxu0
      %1936 = vmatprep.mubr.bf16.mxu0 0
      %1937 = vmatmul.mubr.bf16.gmra.mrb[0].mxu0 %v1823
      %v1938 = vpop.f32.mrb[0].mxu0
      %v1939 = vadd.f32 0.0, %v1938
      %v1940 = vpop.f32.mrb[0].mxu0
      %v1941 = vpop.f32.mrb[0].mxu0
      %v1942 = vadd.f32 0.0, %v1941
      %v1943 = vpop.f32.mrb[0].mxu0
      %1944 = vdwg.mxu0
      %v1945 = vmul.f32 %v1883, %v1800
      %v1946 = vmul.f32 %v1886, %v1801
      %v1947 = vmul.f32 %v1891, %v1802
      %v1948 = vmul.f32 %v1894, %v1803
      %v1949 = vmul.f32 %v1899, %v1804
      %v1950 = vmul.f32 %v1902, %v1805
      %v1951 = vmul.f32 %v1907, %v1806
      %v1952 = vmul.f32 %v1910, %v1807
      %v1953 = vmul.f32 %v1915, %v1808
      %v1954 = vmul.f32 %v1918, %v1809
      %v1955 = vmul.f32 %v1923, %v1810
      %v1956 = vmul.f32 %v1926, %v1811
      %v1957 = vmul.f32 %v1931, %v1812
      %v1958 = vmul.f32 %v1934, %v1813
      %v1959 = vmul.f32 %v1939, %v1814
      %v1960 = vmul.f32 %v1942, %v1815
      %v1961 = vpack.c.bf16 %v1946, %v1945
      %v1962 = vpack.c.bf16 %v1948, %v1947
      %v1963 = vpack.c.bf16 %v1950, %v1949
      %v1964 = vpack.c.bf16 %v1952, %v1951
      %v1965 = vpack.c.bf16 %v1954, %v1953
      %v1966 = vpack.c.bf16 %v1956, %v1955
      %v1967 = vpack.c.bf16 %v1958, %v1957
      %v1968 = vpack.c.bf16 %v1960, %v1959
      %1969 = vrot.lane.b32.xlu0 %v481, 116
      %v1970 = vpop.permute.xlu0 %1969
      %1971 = vrot.lane.b32.xlu0 %v482, 116
      %v1972 = vpop.permute.xlu0 %1971
      %1973 = vrot.lane.b32.xlu0 %v483, 116
      %v1974 = vpop.permute.xlu0 %1973
      %1975 = vrot.lane.b32.xlu0 %v484, 116
      %v1976 = vpop.permute.xlu0 %1975
      %1977 = vrot.lane.b32.xlu0 %v485, 116
      %v1978 = vpop.permute.xlu0 %1977
      %1979 = vrot.lane.b32.xlu0 %v486, 116
      %v1980 = vpop.permute.xlu0 %1979
      %1981 = vrot.lane.b32.xlu0 %v487, 116
      %v1982 = vpop.permute.xlu0 %1981
      %1983 = vrot.lane.b32.xlu0 %v488, 116
      %v1984 = vpop.permute.xlu0 %1983
      %1985 = vrot.lane.b32.xlu0 %v598, 116
      %v1986 = vpop.permute.xlu0 %1985
      %1987 = vrot.lane.b32.xlu0 %v599, 116
      %v1988 = vpop.permute.xlu0 %1987
      %1989 = vrot.lane.b32.xlu0 %v600, 116
      %v1990 = vpop.permute.xlu0 %1989
      %1991 = vrot.lane.b32.xlu0 %v601, 116
      %v1992 = vpop.permute.xlu0 %1991
      %1993 = vrot.lane.b32.xlu0 %v602, 116
      %v1994 = vpop.permute.xlu0 %1993
      %1995 = vrot.lane.b32.xlu0 %v603, 116
      %v1996 = vpop.permute.xlu0 %1995
      %1997 = vrot.lane.b32.xlu0 %v604, 116
      %v1998 = vpop.permute.xlu0 %1997
      %1999 = vrot.lane.b32.xlu0 %v605, 116
      %v2000 = vpop.permute.xlu0 %1999
      %v2002 = vsel %vm610, %v1970, 0
      %v2005 = vsel %vm610, %v1972, 0
      %v2008 = vsel %vm610, %v1974, 0
      %v2011 = vsel %vm610, %v1976, 0
      %v2014 = vsel %vm610, %v1978, 0
      %v2017 = vsel %vm610, %v1980, 0
      %v2020 = vsel %vm610, %v1982, 0
      %v2023 = vsel %vm610, %v1984, 0
      %v2026 = vsel %vm610, %v1986, 0
      %v2029 = vsel %vm610, %v1988, 0
      %v2032 = vsel %vm610, %v1990, 0
      %v2035 = vsel %vm610, %v1992, 0
      %v2038 = vsel %vm610, %v1994, 0
      %v2041 = vsel %vm610, %v1996, 0
      %v2044 = vsel %vm610, %v1998, 0
      %v2047 = vsel %vm610, %v2000, 0
      %2049 = vmatprep.subr.bf16.mxu0 0
      %2050 = vmatpush1.bf16.xpose.msra.mxu0 %v2026
      %2051 = vmatprep.subr.bf16.mxu0 0
      %2052 = vmatpush1.bf16.xpose.msra.mxu0 %v2029
      %2053 = vmatprep.subr.bf16.mxu0 0
      %2054 = vmatpush1.bf16.xpose.msra.mxu0 %v2032
      %2055 = vmatprep.subr.bf16.mxu0 0
      %2056 = vmatpush1.bf16.xpose.msra.mxu0 %v2035
      %2057 = vmatprep.subr.bf16.mxu0 0
      %2058 = vmatpush1.bf16.xpose.msra.mxu0 %v2038
      %2059 = vmatprep.subr.bf16.mxu0 0
      %2060 = vmatpush1.bf16.xpose.msra.mxu0 %v2041
      %2061 = vmatprep.subr.bf16.mxu0 0
      %2062 = vmatpush1.bf16.xpose.msra.mxu0 %v2044
      %2063 = vmatprep.subr.bf16.mxu0 0
      %2064 = vmatpush1.bf16.xpose.msra.mxu0 %v2047
      %2065 = vmatprep.subr.bf16.mxu0 0
      %2066 = vmatpush1.bf16.xpose.msra.mxu0 0
      %2067 = vmatprep.subr.bf16.mxu0 0
      %2068 = vmatpush1.bf16.xpose.msra.mxu0 0
      %2069 = vmatprep.subr.bf16.mxu0 0
      %2070 = vmatpush1.bf16.xpose.msra.mxu0 0
      %2071 = vmatprep.subr.bf16.mxu0 0
      %2072 = vmatpush1.bf16.xpose.msra.mxu0 0
      %2073 = vmatprep.subr.bf16.mxu0 0
      %2074 = vmatpush1.bf16.xpose.msra.mxu0 0
      %2075 = vmatprep.subr.bf16.mxu0 0
      %2076 = vmatpush1.bf16.xpose.msra.mxu0 0
      %2077 = vmatprep.subr.bf16.mxu0 0
      %2078 = vmatpush1.bf16.xpose.msra.mxu0 0
      %2079 = vmatprep.subr.bf16.mxu0 0
      %2080 = vmatpush1.bf16.xpose.msra.mxu0 0
      %2081 = vmatprep.mubr.bf16.mxu0 0
      %2082 = vmatmul.mubr.bf16.gmra.mrb[0].mxu0 %v2002
      %v2083 = vpop.f32.mrb[0].mxu0
      %v2084 = vadd.f32 %v609, %v2083
      %v2085 = vpop.f32.mrb[0].mxu0
      %v2086 = vpop.f32.mrb[0].mxu0
      %v2087 = vadd.f32 %v609, %v2086
      %v2088 = vpop.f32.mrb[0].mxu0
      %2089 = vmatprep.mubr.bf16.mxu0 0
      %2090 = vmatmul.mubr.bf16.gmra.mrb[0].mxu0 %v2005
      %v2091 = vpop.f32.mrb[0].mxu0
      %v2092 = vadd.f32 %v609, %v2091
      %v2093 = vpop.f32.mrb[0].mxu0
      %v2094 = vpop.f32.mrb[0].mxu0
      %v2095 = vadd.f32 %v609, %v2094
      %v2096 = vpop.f32.mrb[0].mxu0
      %2097 = vmatprep.mubr.bf16.mxu0 0
      %2098 = vmatmul.mubr.bf16.gmra.mrb[0].mxu0 %v2008
      %v2099 = vpop.f32.mrb[0].mxu0
      %v2100 = vadd.f32 %v609, %v2099
      %v2101 = vpop.f32.mrb[0].mxu0
      %v2102 = vpop.f32.mrb[0].mxu0
      %v2103 = vadd.f32 %v609, %v2102
      %v2104 = vpop.f32.mrb[0].mxu0
      %2105 = vmatprep.mubr.bf16.mxu0 0
      %2106 = vmatmul.mubr.bf16.gmra.mrb[0].mxu0 %v2011
      %v2107 = vpop.f32.mrb[0].mxu0
      %v2108 = vadd.f32 %v609, %v2107
      %v2109 = vpop.f32.mrb[0].mxu0
      %v2110 = vpop.f32.mrb[0].mxu0
      %v2111 = vadd.f32 %v609, %v2110
      %v2112 = vpop.f32.mrb[0].mxu0
      %2113 = vmatprep.mubr.bf16.mxu0 0
      %2114 = vmatmul.mubr.bf16.gmra.mrb[0].mxu0 %v2014
      %v2115 = vpop.f32.mrb[0].mxu0
      %v2116 = vadd.f32 %v609, %v2115
      %v2117 = vpop.f32.mrb[0].mxu0
      %v2118 = vpop.f32.mrb[0].mxu0
      %v2119 = vadd.f32 %v609, %v2118
      %v2120 = vpop.f32.mrb[0].mxu0
      %2121 = vmatprep.mubr.bf16.mxu0 0
      %2122 = vmatmul.mubr.bf16.gmra.mrb[0].mxu0 %v2017
      %v2123 = vpop.f32.mrb[0].mxu0
      %v2124 = vadd.f32 %v609, %v2123
      %v2125 = vpop.f32.mrb[0].mxu0
      %v2126 = vpop.f32.mrb[0].mxu0
      %v2127 = vadd.f32 %v609, %v2126
      %v2128 = vpop.f32.mrb[0].mxu0
      %2129 = vmatprep.mubr.bf16.mxu0 0
      %2130 = vmatmul.mubr.bf16.gmra.mrb[0].mxu0 %v2020
      %v2131 = vpop.f32.mrb[0].mxu0
      %v2132 = vadd.f32 %v609, %v2131
      %v2133 = vpop.f32.mrb[0].mxu0
      %v2134 = vpop.f32.mrb[0].mxu0
      %v2135 = vadd.f32 %v609, %v2134
      %v2136 = vpop.f32.mrb[0].mxu0
      %2137 = vmatprep.mubr.bf16.mxu0 0
      %2138 = vmatmul.mubr.bf16.gmra.mrb[0].mxu0 %v2023
      %v2139 = vpop.f32.mrb[0].mxu0
      %v2140 = vadd.f32 %v609, %v2139
      %v2141 = vpop.f32.mrb[0].mxu0
      %v2142 = vpop.f32.mrb[0].mxu0
      %v2143 = vadd.f32 %v609, %v2142
      %v2144 = vpop.f32.mrb[0].mxu0
      %2145 = vdwg.mxu0
      %2146 = vmax.xlane.f32.xlu0 %v2084
      %v2147 = vpop.xlane.xlu0 %2146
      %2148 = vmax.xlane.f32.xlu0 %v2087
      %v2149 = vpop.xlane.xlu0 %2148
      %2150 = vmax.xlane.f32.xlu0 %v2092
      %v2151 = vpop.xlane.xlu0 %2150
      %2152 = vmax.xlane.f32.xlu0 %v2095
      %v2153 = vpop.xlane.xlu0 %2152
      %2154 = vmax.xlane.f32.xlu0 %v2100
      %v2155 = vpop.xlane.xlu0 %2154
      %2156 = vmax.xlane.f32.xlu0 %v2103
      %v2157 = vpop.xlane.xlu0 %2156
      %2158 = vmax.xlane.f32.xlu0 %v2108
      %v2159 = vpop.xlane.xlu0 %2158
      %2160 = vmax.xlane.f32.xlu0 %v2111
      %v2161 = vpop.xlane.xlu0 %2160
      %2162 = vmax.xlane.f32.xlu0 %v2116
      %v2163 = vpop.xlane.xlu0 %2162
      %2164 = vmax.xlane.f32.xlu0 %v2119
      %v2165 = vpop.xlane.xlu0 %2164
      %2166 = vmax.xlane.f32.xlu0 %v2124
      %v2167 = vpop.xlane.xlu0 %2166
      %2168 = vmax.xlane.f32.xlu0 %v2127
      %v2169 = vpop.xlane.xlu0 %2168
      %2170 = vmax.xlane.f32.xlu0 %v2132
      %v2171 = vpop.xlane.xlu0 %2170
      %2172 = vmax.xlane.f32.xlu0 %v2135
      %v2173 = vpop.xlane.xlu0 %2172
      %2174 = vmax.xlane.f32.xlu0 %v2140
      %v2175 = vpop.xlane.xlu0 %2174
      %2176 = vmax.xlane.f32.xlu0 %v2143
      %v2177 = vpop.xlane.xlu0 %2176
      %v2178 = vsub.f32 %v2084, %v2147
      %v2179 = vsub.f32 %v2087, %v2149
      %v2180 = vsub.f32 %v2092, %v2151
      %v2181 = vsub.f32 %v2095, %v2153
      %v2182 = vsub.f32 %v2100, %v2155
      %v2183 = vsub.f32 %v2103, %v2157
      %v2184 = vsub.f32 %v2108, %v2159
      %v2185 = vsub.f32 %v2111, %v2161
      %v2186 = vsub.f32 %v2116, %v2163
      %v2187 = vsub.f32 %v2119, %v2165
      %v2188 = vsub.f32 %v2124, %v2167
      %v2189 = vsub.f32 %v2127, %v2169
      %v2190 = vsub.f32 %v2132, %v2171
      %v2191 = vsub.f32 %v2135, %v2173
      %v2192 = vsub.f32 %v2140, %v2175
      %v2193 = vsub.f32 %v2143, %v2177
      %v2194 = vmul.f32 %v2178, 1.442695
      %v2195 = vpow.pop %v2194
      %v2196 = vmul.f32 %v2179, 1.442695
      %v2197 = vpow.pop %v2196
      %v2198 = vmul.f32 %v2180, 1.442695
      %v2199 = vpow.pop %v2198
      %v2200 = vmul.f32 %v2181, 1.442695
      %v2201 = vpow.pop %v2200
      %v2202 = vmul.f32 %v2182, 1.442695
      %v2203 = vpow.pop %v2202
      %v2204 = vmul.f32 %v2183, 1.442695
      %v2205 = vpow.pop %v2204
      %v2206 = vmul.f32 %v2184, 1.442695
      %v2207 = vpow.pop %v2206
      %v2208 = vmul.f32 %v2185, 1.442695
      %v2209 = vpow.pop %v2208
      %v2210 = vmul.f32 %v2186, 1.442695
      %v2211 = vpow.pop %v2210
      %v2212 = vmul.f32 %v2187, 1.442695
      %v2213 = vpow.pop %v2212
      %v2214 = vmul.f32 %v2188, 1.442695
      %v2215 = vpow.pop %v2214
      %v2216 = vmul.f32 %v2189, 1.442695
      %v2217 = vpow.pop %v2216
      %v2218 = vmul.f32 %v2190, 1.442695
      %v2219 = vpow.pop %v2218
      %v2220 = vmul.f32 %v2191, 1.442695
      %v2221 = vpow.pop %v2220
      %v2222 = vmul.f32 %v2192, 1.442695
      %v2223 = vpow.pop %v2222
      %v2224 = vmul.f32 %v2193, 1.442695
      %v2225 = vpow.pop %v2224
      %2226 = vadd.xlane.f32.xlu0 %v2195
      %v2227 = vpop.xlane.xlu0 %2226
      %2228 = vadd.xlane.f32.xlu0 %v2197
      %v2229 = vpop.xlane.xlu0 %2228
      %2230 = vadd.xlane.f32.xlu0 %v2199
      %v2231 = vpop.xlane.xlu0 %2230
      %2232 = vadd.xlane.f32.xlu0 %v2201
      %v2233 = vpop.xlane.xlu0 %2232
      %2234 = vadd.xlane.f32.xlu0 %v2203
      %v2235 = vpop.xlane.xlu0 %2234
      %2236 = vadd.xlane.f32.xlu0 %v2205
      %v2237 = vpop.xlane.xlu0 %2236
      %2238 = vadd.xlane.f32.xlu0 %v2207
      %v2239 = vpop.xlane.xlu0 %2238
      %2240 = vadd.xlane.f32.xlu0 %v2209
      %v2241 = vpop.xlane.xlu0 %2240
      %2242 = vadd.xlane.f32.xlu0 %v2211
      %v2243 = vpop.xlane.xlu0 %2242
      %2244 = vadd.xlane.f32.xlu0 %v2213
      %v2245 = vpop.xlane.xlu0 %2244
      %2246 = vadd.xlane.f32.xlu0 %v2215
      %v2247 = vpop.xlane.xlu0 %2246
      %2248 = vadd.xlane.f32.xlu0 %v2217
      %v2249 = vpop.xlane.xlu0 %2248
      %2250 = vadd.xlane.f32.xlu0 %v2219
      %v2251 = vpop.xlane.xlu0 %2250
      %2252 = vadd.xlane.f32.xlu0 %v2221
      %v2253 = vpop.xlane.xlu0 %2252
      %2254 = vadd.xlane.f32.xlu0 %v2223
      %v2255 = vpop.xlane.xlu0 %2254
      %2256 = vadd.xlane.f32.xlu0 %v2225
      %v2257 = vpop.xlane.xlu0 %2256
      %v2258 = vrcp.pop %v2227
      %v2259 = vrcp.pop %v2229
      %v2260 = vrcp.pop %v2231
      %v2261 = vrcp.pop %v2233
      %v2262 = vrcp.pop %v2235
      %v2263 = vrcp.pop %v2237
      %v2264 = vrcp.pop %v2239
      %v2265 = vrcp.pop %v2241
      %v2266 = vrcp.pop %v2243
      %v2267 = vrcp.pop %v2245
      %v2268 = vrcp.pop %v2247
      %v2269 = vrcp.pop %v2249
      %v2270 = vrcp.pop %v2251
      %v2271 = vrcp.pop %v2253
      %v2272 = vrcp.pop %v2255
      %v2273 = vrcp.pop %v2257
      %v2274 = vpack.c.bf16 %v2197, %v2195
      %v2275 = vpack.c.bf16 %v2201, %v2199
      %v2276 = vpack.c.bf16 %v2205, %v2203
      %v2277 = vpack.c.bf16 %v2209, %v2207
      %v2278 = vpack.c.bf16 %v2213, %v2211
      %v2279 = vpack.c.bf16 %v2217, %v2215
      %v2280 = vpack.c.bf16 %v2221, %v2219
      %v2281 = vpack.c.bf16 %v2225, %v2223
      %2282 = vrot.lane.b32.xlu0 %v598, 84
      %v2283 = vpop.permute.xlu0 %2282
      %2284 = vrot.lane.b32.xlu0 %v599, 84
      %v2285 = vpop.permute.xlu0 %2284
      %2286 = vrot.lane.b32.xlu0 %v600, 84
      %v2287 = vpop.permute.xlu0 %2286
      %2288 = vrot.lane.b32.xlu0 %v601, 84
      %v2289 = vpop.permute.xlu0 %2288
      %2290 = vrot.lane.b32.xlu0 %v602, 84
      %v2291 = vpop.permute.xlu0 %2290
      %2292 = vrot.lane.b32.xlu0 %v603, 84
      %v2293 = vpop.permute.xlu0 %2292
      %2294 = vrot.lane.b32.xlu0 %v604, 84
      %v2295 = vpop.permute.xlu0 %2294
      %2296 = vrot.lane.b32.xlu0 %v605, 84
      %v2297 = vpop.permute.xlu0 %2296
      %2306 = vmatprep.subr.bf16.mxu0 0
      %2307 = vmatpush1.bf16.msra.mxu0 %v2283
      %2308 = vmatprep.subr.bf16.mxu0 0
      %2309 = vmatpush1.bf16.msra.mxu0 %v2285
      %2310 = vmatprep.subr.bf16.mxu0 0
      %2311 = vmatpush1.bf16.msra.mxu0 %v2287
      %2312 = vmatprep.subr.bf16.mxu0 0
      %2313 = vmatpush1.bf16.msra.mxu0 %v2289
      %2314 = vmatprep.subr.bf16.mxu0 0
      %2315 = vmatpush1.bf16.msra.mxu0 %v2291
      %2316 = vmatprep.subr.bf16.mxu0 0
      %2317 = vmatpush1.bf16.msra.mxu0 %v2293
      %2318 = vmatprep.subr.bf16.mxu0 0
      %2319 = vmatpush1.bf16.msra.mxu0 %v2295
      %2320 = vmatprep.subr.bf16.mxu0 0
      %2321 = vmatpush1.bf16.msra.mxu0 %v2297
      %2322 = vmatprep.subr.bf16.mxu0 0
      %2323 = vmatpush1.bf16.msra.mxu0 0
      %2324 = vmatprep.subr.bf16.mxu0 0
      %2325 = vmatpush1.bf16.msra.mxu0 0
      %2326 = vmatprep.subr.bf16.mxu0 0
      %2327 = vmatpush1.bf16.msra.mxu0 0
      %2328 = vmatprep.subr.bf16.mxu0 0
      %2329 = vmatpush1.bf16.msra.mxu0 0
      %2330 = vmatprep.subr.bf16.mxu0 0
      %2331 = vmatpush1.bf16.msra.mxu0 0
      %2332 = vmatprep.subr.bf16.mxu0 0
      %2333 = vmatpush1.bf16.msra.mxu0 0
      %2334 = vmatprep.subr.bf16.mxu0 0
      %2335 = vmatpush1.bf16.msra.mxu0 0
      %2336 = vmatprep.subr.bf16.mxu0 0
      %2337 = vmatpush1.bf16.msra.mxu0 0
      %2338 = vmatprep.mubr.bf16.mxu0 0
      %2339 = vmatmul.mubr.bf16.gmra.mrb[0].mxu0 %v2274
      %v2340 = vpop.f32.mrb[0].mxu0
      %v2341 = vadd.f32 0.0, %v2340
      %v2342 = vpop.f32.mrb[0].mxu0
      %v2343 = vpop.f32.mrb[0].mxu0
      %v2344 = vadd.f32 0.0, %v2343
      %v2345 = vpop.f32.mrb[0].mxu0
      %2346 = vmatprep.mubr.bf16.mxu0 0
      %2347 = vmatmul.mubr.bf16.gmra.mrb[0].mxu0 %v2275
      %v2348 = vpop.f32.mrb[0].mxu0
      %v2349 = vadd.f32 0.0, %v2348
      %v2350 = vpop.f32.mrb[0].mxu0
      %v2351 = vpop.f32.mrb[0].mxu0
      %v2352 = vadd.f32 0.0, %v2351
      %v2353 = vpop.f32.mrb[0].mxu0
      %2354 = vmatprep.mubr.bf16.mxu0 0
      %2355 = vmatmul.mubr.bf16.gmra.mrb[0].mxu0 %v2276
      %v2356 = vpop.f32.mrb[0].mxu0
      %v2357 = vadd.f32 0.0, %v2356
      %v2358 = vpop.f32.mrb[0].mxu0
      %v2359 = vpop.f32.mrb[0].mxu0
      %v2360 = vadd.f32 0.0, %v2359
      %v2361 = vpop.f32.mrb[0].mxu0
      %2362 = vmatprep.mubr.bf16.mxu0 0
      %2363 = vmatmul.mubr.bf16.gmra.mrb[0].mxu0 %v2277
      %v2364 = vpop.f32.mrb[0].mxu0
      %v2365 = vadd.f32 0.0, %v2364
      %v2366 = vpop.f32.mrb[0].mxu0
      %v2367 = vpop.f32.mrb[0].mxu0
      %v2368 = vadd.f32 0.0, %v2367
      %v2369 = vpop.f32.mrb[0].mxu0
      %2370 = vmatprep.mubr.bf16.mxu0 0
      %2371 = vmatmul.mubr.bf16.gmra.mrb[0].mxu0 %v2278
      %v2372 = vpop.f32.mrb[0].mxu0
      %v2373 = vadd.f32 0.0, %v2372
      %v2374 = vpop.f32.mrb[0].mxu0
      %v2375 = vpop.f32.mrb[0].mxu0
      %v2376 = vadd.f32 0.0, %v2375
      %v2377 = vpop.f32.mrb[0].mxu0
      %2378 = vmatprep.mubr.bf16.mxu0 0
      %2379 = vmatmul.mubr.bf16.gmra.mrb[0].mxu0 %v2279
      %v2380 = vpop.f32.mrb[0].mxu0
      %v2381 = vadd.f32 0.0, %v2380
      %v2382 = vpop.f32.mrb[0].mxu0
      %v2383 = vpop.f32.mrb[0].mxu0
      %v2384 = vadd.f32 0.0, %v2383
      %v2385 = vpop.f32.mrb[0].mxu0
      %2386 = vmatprep.mubr.bf16.mxu0 0
      %2387 = vmatmul.mubr.bf16.gmra.mrb[0].mxu0 %v2280
      %v2388 = vpop.f32.mrb[0].mxu0
      %v2389 = vadd.f32 0.0, %v2388
      %v2390 = vpop.f32.mrb[0].mxu0
      %v2391 = vpop.f32.mrb[0].mxu0
      %v2392 = vadd.f32 0.0, %v2391
      %v2393 = vpop.f32.mrb[0].mxu0
      %2394 = vmatprep.mubr.bf16.mxu0 0
      %2395 = vmatmul.mubr.bf16.gmra.mrb[0].mxu0 %v2281
      %v2396 = vpop.f32.mrb[0].mxu0
      %v2397 = vadd.f32 0.0, %v2396
      %v2398 = vpop.f32.mrb[0].mxu0
      %v2399 = vpop.f32.mrb[0].mxu0
      %v2400 = vadd.f32 0.0, %v2399
      %v2401 = vpop.f32.mrb[0].mxu0
      %2402 = vdwg.mxu0
      %v2403 = vmul.f32 %v2341, %v2258
      %v2404 = vmul.f32 %v2344, %v2259
      %v2405 = vmul.f32 %v2349, %v2260
      %v2406 = vmul.f32 %v2352, %v2261
      %v2407 = vmul.f32 %v2357, %v2262
      %v2408 = vmul.f32 %v2360, %v2263
      %v2409 = vmul.f32 %v2365, %v2264
      %v2410 = vmul.f32 %v2368, %v2265
      %v2411 = vmul.f32 %v2373, %v2266
      %v2412 = vmul.f32 %v2376, %v2267
      %v2413 = vmul.f32 %v2381, %v2268
      %v2414 = vmul.f32 %v2384, %v2269
      %v2415 = vmul.f32 %v2389, %v2270
      %v2416 = vmul.f32 %v2392, %v2271
      %v2417 = vmul.f32 %v2397, %v2272
      %v2418 = vmul.f32 %v2400, %v2273
      %v2419 = vpack.c.bf16 %v2404, %v2403
      %v2420 = vpack.c.bf16 %v2406, %v2405
      %v2421 = vpack.c.bf16 %v2408, %v2407
      %v2422 = vpack.c.bf16 %v2410, %v2409
      %v2423 = vpack.c.bf16 %v2412, %v2411
      %v2424 = vpack.c.bf16 %v2414, %v2413
      %v2425 = vpack.c.bf16 %v2416, %v2415
      %v2426 = vpack.c.bf16 %v2418, %v2417
      %2427 = vrot.lane.b32.xlu0 %v481, 112
      %v2428 = vpop.permute.xlu0 %2427
      %2429 = vrot.lane.b32.xlu0 %v482, 112
      %v2430 = vpop.permute.xlu0 %2429
      %2431 = vrot.lane.b32.xlu0 %v483, 112
      %v2432 = vpop.permute.xlu0 %2431
      %2433 = vrot.lane.b32.xlu0 %v484, 112
      %v2434 = vpop.permute.xlu0 %2433
      %2435 = vrot.lane.b32.xlu0 %v485, 112
      %v2436 = vpop.permute.xlu0 %2435
      %2437 = vrot.lane.b32.xlu0 %v486, 112
      %v2438 = vpop.permute.xlu0 %2437
      %2439 = vrot.lane.b32.xlu0 %v487, 112
      %v2440 = vpop.permute.xlu0 %2439
      %2441 = vrot.lane.b32.xlu0 %v488, 112
      %v2442 = vpop.permute.xlu0 %2441
      %2443 = vrot.lane.b32.xlu0 %v598, 112
      %v2444 = vpop.permute.xlu0 %2443
      %2445 = vrot.lane.b32.xlu0 %v599, 112
      %v2446 = vpop.permute.xlu0 %2445
      %2447 = vrot.lane.b32.xlu0 %v600, 112
      %v2448 = vpop.permute.xlu0 %2447
      %2449 = vrot.lane.b32.xlu0 %v601, 112
      %v2450 = vpop.permute.xlu0 %2449
      %2451 = vrot.lane.b32.xlu0 %v602, 112
      %v2452 = vpop.permute.xlu0 %2451
      %2453 = vrot.lane.b32.xlu0 %v603, 112
      %v2454 = vpop.permute.xlu0 %2453
      %2455 = vrot.lane.b32.xlu0 %v604, 112
      %v2456 = vpop.permute.xlu0 %2455
      %2457 = vrot.lane.b32.xlu0 %v605, 112
      %v2458 = vpop.permute.xlu0 %2457
      %v2460 = vsel %vm610, %v2428, 0
      %v2463 = vsel %vm610, %v2430, 0
      %v2466 = vsel %vm610, %v2432, 0
      %v2469 = vsel %vm610, %v2434, 0
      %v2472 = vsel %vm610, %v2436, 0
      %v2475 = vsel %vm610, %v2438, 0
      %v2478 = vsel %vm610, %v2440, 0
      %v2481 = vsel %vm610, %v2442, 0
      %v2484 = vsel %vm610, %v2444, 0
      %v2487 = vsel %vm610, %v2446, 0
      %v2490 = vsel %vm610, %v2448, 0
      %v2493 = vsel %vm610, %v2450, 0
      %v2496 = vsel %vm610, %v2452, 0
      %v2499 = vsel %vm610, %v2454, 0
      %v2502 = vsel %vm610, %v2456, 0
      %v2505 = vsel %vm610, %v2458, 0
      %2507 = vmatprep.subr.bf16.mxu0 0
      %2508 = vmatpush1.bf16.xpose.msra.mxu0 %v2484
      %2509 = vmatprep.subr.bf16.mxu0 0
      %2510 = vmatpush1.bf16.xpose.msra.mxu0 %v2487
      %2511 = vmatprep.subr.bf16.mxu0 0
      %2512 = vmatpush1.bf16.xpose.msra.mxu0 %v2490
      %2513 = vmatprep.subr.bf16.mxu0 0
      %2514 = vmatpush1.bf16.xpose.msra.mxu0 %v2493
      %2515 = vmatprep.subr.bf16.mxu0 0
      %2516 = vmatpush1.bf16.xpose.msra.mxu0 %v2496
      %2517 = vmatprep.subr.bf16.mxu0 0
      %2518 = vmatpush1.bf16.xpose.msra.mxu0 %v2499
      %2519 = vmatprep.subr.bf16.mxu0 0
      %2520 = vmatpush1.bf16.xpose.msra.mxu0 %v2502
      %2521 = vmatprep.subr.bf16.mxu0 0
      %2522 = vmatpush1.bf16.xpose.msra.mxu0 %v2505
      %2523 = vmatprep.subr.bf16.mxu0 0
      %2524 = vmatpush1.bf16.xpose.msra.mxu0 0
      %2525 = vmatprep.subr.bf16.mxu0 0
      %2526 = vmatpush1.bf16.xpose.msra.mxu0 0
      %2527 = vmatprep.subr.bf16.mxu0 0
      %2528 = vmatpush1.bf16.xpose.msra.mxu0 0
      %2529 = vmatprep.subr.bf16.mxu0 0
      %2530 = vmatpush1.bf16.xpose.msra.mxu0 0
      %2531 = vmatprep.subr.bf16.mxu0 0
      %2532 = vmatpush1.bf16.xpose.msra.mxu0 0
      %2533 = vmatprep.subr.bf16.mxu0 0
      %2534 = vmatpush1.bf16.xpose.msra.mxu0 0
      %2535 = vmatprep.subr.bf16.mxu0 0
      %2536 = vmatpush1.bf16.xpose.msra.mxu0 0
      %2537 = vmatprep.subr.bf16.mxu0 0
      %2538 = vmatpush1.bf16.xpose.msra.mxu0 0
      %2539 = vmatprep.mubr.bf16.mxu0 0
      %2540 = vmatmul.mubr.bf16.gmra.mrb[0].mxu0 %v2460
      %v2541 = vpop.f32.mrb[0].mxu0
      %v2542 = vadd.f32 %v609, %v2541
      %v2543 = vpop.f32.mrb[0].mxu0
      %v2544 = vpop.f32.mrb[0].mxu0
      %v2545 = vadd.f32 %v609, %v2544
      %v2546 = vpop.f32.mrb[0].mxu0
      %2547 = vmatprep.mubr.bf16.mxu0 0
      %2548 = vmatmul.mubr.bf16.gmra.mrb[0].mxu0 %v2463
      %v2549 = vpop.f32.mrb[0].mxu0
      %v2550 = vadd.f32 %v609, %v2549
      %v2551 = vpop.f32.mrb[0].mxu0
      %v2552 = vpop.f32.mrb[0].mxu0
      %v2553 = vadd.f32 %v609, %v2552
      %v2554 = vpop.f32.mrb[0].mxu0
      %2555 = vmatprep.mubr.bf16.mxu0 0
      %2556 = vmatmul.mubr.bf16.gmra.mrb[0].mxu0 %v2466
      %v2557 = vpop.f32.mrb[0].mxu0
      %v2558 = vadd.f32 %v609, %v2557
      %v2559 = vpop.f32.mrb[0].mxu0
      %v2560 = vpop.f32.mrb[0].mxu0
      %v2561 = vadd.f32 %v609, %v2560
      %v2562 = vpop.f32.mrb[0].mxu0
      %2563 = vmatprep.mubr.bf16.mxu0 0
      %2564 = vmatmul.mubr.bf16.gmra.mrb[0].mxu0 %v2469
      %v2565 = vpop.f32.mrb[0].mxu0
      %v2566 = vadd.f32 %v609, %v2565
      %v2567 = vpop.f32.mrb[0].mxu0
      %v2568 = vpop.f32.mrb[0].mxu0
      %v2569 = vadd.f32 %v609, %v2568
      %v2570 = vpop.f32.mrb[0].mxu0
      %2571 = vmatprep.mubr.bf16.mxu0 0
      %2572 = vmatmul.mubr.bf16.gmra.mrb[0].mxu0 %v2472
      %v2573 = vpop.f32.mrb[0].mxu0
      %v2574 = vadd.f32 %v609, %v2573
      %v2575 = vpop.f32.mrb[0].mxu0
      %v2576 = vpop.f32.mrb[0].mxu0
      %v2577 = vadd.f32 %v609, %v2576
      %v2578 = vpop.f32.mrb[0].mxu0
      %2579 = vmatprep.mubr.bf16.mxu0 0
      %2580 = vmatmul.mubr.bf16.gmra.mrb[0].mxu0 %v2475
      %v2581 = vpop.f32.mrb[0].mxu0
      %v2582 = vadd.f32 %v609, %v2581
      %v2583 = vpop.f32.mrb[0].mxu0
      %v2584 = vpop.f32.mrb[0].mxu0
      %v2585 = vadd.f32 %v609, %v2584
      %v2586 = vpop.f32.mrb[0].mxu0
      %2587 = vmatprep.mubr.bf16.mxu0 0
      %2588 = vmatmul.mubr.bf16.gmra.mrb[0].mxu0 %v2478
      %v2589 = vpop.f32.mrb[0].mxu0
      %v2590 = vadd.f32 %v609, %v2589
      %v2591 = vpop.f32.mrb[0].mxu0
      %v2592 = vpop.f32.mrb[0].mxu0
      %v2593 = vadd.f32 %v609, %v2592
      %v2594 = vpop.f32.mrb[0].mxu0
      %2595 = vmatprep.mubr.bf16.mxu0 0
      %2596 = vmatmul.mubr.bf16.gmra.mrb[0].mxu0 %v2481
      %v2597 = vpop.f32.mrb[0].mxu0
      %v2598 = vadd.f32 %v609, %v2597
      %v2599 = vpop.f32.mrb[0].mxu0
      %v2600 = vpop.f32.mrb[0].mxu0
      %v2601 = vadd.f32 %v609, %v2600
      %v2602 = vpop.f32.mrb[0].mxu0
      %2603 = vdwg.mxu0
      %2604 = vmax.xlane.f32.xlu0 %v2542
      %v2605 = vpop.xlane.xlu0 %2604
      %2606 = vmax.xlane.f32.xlu0 %v2545
      %v2607 = vpop.xlane.xlu0 %2606
      %2608 = vmax.xlane.f32.xlu0 %v2550
      %v2609 = vpop.xlane.xlu0 %2608
      %2610 = vmax.xlane.f32.xlu0 %v2553
      %v2611 = vpop.xlane.xlu0 %2610
      %2612 = vmax.xlane.f32.xlu0 %v2558
      %v2613 = vpop.xlane.xlu0 %2612
      %2614 = vmax.xlane.f32.xlu0 %v2561
      %v2615 = vpop.xlane.xlu0 %2614
      %2616 = vmax.xlane.f32.xlu0 %v2566
      %v2617 = vpop.xlane.xlu0 %2616
      %2618 = vmax.xlane.f32.xlu0 %v2569
      %v2619 = vpop.xlane.xlu0 %2618
      %2620 = vmax.xlane.f32.xlu0 %v2574
      %v2621 = vpop.xlane.xlu0 %2620
      %2622 = vmax.xlane.f32.xlu0 %v2577
      %v2623 = vpop.xlane.xlu0 %2622
      %2624 = vmax.xlane.f32.xlu0 %v2582
      %v2625 = vpop.xlane.xlu0 %2624
      %2626 = vmax.xlane.f32.xlu0 %v2585
      %v2627 = vpop.xlane.xlu0 %2626
      %2628 = vmax.xlane.f32.xlu0 %v2590
      %v2629 = vpop.xlane.xlu0 %2628
      %2630 = vmax.xlane.f32.xlu0 %v2593
      %v2631 = vpop.xlane.xlu0 %2630
      %2632 = vmax.xlane.f32.xlu0 %v2598
      %v2633 = vpop.xlane.xlu0 %2632
      %2634 = vmax.xlane.f32.xlu0 %v2601
      %v2635 = vpop.xlane.xlu0 %2634
      %v2636 = vsub.f32 %v2542, %v2605
      %v2637 = vsub.f32 %v2545, %v2607
      %v2638 = vsub.f32 %v2550, %v2609
      %v2639 = vsub.f32 %v2553, %v2611
      %v2640 = vsub.f32 %v2558, %v2613
      %v2641 = vsub.f32 %v2561, %v2615
      %v2642 = vsub.f32 %v2566, %v2617
      %v2643 = vsub.f32 %v2569, %v2619
      %v2644 = vsub.f32 %v2574, %v2621
      %v2645 = vsub.f32 %v2577, %v2623
      %v2646 = vsub.f32 %v2582, %v2625
      %v2647 = vsub.f32 %v2585, %v2627
      %v2648 = vsub.f32 %v2590, %v2629
      %v2649 = vsub.f32 %v2593, %v2631
      %v2650 = vsub.f32 %v2598, %v2633
      %v2651 = vsub.f32 %v2601, %v2635
      %v2652 = vmul.f32 %v2636, 1.442695
      %v2653 = vpow.pop %v2652
      %v2654 = vmul.f32 %v2637, 1.442695
      %v2655 = vpow.pop %v2654
      %v2656 = vmul.f32 %v2638, 1.442695
      %v2657 = vpow.pop %v2656
      %v2658 = vmul.f32 %v2639, 1.442695
      %v2659 = vpow.pop %v2658
      %v2660 = vmul.f32 %v2640, 1.442695
      %v2661 = vpow.pop %v2660
      %v2662 = vmul.f32 %v2641, 1.442695
      %v2663 = vpow.pop %v2662
      %v2664 = vmul.f32 %v2642, 1.442695
      %v2665 = vpow.pop %v2664
      %v2666 = vmul.f32 %v2643, 1.442695
      %v2667 = vpow.pop %v2666
      %v2668 = vmul.f32 %v2644, 1.442695
      %v2669 = vpow.pop %v2668
      %v2670 = vmul.f32 %v2645, 1.442695
      %v2671 = vpow.pop %v2670
      %v2672 = vmul.f32 %v2646, 1.442695
      %v2673 = vpow.pop %v2672
      %v2674 = vmul.f32 %v2647, 1.442695
      %v2675 = vpow.pop %v2674
      %v2676 = vmul.f32 %v2648, 1.442695
      %v2677 = vpow.pop %v2676
      %v2678 = vmul.f32 %v2649, 1.442695
      %v2679 = vpow.pop %v2678
      %v2680 = vmul.f32 %v2650, 1.442695
      %v2681 = vpow.pop %v2680
      %v2682 = vmul.f32 %v2651, 1.442695
      %v2683 = vpow.pop %v2682
      %2684 = vadd.xlane.f32.xlu0 %v2653
      %v2685 = vpop.xlane.xlu0 %2684
      %2686 = vadd.xlane.f32.xlu0 %v2655
      %v2687 = vpop.xlane.xlu0 %2686
      %2688 = vadd.xlane.f32.xlu0 %v2657
      %v2689 = vpop.xlane.xlu0 %2688
      %2690 = vadd.xlane.f32.xlu0 %v2659
      %v2691 = vpop.xlane.xlu0 %2690
      %2692 = vadd.xlane.f32.xlu0 %v2661
      %v2693 = vpop.xlane.xlu0 %2692
      %2694 = vadd.xlane.f32.xlu0 %v2663
      %v2695 = vpop.xlane.xlu0 %2694
      %2696 = vadd.xlane.f32.xlu0 %v2665
      %v2697 = vpop.xlane.xlu0 %2696
      %2698 = vadd.xlane.f32.xlu0 %v2667
      %v2699 = vpop.xlane.xlu0 %2698
      %2700 = vadd.xlane.f32.xlu0 %v2669
      %v2701 = vpop.xlane.xlu0 %2700
      %2702 = vadd.xlane.f32.xlu0 %v2671
      %v2703 = vpop.xlane.xlu0 %2702
      %2704 = vadd.xlane.f32.xlu0 %v2673
      %v2705 = vpop.xlane.xlu0 %2704
      %2706 = vadd.xlane.f32.xlu0 %v2675
      %v2707 = vpop.xlane.xlu0 %2706
      %2708 = vadd.xlane.f32.xlu0 %v2677
      %v2709 = vpop.xlane.xlu0 %2708
      %2710 = vadd.xlane.f32.xlu0 %v2679
      %v2711 = vpop.xlane.xlu0 %2710
      %2712 = vadd.xlane.f32.xlu0 %v2681
      %v2713 = vpop.xlane.xlu0 %2712
      %2714 = vadd.xlane.f32.xlu0 %v2683
      %v2715 = vpop.xlane.xlu0 %2714
      %v2716 = vrcp.pop %v2685
      %v2717 = vrcp.pop %v2687
      %v2718 = vrcp.pop %v2689
      %v2719 = vrcp.pop %v2691
      %v2720 = vrcp.pop %v2693
      %v2721 = vrcp.pop %v2695
      %v2722 = vrcp.pop %v2697
      %v2723 = vrcp.pop %v2699
      %v2724 = vrcp.pop %v2701
      %v2725 = vrcp.pop %v2703
      %v2726 = vrcp.pop %v2705
      %v2727 = vrcp.pop %v2707
      %v2728 = vrcp.pop %v2709
      %v2729 = vrcp.pop %v2711
      %v2730 = vrcp.pop %v2713
      %v2731 = vrcp.pop %v2715
      %v2732 = vpack.c.bf16 %v2655, %v2653
      %v2733 = vpack.c.bf16 %v2659, %v2657
      %v2734 = vpack.c.bf16 %v2663, %v2661
      %v2735 = vpack.c.bf16 %v2667, %v2665
      %v2736 = vpack.c.bf16 %v2671, %v2669
      %v2737 = vpack.c.bf16 %v2675, %v2673
      %v2738 = vpack.c.bf16 %v2679, %v2677
      %v2739 = vpack.c.bf16 %v2683, %v2681
      %2740 = vrot.lane.b32.xlu0 %v598, 80
      %v2741 = vpop.permute.xlu0 %2740
      %2742 = vrot.lane.b32.xlu0 %v599, 80
      %v2743 = vpop.permute.xlu0 %2742
      %2744 = vrot.lane.b32.xlu0 %v600, 80
      %v2745 = vpop.permute.xlu0 %2744
      %2746 = vrot.lane.b32.xlu0 %v601, 80
      %v2747 = vpop.permute.xlu0 %2746
      %2748 = vrot.lane.b32.xlu0 %v602, 80
      %v2749 = vpop.permute.xlu0 %2748
      %2750 = vrot.lane.b32.xlu0 %v603, 80
      %v2751 = vpop.permute.xlu0 %2750
      %2752 = vrot.lane.b32.xlu0 %v604, 80
      %v2753 = vpop.permute.xlu0 %2752
      %2754 = vrot.lane.b32.xlu0 %v605, 80
      %v2755 = vpop.permute.xlu0 %2754
      %2764 = vmatprep.subr.bf16.mxu0 0
      %2765 = vmatpush1.bf16.msra.mxu0 %v2741
      %2766 = vmatprep.subr.bf16.mxu0 0
      %2767 = vmatpush1.bf16.msra.mxu0 %v2743
      %2768 = vmatprep.subr.bf16.mxu0 0
      %2769 = vmatpush1.bf16.msra.mxu0 %v2745
      %2770 = vmatprep.subr.bf16.mxu0 0
      %2771 = vmatpush1.bf16.msra.mxu0 %v2747
      %2772 = vmatprep.subr.bf16.mxu0 0
      %2773 = vmatpush1.bf16.msra.mxu0 %v2749
      %2774 = vmatprep.subr.bf16.mxu0 0
      %2775 = vmatpush1.bf16.msra.mxu0 %v2751
      %2776 = vmatprep.subr.bf16.mxu0 0
      %2777 = vmatpush1.bf16.msra.mxu0 %v2753
      %2778 = vmatprep.subr.bf16.mxu0 0
      %2779 = vmatpush1.bf16.msra.mxu0 %v2755
      %2780 = vmatprep.subr.bf16.mxu0 0
      %2781 = vmatpush1.bf16.msra.mxu0 0
      %2782 = vmatprep.subr.bf16.mxu0 0
      %2783 = vmatpush1.bf16.msra.mxu0 0
      %2784 = vmatprep.subr.bf16.mxu0 0
      %2785 = vmatpush1.bf16.msra.mxu0 0
      %2786 = vmatprep.subr.bf16.mxu0 0
      %2787 = vmatpush1.bf16.msra.mxu0 0
      %2788 = vmatprep.subr.bf16.mxu0 0
      %2789 = vmatpush1.bf16.msra.mxu0 0
      %2790 = vmatprep.subr.bf16.mxu0 0
      %2791 = vmatpush1.bf16.msra.mxu0 0
      %2792 = vmatprep.subr.bf16.mxu0 0
      %2793 = vmatpush1.bf16.msra.mxu0 0
      %2794 = vmatprep.subr.bf16.mxu0 0
      %2795 = vmatpush1.bf16.msra.mxu0 0
      %2796 = vmatprep.mubr.bf16.mxu0 0
      %2797 = vmatmul.mubr.bf16.gmra.mrb[0].mxu0 %v2732
      %v2798 = vpop.f32.mrb[0].mxu0
      %v2799 = vadd.f32 0.0, %v2798
      %v2800 = vpop.f32.mrb[0].mxu0
      %v2801 = vpop.f32.mrb[0].mxu0
      %v2802 = vadd.f32 0.0, %v2801
      %v2803 = vpop.f32.mrb[0].mxu0
      %2804 = vmatprep.mubr.bf16.mxu0 0
      %2805 = vmatmul.mubr.bf16.gmra.mrb[0].mxu0 %v2733
      %v2806 = vpop.f32.mrb[0].mxu0
      %v2807 = vadd.f32 0.0, %v2806
      %v2808 = vpop.f32.mrb[0].mxu0
      %v2809 = vpop.f32.mrb[0].mxu0
      %v2810 = vadd.f32 0.0, %v2809
      %v2811 = vpop.f32.mrb[0].mxu0
      %2812 = vmatprep.mubr.bf16.mxu0 0
      %2813 = vmatmul.mubr.bf16.gmra.mrb[0].mxu0 %v2734
      %v2814 = vpop.f32.mrb[0].mxu0
      %v2815 = vadd.f32 0.0, %v2814
      %v2816 = vpop.f32.mrb[0].mxu0
      %v2817 = vpop.f32.mrb[0].mxu0
      %v2818 = vadd.f32 0.0, %v2817
      %v2819 = vpop.f32.mrb[0].mxu0
      %2820 = vmatprep.mubr.bf16.mxu0 0
      %2821 = vmatmul.mubr.bf16.gmra.mrb[0].mxu0 %v2735
      %v2822 = vpop.f32.mrb[0].mxu0
      %v2823 = vadd.f32 0.0, %v2822
      %v2824 = vpop.f32.mrb[0].mxu0
      %v2825 = vpop.f32.mrb[0].mxu0
      %v2826 = vadd.f32 0.0, %v2825
      %v2827 = vpop.f32.mrb[0].mxu0
      %2828 = vmatprep.mubr.bf16.mxu0 0
      %2829 = vmatmul.mubr.bf16.gmra.mrb[0].mxu0 %v2736
      %v2830 = vpop.f32.mrb[0].mxu0
      %v2831 = vadd.f32 0.0, %v2830
      %v2832 = vpop.f32.mrb[0].mxu0
      %v2833 = vpop.f32.mrb[0].mxu0
      %v2834 = vadd.f32 0.0, %v2833
      %v2835 = vpop.f32.mrb[0].mxu0
      %2836 = vmatprep.mubr.bf16.mxu0 0
      %2837 = vmatmul.mubr.bf16.gmra.mrb[0].mxu0 %v2737
      %v2838 = vpop.f32.mrb[0].mxu0
      %v2839 = vadd.f32 0.0, %v2838
      %v2840 = vpop.f32.mrb[0].mxu0
      %v2841 = vpop.f32.mrb[0].mxu0
      %v2842 = vadd.f32 0.0, %v2841
      %v2843 = vpop.f32.mrb[0].mxu0
      %2844 = vmatprep.mubr.bf16.mxu0 0
      %2845 = vmatmul.mubr.bf16.gmra.mrb[0].mxu0 %v2738
      %v2846 = vpop.f32.mrb[0].mxu0
      %v2847 = vadd.f32 0.0, %v2846
      %v2848 = vpop.f32.mrb[0].mxu0
      %v2849 = vpop.f32.mrb[0].mxu0
      %v2850 = vadd.f32 0.0, %v2849
      %v2851 = vpop.f32.mrb[0].mxu0
      %2852 = vmatprep.mubr.bf16.mxu0 0
      %2853 = vmatmul.mubr.bf16.gmra.mrb[0].mxu0 %v2739
      %v2854 = vpop.f32.mrb[0].mxu0
      %v2855 = vadd.f32 0.0, %v2854
      %v2856 = vpop.f32.mrb[0].mxu0
      %v2857 = vpop.f32.mrb[0].mxu0
      %v2858 = vadd.f32 0.0, %v2857
      %v2859 = vpop.f32.mrb[0].mxu0
      %2860 = vdwg.mxu0
      %v2861 = vmul.f32 %v2799, %v2716
      %v2862 = vmul.f32 %v2802, %v2717
      %v2863 = vmul.f32 %v2807, %v2718
      %v2864 = vmul.f32 %v2810, %v2719
      %v2865 = vmul.f32 %v2815, %v2720
      %v2866 = vmul.f32 %v2818, %v2721
      %v2867 = vmul.f32 %v2823, %v2722
      %v2868 = vmul.f32 %v2826, %v2723
      %v2869 = vmul.f32 %v2831, %v2724
      %v2870 = vmul.f32 %v2834, %v2725
      %v2871 = vmul.f32 %v2839, %v2726
      %v2872 = vmul.f32 %v2842, %v2727
      %v2873 = vmul.f32 %v2847, %v2728
      %v2874 = vmul.f32 %v2850, %v2729
      %v2875 = vmul.f32 %v2855, %v2730
      %v2876 = vmul.f32 %v2858, %v2731
      %v2877 = vpack.c.bf16 %v2862, %v2861
      %v2878 = vpack.c.bf16 %v2864, %v2863
      %v2879 = vpack.c.bf16 %v2866, %v2865
      %v2880 = vpack.c.bf16 %v2868, %v2867
      %v2881 = vpack.c.bf16 %v2870, %v2869
      %v2882 = vpack.c.bf16 %v2872, %v2871
      %v2883 = vpack.c.bf16 %v2874, %v2873
      %v2884 = vpack.c.bf16 %v2876, %v2875
      %2885 = vrot.lane.b32.xlu0 %v481, 108
      %v2886 = vpop.permute.xlu0 %2885
      %2887 = vrot.lane.b32.xlu0 %v482, 108
      %v2888 = vpop.permute.xlu0 %2887
      %2889 = vrot.lane.b32.xlu0 %v483, 108
      %v2890 = vpop.permute.xlu0 %2889
      %2891 = vrot.lane.b32.xlu0 %v484, 108
      %v2892 = vpop.permute.xlu0 %2891
      %2893 = vrot.lane.b32.xlu0 %v485, 108
      %v2894 = vpop.permute.xlu0 %2893
      %2895 = vrot.lane.b32.xlu0 %v486, 108
      %v2896 = vpop.permute.xlu0 %2895
      %2897 = vrot.lane.b32.xlu0 %v487, 108
      %v2898 = vpop.permute.xlu0 %2897
      %2899 = vrot.lane.b32.xlu0 %v488, 108
      %v2900 = vpop.permute.xlu0 %2899
      %2901 = vrot.lane.b32.xlu0 %v598, 108
      %v2902 = vpop.permute.xlu0 %2901
      %2903 = vrot.lane.b32.xlu0 %v599, 108
      %v2904 = vpop.permute.xlu0 %2903
      %2905 = vrot.lane.b32.xlu0 %v600, 108
      %v2906 = vpop.permute.xlu0 %2905
      %2907 = vrot.lane.b32.xlu0 %v601, 108
      %v2908 = vpop.permute.xlu0 %2907
      %2909 = vrot.lane.b32.xlu0 %v602, 108
      %v2910 = vpop.permute.xlu0 %2909
      %2911 = vrot.lane.b32.xlu0 %v603, 108
      %v2912 = vpop.permute.xlu0 %2911
      %2913 = vrot.lane.b32.xlu0 %v604, 108
      %v2914 = vpop.permute.xlu0 %2913
      %2915 = vrot.lane.b32.xlu0 %v605, 108
      %v2916 = vpop.permute.xlu0 %2915
      %v2918 = vsel %vm610, %v2886, 0
      %v2921 = vsel %vm610, %v2888, 0
      %v2924 = vsel %vm610, %v2890, 0
      %v2927 = vsel %vm610, %v2892, 0
      %v2930 = vsel %vm610, %v2894, 0
      %v2933 = vsel %vm610, %v2896, 0
      %v2936 = vsel %vm610, %v2898, 0
      %v2939 = vsel %vm610, %v2900, 0
      %v2942 = vsel %vm610, %v2902, 0
      %v2945 = vsel %vm610, %v2904, 0
      %v2948 = vsel %vm610, %v2906, 0
      %v2951 = vsel %vm610, %v2908, 0
      %v2954 = vsel %vm610, %v2910, 0
      %v2957 = vsel %vm610, %v2912, 0
      %v2960 = vsel %vm610, %v2914, 0
      %v2963 = vsel %vm610, %v2916, 0
      %2965 = vmatprep.subr.bf16.mxu0 0
      %2966 = vmatpush1.bf16.xpose.msra.mxu0 %v2942
      %2967 = vmatprep.subr.bf16.mxu0 0
      %2968 = vmatpush1.bf16.xpose.msra.mxu0 %v2945
      %2969 = vmatprep.subr.bf16.mxu0 0
      %2970 = vmatpush1.bf16.xpose.msra.mxu0 %v2948
      %2971 = vmatprep.subr.bf16.mxu0 0
      %2972 = vmatpush1.bf16.xpose.msra.mxu0 %v2951
      %2973 = vmatprep.subr.bf16.mxu0 0
      %2974 = vmatpush1.bf16.xpose.msra.mxu0 %v2954
      %2975 = vmatprep.subr.bf16.mxu0 0
      %2976 = vmatpush1.bf16.xpose.msra.mxu0 %v2957
      %2977 = vmatprep.subr.bf16.mxu0 0
      %2978 = vmatpush1.bf16.xpose.msra.mxu0 %v2960
      %2979 = vmatprep.subr.bf16.mxu0 0
      %2980 = vmatpush1.bf16.xpose.msra.mxu0 %v2963
      %2981 = vmatprep.subr.bf16.mxu0 0
      %2982 = vmatpush1.bf16.xpose.msra.mxu0 0
      %2983 = vmatprep.subr.bf16.mxu0 0
      %2984 = vmatpush1.bf16.xpose.msra.mxu0 0
      %2985 = vmatprep.subr.bf16.mxu0 0
      %2986 = vmatpush1.bf16.xpose.msra.mxu0 0
      %2987 = vmatprep.subr.bf16.mxu0 0
      %2988 = vmatpush1.bf16.xpose.msra.mxu0 0
      %2989 = vmatprep.subr.bf16.mxu0 0
      %2990 = vmatpush1.bf16.xpose.msra.mxu0 0
      %2991 = vmatprep.subr.bf16.mxu0 0
      %2992 = vmatpush1.bf16.xpose.msra.mxu0 0
      %2993 = vmatprep.subr.bf16.mxu0 0
      %2994 = vmatpush1.bf16.xpose.msra.mxu0 0
      %2995 = vmatprep.subr.bf16.mxu0 0
      %2996 = vmatpush1.bf16.xpose.msra.mxu0 0
      %2997 = vmatprep.mubr.bf16.mxu0 0
      %2998 = vmatmul.mubr.bf16.gmra.mrb[0].mxu0 %v2918
      %v2999 = vpop.f32.mrb[0].mxu0
      %v3000 = vadd.f32 %v609, %v2999
      %v3001 = vpop.f32.mrb[0].mxu0
      %v3002 = vpop.f32.mrb[0].mxu0
      %v3003 = vadd.f32 %v609, %v3002
      %v3004 = vpop.f32.mrb[0].mxu0
      %3005 = vmatprep.mubr.bf16.mxu0 0
      %3006 = vmatmul.mubr.bf16.gmra.mrb[0].mxu0 %v2921
      %v3007 = vpop.f32.mrb[0].mxu0
      %v3008 = vadd.f32 %v609, %v3007
      %v3009 = vpop.f32.mrb[0].mxu0
      %v3010 = vpop.f32.mrb[0].mxu0
      %v3011 = vadd.f32 %v609, %v3010
      %v3012 = vpop.f32.mrb[0].mxu0
      %3013 = vmatprep.mubr.bf16.mxu0 0
      %3014 = vmatmul.mubr.bf16.gmra.mrb[0].mxu0 %v2924
      %v3015 = vpop.f32.mrb[0].mxu0
      %v3016 = vadd.f32 %v609, %v3015
      %v3017 = vpop.f32.mrb[0].mxu0
      %v3018 = vpop.f32.mrb[0].mxu0
      %v3019 = vadd.f32 %v609, %v3018
      %v3020 = vpop.f32.mrb[0].mxu0
      %3021 = vmatprep.mubr.bf16.mxu0 0
      %3022 = vmatmul.mubr.bf16.gmra.mrb[0].mxu0 %v2927
      %v3023 = vpop.f32.mrb[0].mxu0
      %v3024 = vadd.f32 %v609, %v3023
      %v3025 = vpop.f32.mrb[0].mxu0
      %v3026 = vpop.f32.mrb[0].mxu0
      %v3027 = vadd.f32 %v609, %v3026
      %v3028 = vpop.f32.mrb[0].mxu0
      %3029 = vmatprep.mubr.bf16.mxu0 0
      %3030 = vmatmul.mubr.bf16.gmra.mrb[0].mxu0 %v2930
      %v3031 = vpop.f32.mrb[0].mxu0
      %v3032 = vadd.f32 %v609, %v3031
      %v3033 = vpop.f32.mrb[0].mxu0
      %v3034 = vpop.f32.mrb[0].mxu0
      %v3035 = vadd.f32 %v609, %v3034
      %v3036 = vpop.f32.mrb[0].mxu0
      %3037 = vmatprep.mubr.bf16.mxu0 0
      %3038 = vmatmul.mubr.bf16.gmra.mrb[0].mxu0 %v2933
      %v3039 = vpop.f32.mrb[0].mxu0
      %v3040 = vadd.f32 %v609, %v3039
      %v3041 = vpop.f32.mrb[0].mxu0
      %v3042 = vpop.f32.mrb[0].mxu0
      %v3043 = vadd.f32 %v609, %v3042
      %v3044 = vpop.f32.mrb[0].mxu0
      %3045 = vmatprep.mubr.bf16.mxu0 0
      %3046 = vmatmul.mubr.bf16.gmra.mrb[0].mxu0 %v2936
      %v3047 = vpop.f32.mrb[0].mxu0
      %v3048 = vadd.f32 %v609, %v3047
      %v3049 = vpop.f32.mrb[0].mxu0
      %v3050 = vpop.f32.mrb[0].mxu0
      %v3051 = vadd.f32 %v609, %v3050
      %v3052 = vpop.f32.mrb[0].mxu0
      %3053 = vmatprep.mubr.bf16.mxu0 0
      %3054 = vmatmul.mubr.bf16.gmra.mrb[0].mxu0 %v2939
      %v3055 = vpop.f32.mrb[0].mxu0
      %v3056 = vadd.f32 %v609, %v3055
      %v3057 = vpop.f32.mrb[0].mxu0
      %v3058 = vpop.f32.mrb[0].mxu0
      %v3059 = vadd.f32 %v609, %v3058
      %v3060 = vpop.f32.mrb[0].mxu0
      %3061 = vdwg.mxu0
      %3062 = vmax.xlane.f32.xlu0 %v3000
      %v3063 = vpop.xlane.xlu0 %3062
      %3064 = vmax.xlane.f32.xlu0 %v3003
      %v3065 = vpop.xlane.xlu0 %3064
      %3066 = vmax.xlane.f32.xlu0 %v3008
      %v3067 = vpop.xlane.xlu0 %3066
      %3068 = vmax.xlane.f32.xlu0 %v3011
      %v3069 = vpop.xlane.xlu0 %3068
      %3070 = vmax.xlane.f32.xlu0 %v3016
      %v3071 = vpop.xlane.xlu0 %3070
      %3072 = vmax.xlane.f32.xlu0 %v3019
      %v3073 = vpop.xlane.xlu0 %3072
      %3074 = vmax.xlane.f32.xlu0 %v3024
      %v3075 = vpop.xlane.xlu0 %3074
      %3076 = vmax.xlane.f32.xlu0 %v3027
      %v3077 = vpop.xlane.xlu0 %3076
      %3078 = vmax.xlane.f32.xlu0 %v3032
      %v3079 = vpop.xlane.xlu0 %3078
      %3080 = vmax.xlane.f32.xlu0 %v3035
      %v3081 = vpop.xlane.xlu0 %3080
      %3082 = vmax.xlane.f32.xlu0 %v3040
      %v3083 = vpop.xlane.xlu0 %3082
      %3084 = vmax.xlane.f32.xlu0 %v3043
      %v3085 = vpop.xlane.xlu0 %3084
      %3086 = vmax.xlane.f32.xlu0 %v3048
      %v3087 = vpop.xlane.xlu0 %3086
      %3088 = vmax.xlane.f32.xlu0 %v3051
      %v3089 = vpop.xlane.xlu0 %3088
      %3090 = vmax.xlane.f32.xlu0 %v3056
      %v3091 = vpop.xlane.xlu0 %3090
      %3092 = vmax.xlane.f32.xlu0 %v3059
      %v3093 = vpop.xlane.xlu0 %3092
      %v3094 = vsub.f32 %v3000, %v3063
      %v3095 = vsub.f32 %v3003, %v3065
      %v3096 = vsub.f32 %v3008, %v3067
      %v3097 = vsub.f32 %v3011, %v3069
      %v3098 = vsub.f32 %v3016, %v3071
      %v3099 = vsub.f32 %v3019, %v3073
      %v3100 = vsub.f32 %v3024, %v3075
      %v3101 = vsub.f32 %v3027, %v3077
      %v3102 = vsub.f32 %v3032, %v3079
      %v3103 = vsub.f32 %v3035, %v3081
      %v3104 = vsub.f32 %v3040, %v3083
      %v3105 = vsub.f32 %v3043, %v3085
      %v3106 = vsub.f32 %v3048, %v3087
      %v3107 = vsub.f32 %v3051, %v3089
      %v3108 = vsub.f32 %v3056, %v3091
      %v3109 = vsub.f32 %v3059, %v3093
      %v3110 = vmul.f32 %v3094, 1.442695
      %v3111 = vpow.pop %v3110
      %v3112 = vmul.f32 %v3095, 1.442695
      %v3113 = vpow.pop %v3112
      %v3114 = vmul.f32 %v3096, 1.442695
      %v3115 = vpow.pop %v3114
      %v3116 = vmul.f32 %v3097, 1.442695
      %v3117 = vpow.pop %v3116
      %v3118 = vmul.f32 %v3098, 1.442695
      %v3119 = vpow.pop %v3118
      %v3120 = vmul.f32 %v3099, 1.442695
      %v3121 = vpow.pop %v3120
      %v3122 = vmul.f32 %v3100, 1.442695
      %v3123 = vpow.pop %v3122
      %v3124 = vmul.f32 %v3101, 1.442695
      %v3125 = vpow.pop %v3124
      %v3126 = vmul.f32 %v3102, 1.442695
      %v3127 = vpow.pop %v3126
      %v3128 = vmul.f32 %v3103, 1.442695
      %v3129 = vpow.pop %v3128
      %v3130 = vmul.f32 %v3104, 1.442695
      %v3131 = vpow.pop %v3130
      %v3132 = vmul.f32 %v3105, 1.442695
      %v3133 = vpow.pop %v3132
      %v3134 = vmul.f32 %v3106, 1.442695
      %v3135 = vpow.pop %v3134
      %v3136 = vmul.f32 %v3107, 1.442695
      %v3137 = vpow.pop %v3136
      %v3138 = vmul.f32 %v3108, 1.442695
      %v3139 = vpow.pop %v3138
      %v3140 = vmul.f32 %v3109, 1.442695
      %v3141 = vpow.pop %v3140
      %3142 = vadd.xlane.f32.xlu0 %v3111
      %v3143 = vpop.xlane.xlu0 %3142
      %3144 = vadd.xlane.f32.xlu0 %v3113
      %v3145 = vpop.xlane.xlu0 %3144
      %3146 = vadd.xlane.f32.xlu0 %v3115
      %v3147 = vpop.xlane.xlu0 %3146
      %3148 = vadd.xlane.f32.xlu0 %v3117
      %v3149 = vpop.xlane.xlu0 %3148
      %3150 = vadd.xlane.f32.xlu0 %v3119
      %v3151 = vpop.xlane.xlu0 %3150
      %3152 = vadd.xlane.f32.xlu0 %v3121
      %v3153 = vpop.xlane.xlu0 %3152
      %3154 = vadd.xlane.f32.xlu0 %v3123
      %v3155 = vpop.xlane.xlu0 %3154
      %3156 = vadd.xlane.f32.xlu0 %v3125
      %v3157 = vpop.xlane.xlu0 %3156
      %3158 = vadd.xlane.f32.xlu0 %v3127
      %v3159 = vpop.xlane.xlu0 %3158
      %3160 = vadd.xlane.f32.xlu0 %v3129
      %v3161 = vpop.xlane.xlu0 %3160
      %3162 = vadd.xlane.f32.xlu0 %v3131
      %v3163 = vpop.xlane.xlu0 %3162
      %3164 = vadd.xlane.f32.xlu0 %v3133
      %v3165 = vpop.xlane.xlu0 %3164
      %3166 = vadd.xlane.f32.xlu0 %v3135
      %v3167 = vpop.xlane.xlu0 %3166
      %3168 = vadd.xlane.f32.xlu0 %v3137
      %v3169 = vpop.xlane.xlu0 %3168
      %3170 = vadd.xlane.f32.xlu0 %v3139
      %v3171 = vpop.xlane.xlu0 %3170
      %3172 = vadd.xlane.f32.xlu0 %v3141
      %v3173 = vpop.xlane.xlu0 %3172
      %v3174 = vrcp.pop %v3143
      %v3175 = vrcp.pop %v3145
      %v3176 = vrcp.pop %v3147
      %v3177 = vrcp.pop %v3149
      %v3178 = vrcp.pop %v3151
      %v3179 = vrcp.pop %v3153
      %v3180 = vrcp.pop %v3155
      %v3181 = vrcp.pop %v3157
      %v3182 = vrcp.pop %v3159
      %v3183 = vrcp.pop %v3161
      %v3184 = vrcp.pop %v3163
      %v3185 = vrcp.pop %v3165
      %v3186 = vrcp.pop %v3167
      %v3187 = vrcp.pop %v3169
      %v3188 = vrcp.pop %v3171
      %v3189 = vrcp.pop %v3173
      %v3190 = vpack.c.bf16 %v3113, %v3111
      %v3191 = vpack.c.bf16 %v3117, %v3115
      %v3192 = vpack.c.bf16 %v3121, %v3119
      %v3193 = vpack.c.bf16 %v3125, %v3123
      %v3194 = vpack.c.bf16 %v3129, %v3127
      %v3195 = vpack.c.bf16 %v3133, %v3131
      %v3196 = vpack.c.bf16 %v3137, %v3135
      %v3197 = vpack.c.bf16 %v3141, %v3139
      %3198 = vrot.lane.b32.xlu0 %v598, 76
      %v3199 = vpop.permute.xlu0 %3198
      %3200 = vrot.lane.b32.xlu0 %v599, 76
      %v3201 = vpop.permute.xlu0 %3200
      %3202 = vrot.lane.b32.xlu0 %v600, 76
      %v3203 = vpop.permute.xlu0 %3202
      %3204 = vrot.lane.b32.xlu0 %v601, 76
      %v3205 = vpop.permute.xlu0 %3204
      %3206 = vrot.lane.b32.xlu0 %v602, 76
      %v3207 = vpop.permute.xlu0 %3206
      %3208 = vrot.lane.b32.xlu0 %v603, 76
      %v3209 = vpop.permute.xlu0 %3208
      %3210 = vrot.lane.b32.xlu0 %v604, 76
      %v3211 = vpop.permute.xlu0 %3210
      %3212 = vrot.lane.b32.xlu0 %v605, 76
      %v3213 = vpop.permute.xlu0 %3212
      %3222 = vmatprep.subr.bf16.mxu0 0
      %3223 = vmatpush1.bf16.msra.mxu0 %v3199
      %3224 = vmatprep.subr.bf16.mxu0 0
      %3225 = vmatpush1.bf16.msra.mxu0 %v3201
      %3226 = vmatprep.subr.bf16.mxu0 0
      %3227 = vmatpush1.bf16.msra.mxu0 %v3203
      %3228 = vmatprep.subr.bf16.mxu0 0
      %3229 = vmatpush1.bf16.msra.mxu0 %v3205
      %3230 = vmatprep.subr.bf16.mxu0 0
      %3231 = vmatpush1.bf16.msra.mxu0 %v3207
      %3232 = vmatprep.subr.bf16.mxu0 0
      %3233 = vmatpush1.bf16.msra.mxu0 %v3209
      %3234 = vmatprep.subr.bf16.mxu0 0
      %3235 = vmatpush1.bf16.msra.mxu0 %v3211
      %3236 = vmatprep.subr.bf16.mxu0 0
      %3237 = vmatpush1.bf16.msra.mxu0 %v3213
      %3238 = vmatprep.subr.bf16.mxu0 0
      %3239 = vmatpush1.bf16.msra.mxu0 0
      %3240 = vmatprep.subr.bf16.mxu0 0
      %3241 = vmatpush1.bf16.msra.mxu0 0
      %3242 = vmatprep.subr.bf16.mxu0 0
      %3243 = vmatpush1.bf16.msra.mxu0 0
      %3244 = vmatprep.subr.bf16.mxu0 0
      %3245 = vmatpush1.bf16.msra.mxu0 0
      %3246 = vmatprep.subr.bf16.mxu0 0
      %3247 = vmatpush1.bf16.msra.mxu0 0
      %3248 = vmatprep.subr.bf16.mxu0 0
      %3249 = vmatpush1.bf16.msra.mxu0 0
      %3250 = vmatprep.subr.bf16.mxu0 0
      %3251 = vmatpush1.bf16.msra.mxu0 0
      %3252 = vmatprep.subr.bf16.mxu0 0
      %3253 = vmatpush1.bf16.msra.mxu0 0
      %3254 = vmatprep.mubr.bf16.mxu0 0
      %3255 = vmatmul.mubr.bf16.gmra.mrb[0].mxu0 %v3190
      %v3256 = vpop.f32.mrb[0].mxu0
      %v3257 = vadd.f32 0.0, %v3256
      %v3258 = vpop.f32.mrb[0].mxu0
      %v3259 = vpop.f32.mrb[0].mxu0
      %v3260 = vadd.f32 0.0, %v3259
      %v3261 = vpop.f32.mrb[0].mxu0
      %3262 = vmatprep.mubr.bf16.mxu0 0
      %3263 = vmatmul.mubr.bf16.gmra.mrb[0].mxu0 %v3191
      %v3264 = vpop.f32.mrb[0].mxu0
      %v3265 = vadd.f32 0.0, %v3264
      %v3266 = vpop.f32.mrb[0].mxu0
      %v3267 = vpop.f32.mrb[0].mxu0
      %v3268 = vadd.f32 0.0, %v3267
      %v3269 = vpop.f32.mrb[0].mxu0
      %3270 = vmatprep.mubr.bf16.mxu0 0
      %3271 = vmatmul.mubr.bf16.gmra.mrb[0].mxu0 %v3192
      %v3272 = vpop.f32.mrb[0].mxu0
      %v3273 = vadd.f32 0.0, %v3272
      %v3274 = vpop.f32.mrb[0].mxu0
      %v3275 = vpop.f32.mrb[0].mxu0
      %v3276 = vadd.f32 0.0, %v3275
      %v3277 = vpop.f32.mrb[0].mxu0
      %3278 = vmatprep.mubr.bf16.mxu0 0
      %3279 = vmatmul.mubr.bf16.gmra.mrb[0].mxu0 %v3193
      %v3280 = vpop.f32.mrb[0].mxu0
      %v3281 = vadd.f32 0.0, %v3280
      %v3282 = vpop.f32.mrb[0].mxu0
      %v3283 = vpop.f32.mrb[0].mxu0
      %v3284 = vadd.f32 0.0, %v3283
      %v3285 = vpop.f32.mrb[0].mxu0
      %3286 = vmatprep.mubr.bf16.mxu0 0
      %3287 = vmatmul.mubr.bf16.gmra.mrb[0].mxu0 %v3194
      %v3288 = vpop.f32.mrb[0].mxu0
      %v3289 = vadd.f32 0.0, %v3288
      %v3290 = vpop.f32.mrb[0].mxu0
      %v3291 = vpop.f32.mrb[0].mxu0
      %v3292 = vadd.f32 0.0, %v3291
      %v3293 = vpop.f32.mrb[0].mxu0
      %3294 = vmatprep.mubr.bf16.mxu0 0
      %3295 = vmatmul.mubr.bf16.gmra.mrb[0].mxu0 %v3195
      %v3296 = vpop.f32.mrb[0].mxu0
      %v3297 = vadd.f32 0.0, %v3296
      %v3298 = vpop.f32.mrb[0].mxu0
      %v3299 = vpop.f32.mrb[0].mxu0
      %v3300 = vadd.f32 0.0, %v3299
      %v3301 = vpop.f32.mrb[0].mxu0
      %3302 = vmatprep.mubr.bf16.mxu0 0
      %3303 = vmatmul.mubr.bf16.gmra.mrb[0].mxu0 %v3196
      %v3304 = vpop.f32.mrb[0].mxu0
      %v3305 = vadd.f32 0.0, %v3304
      %v3306 = vpop.f32.mrb[0].mxu0
      %v3307 = vpop.f32.mrb[0].mxu0
      %v3308 = vadd.f32 0.0, %v3307
      %v3309 = vpop.f32.mrb[0].mxu0
      %3310 = vmatprep.mubr.bf16.mxu0 0
      %3311 = vmatmul.mubr.bf16.gmra.mrb[0].mxu0 %v3197
      %v3312 = vpop.f32.mrb[0].mxu0
      %v3313 = vadd.f32 0.0, %v3312
      %v3314 = vpop.f32.mrb[0].mxu0
      %v3315 = vpop.f32.mrb[0].mxu0
      %v3316 = vadd.f32 0.0, %v3315
      %v3317 = vpop.f32.mrb[0].mxu0
      %3318 = vdwg.mxu0
      %v3319 = vmul.f32 %v3257, %v3174
      %v3320 = vmul.f32 %v3260, %v3175
      %v3321 = vmul.f32 %v3265, %v3176
      %v3322 = vmul.f32 %v3268, %v3177
      %v3323 = vmul.f32 %v3273, %v3178
      %v3324 = vmul.f32 %v3276, %v3179
      %v3325 = vmul.f32 %v3281, %v3180
      %v3326 = vmul.f32 %v3284, %v3181
      %v3327 = vmul.f32 %v3289, %v3182
      %v3328 = vmul.f32 %v3292, %v3183
      %v3329 = vmul.f32 %v3297, %v3184
      %v3330 = vmul.f32 %v3300, %v3185
      %v3331 = vmul.f32 %v3305, %v3186
      %v3332 = vmul.f32 %v3308, %v3187
      %v3333 = vmul.f32 %v3313, %v3188
      %v3334 = vmul.f32 %v3316, %v3189
      %v3335 = vpack.c.bf16 %v3320, %v3319
      %v3336 = vpack.c.bf16 %v3322, %v3321
      %v3337 = vpack.c.bf16 %v3324, %v3323
      %v3338 = vpack.c.bf16 %v3326, %v3325
      %v3339 = vpack.c.bf16 %v3328, %v3327
      %v3340 = vpack.c.bf16 %v3330, %v3329
      %v3341 = vpack.c.bf16 %v3332, %v3331
      %v3342 = vpack.c.bf16 %v3334, %v3333
      %3343 = vrot.lane.b32.xlu0 %v481, 104
      %v3344 = vpop.permute.xlu0 %3343
      %3345 = vrot.lane.b32.xlu0 %v482, 104
      %v3346 = vpop.permute.xlu0 %3345
      %3347 = vrot.lane.b32.xlu0 %v483, 104
      %v3348 = vpop.permute.xlu0 %3347
      %3349 = vrot.lane.b32.xlu0 %v484, 104
      %v3350 = vpop.permute.xlu0 %3349
      %3351 = vrot.lane.b32.xlu0 %v485, 104
      %v3352 = vpop.permute.xlu0 %3351
      %3353 = vrot.lane.b32.xlu0 %v486, 104
      %v3354 = vpop.permute.xlu0 %3353
      %3355 = vrot.lane.b32.xlu0 %v487, 104
      %v3356 = vpop.permute.xlu0 %3355
      %3357 = vrot.lane.b32.xlu0 %v488, 104
      %v3358 = vpop.permute.xlu0 %3357
      %3359 = vrot.lane.b32.xlu0 %v598, 104
      %v3360 = vpop.permute.xlu0 %3359
      %3361 = vrot.lane.b32.xlu0 %v599, 104
      %v3362 = vpop.permute.xlu0 %3361
      %3363 = vrot.lane.b32.xlu0 %v600, 104
      %v3364 = vpop.permute.xlu0 %3363
      %3365 = vrot.lane.b32.xlu0 %v601, 104
      %v3366 = vpop.permute.xlu0 %3365
      %3367 = vrot.lane.b32.xlu0 %v602, 104
      %v3368 = vpop.permute.xlu0 %3367
      %3369 = vrot.lane.b32.xlu0 %v603, 104
      %v3370 = vpop.permute.xlu0 %3369
      %3371 = vrot.lane.b32.xlu0 %v604, 104
      %v3372 = vpop.permute.xlu0 %3371
      %3373 = vrot.lane.b32.xlu0 %v605, 104
      %v3374 = vpop.permute.xlu0 %3373
      %v3376 = vsel %vm610, %v3344, 0
      %v3379 = vsel %vm610, %v3346, 0
      %v3382 = vsel %vm610, %v3348, 0
      %v3385 = vsel %vm610, %v3350, 0
      %v3388 = vsel %vm610, %v3352, 0
      %v3391 = vsel %vm610, %v3354, 0
      %v3394 = vsel %vm610, %v3356, 0
      %v3397 = vsel %vm610, %v3358, 0
      %v3400 = vsel %vm610, %v3360, 0
      %v3403 = vsel %vm610, %v3362, 0
      %v3406 = vsel %vm610, %v3364, 0
      %v3409 = vsel %vm610, %v3366, 0
      %v3412 = vsel %vm610, %v3368, 0
      %v3415 = vsel %vm610, %v3370, 0
      %v3418 = vsel %vm610, %v3372, 0
      %v3421 = vsel %vm610, %v3374, 0
      %3423 = vmatprep.subr.bf16.mxu0 0
      %3424 = vmatpush1.bf16.xpose.msra.mxu0 %v3400
      %3425 = vmatprep.subr.bf16.mxu0 0
      %3426 = vmatpush1.bf16.xpose.msra.mxu0 %v3403
      %3427 = vmatprep.subr.bf16.mxu0 0
      %3428 = vmatpush1.bf16.xpose.msra.mxu0 %v3406
      %3429 = vmatprep.subr.bf16.mxu0 0
      %3430 = vmatpush1.bf16.xpose.msra.mxu0 %v3409
      %3431 = vmatprep.subr.bf16.mxu0 0
      %3432 = vmatpush1.bf16.xpose.msra.mxu0 %v3412
      %3433 = vmatprep.subr.bf16.mxu0 0
      %3434 = vmatpush1.bf16.xpose.msra.mxu0 %v3415
      %3435 = vmatprep.subr.bf16.mxu0 0
      %3436 = vmatpush1.bf16.xpose.msra.mxu0 %v3418
      %3437 = vmatprep.subr.bf16.mxu0 0
      %3438 = vmatpush1.bf16.xpose.msra.mxu0 %v3421
      %3439 = vmatprep.subr.bf16.mxu0 0
      %3440 = vmatpush1.bf16.xpose.msra.mxu0 0
      %3441 = vmatprep.subr.bf16.mxu0 0
      %3442 = vmatpush1.bf16.xpose.msra.mxu0 0
      %3443 = vmatprep.subr.bf16.mxu0 0
      %3444 = vmatpush1.bf16.xpose.msra.mxu0 0
      %3445 = vmatprep.subr.bf16.mxu0 0
      %3446 = vmatpush1.bf16.xpose.msra.mxu0 0
      %3447 = vmatprep.subr.bf16.mxu0 0
      %3448 = vmatpush1.bf16.xpose.msra.mxu0 0
      %3449 = vmatprep.subr.bf16.mxu0 0
      %3450 = vmatpush1.bf16.xpose.msra.mxu0 0
      %3451 = vmatprep.subr.bf16.mxu0 0
      %3452 = vmatpush1.bf16.xpose.msra.mxu0 0
      %3453 = vmatprep.subr.bf16.mxu0 0
      %3454 = vmatpush1.bf16.xpose.msra.mxu0 0
      %3455 = vmatprep.mubr.bf16.mxu0 0
      %3456 = vmatmul.mubr.bf16.gmra.mrb[0].mxu0 %v3376
      %v3457 = vpop.f32.mrb[0].mxu0
      %v3458 = vadd.f32 %v609, %v3457
      %v3459 = vpop.f32.mrb[0].mxu0
      %v3460 = vpop.f32.mrb[0].mxu0
      %v3461 = vadd.f32 %v609, %v3460
      %v3462 = vpop.f32.mrb[0].mxu0
      %3463 = vmatprep.mubr.bf16.mxu0 0
      %3464 = vmatmul.mubr.bf16.gmra.mrb[0].mxu0 %v3379
      %v3465 = vpop.f32.mrb[0].mxu0
      %v3466 = vadd.f32 %v609, %v3465
      %v3467 = vpop.f32.mrb[0].mxu0
      %v3468 = vpop.f32.mrb[0].mxu0
      %v3469 = vadd.f32 %v609, %v3468
      %v3470 = vpop.f32.mrb[0].mxu0
      %3471 = vmatprep.mubr.bf16.mxu0 0
      %3472 = vmatmul.mubr.bf16.gmra.mrb[0].mxu0 %v3382
      %v3473 = vpop.f32.mrb[0].mxu0
      %v3474 = vadd.f32 %v609, %v3473
      %v3475 = vpop.f32.mrb[0].mxu0
      %v3476 = vpop.f32.mrb[0].mxu0
      %v3477 = vadd.f32 %v609, %v3476
      %v3478 = vpop.f32.mrb[0].mxu0
      %3479 = vmatprep.mubr.bf16.mxu0 0
      %3480 = vmatmul.mubr.bf16.gmra.mrb[0].mxu0 %v3385
      %v3481 = vpop.f32.mrb[0].mxu0
      %v3482 = vadd.f32 %v609, %v3481
      %v3483 = vpop.f32.mrb[0].mxu0
      %v3484 = vpop.f32.mrb[0].mxu0
      %v3485 = vadd.f32 %v609, %v3484
      %v3486 = vpop.f32.mrb[0].mxu0
      %3487 = vmatprep.mubr.bf16.mxu0 0
      %3488 = vmatmul.mubr.bf16.gmra.mrb[0].mxu0 %v3388
      %v3489 = vpop.f32.mrb[0].mxu0
      %v3490 = vadd.f32 %v609, %v3489
      %v3491 = vpop.f32.mrb[0].mxu0
      %v3492 = vpop.f32.mrb[0].mxu0
      %v3493 = vadd.f32 %v609, %v3492
      %v3494 = vpop.f32.mrb[0].mxu0
      %3495 = vmatprep.mubr.bf16.mxu0 0
      %3496 = vmatmul.mubr.bf16.gmra.mrb[0].mxu0 %v3391
      %v3497 = vpop.f32.mrb[0].mxu0
      %v3498 = vadd.f32 %v609, %v3497
      %v3499 = vpop.f32.mrb[0].mxu0
      %v3500 = vpop.f32.mrb[0].mxu0
      %v3501 = vadd.f32 %v609, %v3500
      %v3502 = vpop.f32.mrb[0].mxu0
      %3503 = vmatprep.mubr.bf16.mxu0 0
      %3504 = vmatmul.mubr.bf16.gmra.mrb[0].mxu0 %v3394
      %v3505 = vpop.f32.mrb[0].mxu0
      %v3506 = vadd.f32 %v609, %v3505
      %v3507 = vpop.f32.mrb[0].mxu0
      %v3508 = vpop.f32.mrb[0].mxu0
      %v3509 = vadd.f32 %v609, %v3508
      %v3510 = vpop.f32.mrb[0].mxu0
      %3511 = vmatprep.mubr.bf16.mxu0 0
      %3512 = vmatmul.mubr.bf16.gmra.mrb[0].mxu0 %v3397
      %v3513 = vpop.f32.mrb[0].mxu0
      %v3514 = vadd.f32 %v609, %v3513
      %v3515 = vpop.f32.mrb[0].mxu0
      %v3516 = vpop.f32.mrb[0].mxu0
      %v3517 = vadd.f32 %v609, %v3516
      %v3518 = vpop.f32.mrb[0].mxu0
      %3519 = vdwg.mxu0
      %3520 = vmax.xlane.f32.xlu0 %v3458
      %v3521 = vpop.xlane.xlu0 %3520
      %3522 = vmax.xlane.f32.xlu0 %v3461
      %v3523 = vpop.xlane.xlu0 %3522
      %3524 = vmax.xlane.f32.xlu0 %v3466
      %v3525 = vpop.xlane.xlu0 %3524
      %3526 = vmax.xlane.f32.xlu0 %v3469
      %v3527 = vpop.xlane.xlu0 %3526
      %3528 = vmax.xlane.f32.xlu0 %v3474
      %v3529 = vpop.xlane.xlu0 %3528
      %3530 = vmax.xlane.f32.xlu0 %v3477
      %v3531 = vpop.xlane.xlu0 %3530
      %3532 = vmax.xlane.f32.xlu0 %v3482
      %v3533 = vpop.xlane.xlu0 %3532
      %3534 = vmax.xlane.f32.xlu0 %v3485
      %v3535 = vpop.xlane.xlu0 %3534
      %3536 = vmax.xlane.f32.xlu0 %v3490
      %v3537 = vpop.xlane.xlu0 %3536
      %3538 = vmax.xlane.f32.xlu0 %v3493
      %v3539 = vpop.xlane.xlu0 %3538
      %3540 = vmax.xlane.f32.xlu0 %v3498
      %v3541 = vpop.xlane.xlu0 %3540
      %3542 = vmax.xlane.f32.xlu0 %v3501
      %v3543 = vpop.xlane.xlu0 %3542
      %3544 = vmax.xlane.f32.xlu0 %v3506
      %v3545 = vpop.xlane.xlu0 %3544
      %3546 = vmax.xlane.f32.xlu0 %v3509
      %v3547 = vpop.xlane.xlu0 %3546
      %3548 = vmax.xlane.f32.xlu0 %v3514
      %v3549 = vpop.xlane.xlu0 %3548
      %3550 = vmax.xlane.f32.xlu0 %v3517
      %v3551 = vpop.xlane.xlu0 %3550
      %v3552 = vsub.f32 %v3458, %v3521
      %v3553 = vsub.f32 %v3461, %v3523
      %v3554 = vsub.f32 %v3466, %v3525
      %v3555 = vsub.f32 %v3469, %v3527
      %v3556 = vsub.f32 %v3474, %v3529
      %v3557 = vsub.f32 %v3477, %v3531
      %v3558 = vsub.f32 %v3482, %v3533
      %v3559 = vsub.f32 %v3485, %v3535
      %v3560 = vsub.f32 %v3490, %v3537
      %v3561 = vsub.f32 %v3493, %v3539
      %v3562 = vsub.f32 %v3498, %v3541
      %v3563 = vsub.f32 %v3501, %v3543
      %v3564 = vsub.f32 %v3506, %v3545
      %v3565 = vsub.f32 %v3509, %v3547
      %v3566 = vsub.f32 %v3514, %v3549
      %v3567 = vsub.f32 %v3517, %v3551
      %v3568 = vmul.f32 %v3552, 1.442695
      %v3569 = vpow.pop %v3568
      %v3570 = vmul.f32 %v3553, 1.442695
      %v3571 = vpow.pop %v3570
      %v3572 = vmul.f32 %v3554, 1.442695
      %v3573 = vpow.pop %v3572
      %v3574 = vmul.f32 %v3555, 1.442695
      %v3575 = vpow.pop %v3574
      %v3576 = vmul.f32 %v3556, 1.442695
      %v3577 = vpow.pop %v3576
      %v3578 = vmul.f32 %v3557, 1.442695
      %v3579 = vpow.pop %v3578
      %v3580 = vmul.f32 %v3558, 1.442695
      %v3581 = vpow.pop %v3580
      %v3582 = vmul.f32 %v3559, 1.442695
      %v3583 = vpow.pop %v3582
      %v3584 = vmul.f32 %v3560, 1.442695
      %v3585 = vpow.pop %v3584
      %v3586 = vmul.f32 %v3561, 1.442695
      %v3587 = vpow.pop %v3586
      %v3588 = vmul.f32 %v3562, 1.442695
      %v3589 = vpow.pop %v3588
      %v3590 = vmul.f32 %v3563, 1.442695
      %v3591 = vpow.pop %v3590
      %v3592 = vmul.f32 %v3564, 1.442695
      %v3593 = vpow.pop %v3592
      %v3594 = vmul.f32 %v3565, 1.442695
      %v3595 = vpow.pop %v3594
      %v3596 = vmul.f32 %v3566, 1.442695
      %v3597 = vpow.pop %v3596
      %v3598 = vmul.f32 %v3567, 1.442695
      %v3599 = vpow.pop %v3598
      %3600 = vadd.xlane.f32.xlu0 %v3569
      %v3601 = vpop.xlane.xlu0 %3600
      %3602 = vadd.xlane.f32.xlu0 %v3571
      %v3603 = vpop.xlane.xlu0 %3602
      %3604 = vadd.xlane.f32.xlu0 %v3573
      %v3605 = vpop.xlane.xlu0 %3604
      %3606 = vadd.xlane.f32.xlu0 %v3575
      %v3607 = vpop.xlane.xlu0 %3606
      %3608 = vadd.xlane.f32.xlu0 %v3577
      %v3609 = vpop.xlane.xlu0 %3608
      %3610 = vadd.xlane.f32.xlu0 %v3579
      %v3611 = vpop.xlane.xlu0 %3610
      %3612 = vadd.xlane.f32.xlu0 %v3581
      %v3613 = vpop.xlane.xlu0 %3612
      %3614 = vadd.xlane.f32.xlu0 %v3583
      %v3615 = vpop.xlane.xlu0 %3614
      %3616 = vadd.xlane.f32.xlu0 %v3585
      %v3617 = vpop.xlane.xlu0 %3616
      %3618 = vadd.xlane.f32.xlu0 %v3587
      %v3619 = vpop.xlane.xlu0 %3618
      %3620 = vadd.xlane.f32.xlu0 %v3589
      %v3621 = vpop.xlane.xlu0 %3620
      %3622 = vadd.xlane.f32.xlu0 %v3591
      %v3623 = vpop.xlane.xlu0 %3622
      %3624 = vadd.xlane.f32.xlu0 %v3593
      %v3625 = vpop.xlane.xlu0 %3624
      %3626 = vadd.xlane.f32.xlu0 %v3595
      %v3627 = vpop.xlane.xlu0 %3626
      %3628 = vadd.xlane.f32.xlu0 %v3597
      %v3629 = vpop.xlane.xlu0 %3628
      %3630 = vadd.xlane.f32.xlu0 %v3599
      %v3631 = vpop.xlane.xlu0 %3630
      %v3632 = vrcp.pop %v3601
      %v3633 = vrcp.pop %v3603
      %v3634 = vrcp.pop %v3605
      %v3635 = vrcp.pop %v3607
      %v3636 = vrcp.pop %v3609
      %v3637 = vrcp.pop %v3611
      %v3638 = vrcp.pop %v3613
      %v3639 = vrcp.pop %v3615
      %v3640 = vrcp.pop %v3617
      %v3641 = vrcp.pop %v3619
      %v3642 = vrcp.pop %v3621
      %v3643 = vrcp.pop %v3623
      %v3644 = vrcp.pop %v3625
      %v3645 = vrcp.pop %v3627
      %v3646 = vrcp.pop %v3629
      %v3647 = vrcp.pop %v3631
      %v3648 = vpack.c.bf16 %v3571, %v3569
      %v3649 = vpack.c.bf16 %v3575, %v3573
      %v3650 = vpack.c.bf16 %v3579, %v3577
      %v3651 = vpack.c.bf16 %v3583, %v3581
      %v3652 = vpack.c.bf16 %v3587, %v3585
      %v3653 = vpack.c.bf16 %v3591, %v3589
      %v3654 = vpack.c.bf16 %v3595, %v3593
      %v3655 = vpack.c.bf16 %v3599, %v3597
      %3656 = vrot.lane.b32.xlu0 %v598, 72
      %v3657 = vpop.permute.xlu0 %3656
      %3658 = vrot.lane.b32.xlu0 %v599, 72
      %v3659 = vpop.permute.xlu0 %3658
      %3660 = vrot.lane.b32.xlu0 %v600, 72
      %v3661 = vpop.permute.xlu0 %3660
      %3662 = vrot.lane.b32.xlu0 %v601, 72
      %v3663 = vpop.permute.xlu0 %3662
      %3664 = vrot.lane.b32.xlu0 %v602, 72
      %v3665 = vpop.permute.xlu0 %3664
      %3666 = vrot.lane.b32.xlu0 %v603, 72
      %v3667 = vpop.permute.xlu0 %3666
      %3668 = vrot.lane.b32.xlu0 %v604, 72
      %v3669 = vpop.permute.xlu0 %3668
      %3670 = vrot.lane.b32.xlu0 %v605, 72
      %v3671 = vpop.permute.xlu0 %3670
      %3680 = vmatprep.subr.bf16.mxu0 0
      %3681 = vmatpush1.bf16.msra.mxu0 %v3657
      %3682 = vmatprep.subr.bf16.mxu0 0
      %3683 = vmatpush1.bf16.msra.mxu0 %v3659
      %3684 = vmatprep.subr.bf16.mxu0 0
      %3685 = vmatpush1.bf16.msra.mxu0 %v3661
      %3686 = vmatprep.subr.bf16.mxu0 0
      %3687 = vmatpush1.bf16.msra.mxu0 %v3663
      %3688 = vmatprep.subr.bf16.mxu0 0
      %3689 = vmatpush1.bf16.msra.mxu0 %v3665
      %3690 = vmatprep.subr.bf16.mxu0 0
      %3691 = vmatpush1.bf16.msra.mxu0 %v3667
      %3692 = vmatprep.subr.bf16.mxu0 0
      %3693 = vmatpush1.bf16.msra.mxu0 %v3669
      %3694 = vmatprep.subr.bf16.mxu0 0
      %3695 = vmatpush1.bf16.msra.mxu0 %v3671
      %3696 = vmatprep.subr.bf16.mxu0 0
      %3697 = vmatpush1.bf16.msra.mxu0 0
      %3698 = vmatprep.subr.bf16.mxu0 0
      %3699 = vmatpush1.bf16.msra.mxu0 0
      %3700 = vmatprep.subr.bf16.mxu0 0
      %3701 = vmatpush1.bf16.msra.mxu0 0
      %3702 = vmatprep.subr.bf16.mxu0 0
      %3703 = vmatpush1.bf16.msra.mxu0 0
      %3704 = vmatprep.subr.bf16.mxu0 0
      %3705 = vmatpush1.bf16.msra.mxu0 0
      %3706 = vmatprep.subr.bf16.mxu0 0
      %3707 = vmatpush1.bf16.msra.mxu0 0
      %3708 = vmatprep.subr.bf16.mxu0 0
      %3709 = vmatpush1.bf16.msra.mxu0 0
      %3710 = vmatprep.subr.bf16.mxu0 0
      %3711 = vmatpush1.bf16.msra.mxu0 0
      %3712 = vmatprep.mubr.bf16.mxu0 0
      %3713 = vmatmul.mubr.bf16.gmra.mrb[0].mxu0 %v3648
      %v3714 = vpop.f32.mrb[0].mxu0
      %v3715 = vadd.f32 0.0, %v3714
      %v3716 = vpop.f32.mrb[0].mxu0
      %v3717 = vpop.f32.mrb[0].mxu0
      %v3718 = vadd.f32 0.0, %v3717
      %v3719 = vpop.f32.mrb[0].mxu0
      %3720 = vmatprep.mubr.bf16.mxu0 0
      %3721 = vmatmul.mubr.bf16.gmra.mrb[0].mxu0 %v3649
      %v3722 = vpop.f32.mrb[0].mxu0
      %v3723 = vadd.f32 0.0, %v3722
      %v3724 = vpop.f32.mrb[0].mxu0
      %v3725 = vpop.f32.mrb[0].mxu0
      %v3726 = vadd.f32 0.0, %v3725
      %v3727 = vpop.f32.mrb[0].mxu0
      %3728 = vmatprep.mubr.bf16.mxu0 0
      %3729 = vmatmul.mubr.bf16.gmra.mrb[0].mxu0 %v3650
      %v3730 = vpop.f32.mrb[0].mxu0
      %v3731 = vadd.f32 0.0, %v3730
      %v3732 = vpop.f32.mrb[0].mxu0
      %v3733 = vpop.f32.mrb[0].mxu0
      %v3734 = vadd.f32 0.0, %v3733
      %v3735 = vpop.f32.mrb[0].mxu0
      %3736 = vmatprep.mubr.bf16.mxu0 0
      %3737 = vmatmul.mubr.bf16.gmra.mrb[0].mxu0 %v3651
      %v3738 = vpop.f32.mrb[0].mxu0
      %v3739 = vadd.f32 0.0, %v3738
      %v3740 = vpop.f32.mrb[0].mxu0
      %v3741 = vpop.f32.mrb[0].mxu0
      %v3742 = vadd.f32 0.0, %v3741
      %v3743 = vpop.f32.mrb[0].mxu0
      %3744 = vmatprep.mubr.bf16.mxu0 0
      %3745 = vmatmul.mubr.bf16.gmra.mrb[0].mxu0 %v3652
      %v3746 = vpop.f32.mrb[0].mxu0
      %v3747 = vadd.f32 0.0, %v3746
      %v3748 = vpop.f32.mrb[0].mxu0
      %v3749 = vpop.f32.mrb[0].mxu0
      %v3750 = vadd.f32 0.0, %v3749
      %v3751 = vpop.f32.mrb[0].mxu0
      %3752 = vmatprep.mubr.bf16.mxu0 0
      %3753 = vmatmul.mubr.bf16.gmra.mrb[0].mxu0 %v3653
      %v3754 = vpop.f32.mrb[0].mxu0
      %v3755 = vadd.f32 0.0, %v3754
      %v3756 = vpop.f32.mrb[0].mxu0
      %v3757 = vpop.f32.mrb[0].mxu0
      %v3758 = vadd.f32 0.0, %v3757
      %v3759 = vpop.f32.mrb[0].mxu0
      %3760 = vmatprep.mubr.bf16.mxu0 0
      %3761 = vmatmul.mubr.bf16.gmra.mrb[0].mxu0 %v3654
      %v3762 = vpop.f32.mrb[0].mxu0
      %v3763 = vadd.f32 0.0, %v3762
      %v3764 = vpop.f32.mrb[0].mxu0
      %v3765 = vpop.f32.mrb[0].mxu0
      %v3766 = vadd.f32 0.0, %v3765
      %v3767 = vpop.f32.mrb[0].mxu0
      %3768 = vmatprep.mubr.bf16.mxu0 0
      %3769 = vmatmul.mubr.bf16.gmra.mrb[0].mxu0 %v3655
      %v3770 = vpop.f32.mrb[0].mxu0
      %v3771 = vadd.f32 0.0, %v3770
      %v3772 = vpop.f32.mrb[0].mxu0
      %v3773 = vpop.f32.mrb[0].mxu0
      %v3774 = vadd.f32 0.0, %v3773
      %v3775 = vpop.f32.mrb[0].mxu0
      %3776 = vdwg.mxu0
      %v3777 = vmul.f32 %v3715, %v3632
      %v3778 = vmul.f32 %v3718, %v3633
      %v3779 = vmul.f32 %v3723, %v3634
      %v3780 = vmul.f32 %v3726, %v3635
      %v3781 = vmul.f32 %v3731, %v3636
      %v3782 = vmul.f32 %v3734, %v3637
      %v3783 = vmul.f32 %v3739, %v3638
      %v3784 = vmul.f32 %v3742, %v3639
      %v3785 = vmul.f32 %v3747, %v3640
      %v3786 = vmul.f32 %v3750, %v3641
      %v3787 = vmul.f32 %v3755, %v3642
      %v3788 = vmul.f32 %v3758, %v3643
      %v3789 = vmul.f32 %v3763, %v3644
      %v3790 = vmul.f32 %v3766, %v3645
      %v3791 = vmul.f32 %v3771, %v3646
      %v3792 = vmul.f32 %v3774, %v3647
      %v3793 = vpack.c.bf16 %v3778, %v3777
      %v3794 = vpack.c.bf16 %v3780, %v3779
      %v3795 = vpack.c.bf16 %v3782, %v3781
      %v3796 = vpack.c.bf16 %v3784, %v3783
      %v3797 = vpack.c.bf16 %v3786, %v3785
      %v3798 = vpack.c.bf16 %v3788, %v3787
      %v3799 = vpack.c.bf16 %v3790, %v3789
      %v3800 = vpack.c.bf16 %v3792, %v3791
      %3801 = vrot.lane.b32.xlu0 %v481, 100
      %v3802 = vpop.permute.xlu0 %3801
      %3803 = vrot.lane.b32.xlu0 %v482, 100
      %v3804 = vpop.permute.xlu0 %3803
      %3805 = vrot.lane.b32.xlu0 %v483, 100
      %v3806 = vpop.permute.xlu0 %3805
      %3807 = vrot.lane.b32.xlu0 %v484, 100
      %v3808 = vpop.permute.xlu0 %3807
      %3809 = vrot.lane.b32.xlu0 %v485, 100
      %v3810 = vpop.permute.xlu0 %3809
      %3811 = vrot.lane.b32.xlu0 %v486, 100
      %v3812 = vpop.permute.xlu0 %3811
      %3813 = vrot.lane.b32.xlu0 %v487, 100
      %v3814 = vpop.permute.xlu0 %3813
      %3815 = vrot.lane.b32.xlu0 %v488, 100
      %v3816 = vpop.permute.xlu0 %3815
      %3817 = vrot.lane.b32.xlu0 %v598, 100
      %v3818 = vpop.permute.xlu0 %3817
      %3819 = vrot.lane.b32.xlu0 %v599, 100
      %v3820 = vpop.permute.xlu0 %3819
      %3821 = vrot.lane.b32.xlu0 %v600, 100
      %v3822 = vpop.permute.xlu0 %3821
      %3823 = vrot.lane.b32.xlu0 %v601, 100
      %v3824 = vpop.permute.xlu0 %3823
      %3825 = vrot.lane.b32.xlu0 %v602, 100
      %v3826 = vpop.permute.xlu0 %3825
      %3827 = vrot.lane.b32.xlu0 %v603, 100
      %v3828 = vpop.permute.xlu0 %3827
      %3829 = vrot.lane.b32.xlu0 %v604, 100
      %v3830 = vpop.permute.xlu0 %3829
      %3831 = vrot.lane.b32.xlu0 %v605, 100
      %v3832 = vpop.permute.xlu0 %3831
      %v3834 = vsel %vm610, %v3802, 0
      %v3837 = vsel %vm610, %v3804, 0
      %v3840 = vsel %vm610, %v3806, 0
      %v3843 = vsel %vm610, %v3808, 0
      %v3846 = vsel %vm610, %v3810, 0
      %v3849 = vsel %vm610, %v3812, 0
      %v3852 = vsel %vm610, %v3814, 0
      %v3855 = vsel %vm610, %v3816, 0
      %v3858 = vsel %vm610, %v3818, 0
      %v3861 = vsel %vm610, %v3820, 0
      %v3864 = vsel %vm610, %v3822, 0
      %v3867 = vsel %vm610, %v3824, 0
      %v3870 = vsel %vm610, %v3826, 0
      %v3873 = vsel %vm610, %v3828, 0
      %v3876 = vsel %vm610, %v3830, 0
      %v3879 = vsel %vm610, %v3832, 0
      %3881 = vmatprep.subr.bf16.mxu0 0
      %3882 = vmatpush1.bf16.xpose.msra.mxu0 %v3858
      %3883 = vmatprep.subr.bf16.mxu0 0
      %3884 = vmatpush1.bf16.xpose.msra.mxu0 %v3861
      %3885 = vmatprep.subr.bf16.mxu0 0
      %3886 = vmatpush1.bf16.xpose.msra.mxu0 %v3864
      %3887 = vmatprep.subr.bf16.mxu0 0
      %3888 = vmatpush1.bf16.xpose.msra.mxu0 %v3867
      %3889 = vmatprep.subr.bf16.mxu0 0
      %3890 = vmatpush1.bf16.xpose.msra.mxu0 %v3870
      %3891 = vmatprep.subr.bf16.mxu0 0
      %3892 = vmatpush1.bf16.xpose.msra.mxu0 %v3873
      %3893 = vmatprep.subr.bf16.mxu0 0
      %3894 = vmatpush1.bf16.xpose.msra.mxu0 %v3876
      %3895 = vmatprep.subr.bf16.mxu0 0
      %3896 = vmatpush1.bf16.xpose.msra.mxu0 %v3879
      %3897 = vmatprep.subr.bf16.mxu0 0
      %3898 = vmatpush1.bf16.xpose.msra.mxu0 0
      %3899 = vmatprep.subr.bf16.mxu0 0
      %3900 = vmatpush1.bf16.xpose.msra.mxu0 0
      %3901 = vmatprep.subr.bf16.mxu0 0
      %3902 = vmatpush1.bf16.xpose.msra.mxu0 0
      %3903 = vmatprep.subr.bf16.mxu0 0
      %3904 = vmatpush1.bf16.xpose.msra.mxu0 0
      %3905 = vmatprep.subr.bf16.mxu0 0
      %3906 = vmatpush1.bf16.xpose.msra.mxu0 0
      %3907 = vmatprep.subr.bf16.mxu0 0
      %3908 = vmatpush1.bf16.xpose.msra.mxu0 0
      %3909 = vmatprep.subr.bf16.mxu0 0
      %3910 = vmatpush1.bf16.xpose.msra.mxu0 0
      %3911 = vmatprep.subr.bf16.mxu0 0
      %3912 = vmatpush1.bf16.xpose.msra.mxu0 0
      %3913 = vmatprep.mubr.bf16.mxu0 0
      %3914 = vmatmul.mubr.bf16.gmra.mrb[0].mxu0 %v3834
      %v3915 = vpop.f32.mrb[0].mxu0
      %v3916 = vadd.f32 %v609, %v3915
      %v3917 = vpop.f32.mrb[0].mxu0
      %v3918 = vpop.f32.mrb[0].mxu0
      %v3919 = vadd.f32 %v609, %v3918
      %v3920 = vpop.f32.mrb[0].mxu0
      %3921 = vmatprep.mubr.bf16.mxu0 0
      %3922 = vmatmul.mubr.bf16.gmra.mrb[0].mxu0 %v3837
      %v3923 = vpop.f32.mrb[0].mxu0
      %v3924 = vadd.f32 %v609, %v3923
      %v3925 = vpop.f32.mrb[0].mxu0
      %v3926 = vpop.f32.mrb[0].mxu0
      %v3927 = vadd.f32 %v609, %v3926
      %v3928 = vpop.f32.mrb[0].mxu0
      %3929 = vmatprep.mubr.bf16.mxu0 0
      %3930 = vmatmul.mubr.bf16.gmra.mrb[0].mxu0 %v3840
      %v3931 = vpop.f32.mrb[0].mxu0
      %v3932 = vadd.f32 %v609, %v3931
      %v3933 = vpop.f32.mrb[0].mxu0
      %v3934 = vpop.f32.mrb[0].mxu0
      %v3935 = vadd.f32 %v609, %v3934
      %v3936 = vpop.f32.mrb[0].mxu0
      %3937 = vmatprep.mubr.bf16.mxu0 0
      %3938 = vmatmul.mubr.bf16.gmra.mrb[0].mxu0 %v3843
      %v3939 = vpop.f32.mrb[0].mxu0
      %v3940 = vadd.f32 %v609, %v3939
      %v3941 = vpop.f32.mrb[0].mxu0
      %v3942 = vpop.f32.mrb[0].mxu0
      %v3943 = vadd.f32 %v609, %v3942
      %v3944 = vpop.f32.mrb[0].mxu0
      %3945 = vmatprep.mubr.bf16.mxu0 0
      %3946 = vmatmul.mubr.bf16.gmra.mrb[0].mxu0 %v3846
      %v3947 = vpop.f32.mrb[0].mxu0
      %v3948 = vadd.f32 %v609, %v3947
      %v3949 = vpop.f32.mrb[0].mxu0
      %v3950 = vpop.f32.mrb[0].mxu0
      %v3951 = vadd.f32 %v609, %v3950
      %v3952 = vpop.f32.mrb[0].mxu0
      %3953 = vmatprep.mubr.bf16.mxu0 0
      %3954 = vmatmul.mubr.bf16.gmra.mrb[0].mxu0 %v3849
      %v3955 = vpop.f32.mrb[0].mxu0
      %v3956 = vadd.f32 %v609, %v3955
      %v3957 = vpop.f32.mrb[0].mxu0
      %v3958 = vpop.f32.mrb[0].mxu0
      %v3959 = vadd.f32 %v609, %v3958
      %v3960 = vpop.f32.mrb[0].mxu0
      %3961 = vmatprep.mubr.bf16.mxu0 0
      %3962 = vmatmul.mubr.bf16.gmra.mrb[0].mxu0 %v3852
      %v3963 = vpop.f32.mrb[0].mxu0
      %v3964 = vadd.f32 %v609, %v3963
      %v3965 = vpop.f32.mrb[0].mxu0
      %v3966 = vpop.f32.mrb[0].mxu0
      %v3967 = vadd.f32 %v609, %v3966
      %v3968 = vpop.f32.mrb[0].mxu0
      %3969 = vmatprep.mubr.bf16.mxu0 0
      %3970 = vmatmul.mubr.bf16.gmra.mrb[0].mxu0 %v3855
      %v3971 = vpop.f32.mrb[0].mxu0
      %v3972 = vadd.f32 %v609, %v3971
      %v3973 = vpop.f32.mrb[0].mxu0
      %v3974 = vpop.f32.mrb[0].mxu0
      %v3975 = vadd.f32 %v609, %v3974
      %v3976 = vpop.f32.mrb[0].mxu0
      %3977 = vdwg.mxu0
      %3978 = vmax.xlane.f32.xlu0 %v3916
      %v3979 = vpop.xlane.xlu0 %3978
      %3980 = vmax.xlane.f32.xlu0 %v3919
      %v3981 = vpop.xlane.xlu0 %3980
      %3982 = vmax.xlane.f32.xlu0 %v3924
      %v3983 = vpop.xlane.xlu0 %3982
      %3984 = vmax.xlane.f32.xlu0 %v3927
      %v3985 = vpop.xlane.xlu0 %3984
      %3986 = vmax.xlane.f32.xlu0 %v3932
      %v3987 = vpop.xlane.xlu0 %3986
      %3988 = vmax.xlane.f32.xlu0 %v3935
      %v3989 = vpop.xlane.xlu0 %3988
      %3990 = vmax.xlane.f32.xlu0 %v3940
      %v3991 = vpop.xlane.xlu0 %3990
      %3992 = vmax.xlane.f32.xlu0 %v3943
      %v3993 = vpop.xlane.xlu0 %3992
      %3994 = vmax.xlane.f32.xlu0 %v3948
      %v3995 = vpop.xlane.xlu0 %3994
      %3996 = vmax.xlane.f32.xlu0 %v3951
      %v3997 = vpop.xlane.xlu0 %3996
      %3998 = vmax.xlane.f32.xlu0 %v3956
      %v3999 = vpop.xlane.xlu0 %3998
      %4000 = vmax.xlane.f32.xlu0 %v3959
      %v4001 = vpop.xlane.xlu0 %4000
      %4002 = vmax.xlane.f32.xlu0 %v3964
      %v4003 = vpop.xlane.xlu0 %4002
      %4004 = vmax.xlane.f32.xlu0 %v3967
      %v4005 = vpop.xlane.xlu0 %4004
      %4006 = vmax.xlane.f32.xlu0 %v3972
      %v4007 = vpop.xlane.xlu0 %4006
      %4008 = vmax.xlane.f32.xlu0 %v3975
      %v4009 = vpop.xlane.xlu0 %4008
      %v4010 = vsub.f32 %v3916, %v3979
      %v4011 = vsub.f32 %v3919, %v3981
      %v4012 = vsub.f32 %v3924, %v3983
      %v4013 = vsub.f32 %v3927, %v3985
      %v4014 = vsub.f32 %v3932, %v3987
      %v4015 = vsub.f32 %v3935, %v3989
      %v4016 = vsub.f32 %v3940, %v3991
      %v4017 = vsub.f32 %v3943, %v3993
      %v4018 = vsub.f32 %v3948, %v3995
      %v4019 = vsub.f32 %v3951, %v3997
      %v4020 = vsub.f32 %v3956, %v3999
      %v4021 = vsub.f32 %v3959, %v4001
      %v4022 = vsub.f32 %v3964, %v4003
      %v4023 = vsub.f32 %v3967, %v4005
      %v4024 = vsub.f32 %v3972, %v4007
      %v4025 = vsub.f32 %v3975, %v4009
      %v4026 = vmul.f32 %v4010, 1.442695
      %v4027 = vpow.pop %v4026
      %v4028 = vmul.f32 %v4011, 1.442695
      %v4029 = vpow.pop %v4028
      %v4030 = vmul.f32 %v4012, 1.442695
      %v4031 = vpow.pop %v4030
      %v4032 = vmul.f32 %v4013, 1.442695
      %v4033 = vpow.pop %v4032
      %v4034 = vmul.f32 %v4014, 1.442695
      %v4035 = vpow.pop %v4034
      %v4036 = vmul.f32 %v4015, 1.442695
      %v4037 = vpow.pop %v4036
      %v4038 = vmul.f32 %v4016, 1.442695
      %v4039 = vpow.pop %v4038
      %v4040 = vmul.f32 %v4017, 1.442695
      %v4041 = vpow.pop %v4040
      %v4042 = vmul.f32 %v4018, 1.442695
      %v4043 = vpow.pop %v4042
      %v4044 = vmul.f32 %v4019, 1.442695
      %v4045 = vpow.pop %v4044
      %v4046 = vmul.f32 %v4020, 1.442695
      %v4047 = vpow.pop %v4046
      %v4048 = vmul.f32 %v4021, 1.442695
      %v4049 = vpow.pop %v4048
      %v4050 = vmul.f32 %v4022, 1.442695
      %v4051 = vpow.pop %v4050
      %v4052 = vmul.f32 %v4023, 1.442695
      %v4053 = vpow.pop %v4052
      %v4054 = vmul.f32 %v4024, 1.442695
      %v4055 = vpow.pop %v4054
      %v4056 = vmul.f32 %v4025, 1.442695
      %v4057 = vpow.pop %v4056
      %4058 = vadd.xlane.f32.xlu0 %v4027
      %v4059 = vpop.xlane.xlu0 %4058
      %4060 = vadd.xlane.f32.xlu0 %v4029
      %v4061 = vpop.xlane.xlu0 %4060
      %4062 = vadd.xlane.f32.xlu0 %v4031
      %v4063 = vpop.xlane.xlu0 %4062
      %4064 = vadd.xlane.f32.xlu0 %v4033
      %v4065 = vpop.xlane.xlu0 %4064
      %4066 = vadd.xlane.f32.xlu0 %v4035
      %v4067 = vpop.xlane.xlu0 %4066
      %4068 = vadd.xlane.f32.xlu0 %v4037
      %v4069 = vpop.xlane.xlu0 %4068
      %4070 = vadd.xlane.f32.xlu0 %v4039
      %v4071 = vpop.xlane.xlu0 %4070
      %4072 = vadd.xlane.f32.xlu0 %v4041
      %v4073 = vpop.xlane.xlu0 %4072
      %4074 = vadd.xlane.f32.xlu0 %v4043
      %v4075 = vpop.xlane.xlu0 %4074
      %4076 = vadd.xlane.f32.xlu0 %v4045
      %v4077 = vpop.xlane.xlu0 %4076
      %4078 = vadd.xlane.f32.xlu0 %v4047
      %v4079 = vpop.xlane.xlu0 %4078
      %4080 = vadd.xlane.f32.xlu0 %v4049
      %v4081 = vpop.xlane.xlu0 %4080
      %4082 = vadd.xlane.f32.xlu0 %v4051
      %v4083 = vpop.xlane.xlu0 %4082
      %4084 = vadd.xlane.f32.xlu0 %v4053
      %v4085 = vpop.xlane.xlu0 %4084
      %4086 = vadd.xlane.f32.xlu0 %v4055
      %v4087 = vpop.xlane.xlu0 %4086
      %4088 = vadd.xlane.f32.xlu0 %v4057
      %v4089 = vpop.xlane.xlu0 %4088
      %v4090 = vrcp.pop %v4059
      %v4091 = vrcp.pop %v4061
      %v4092 = vrcp.pop %v4063
      %v4093 = vrcp.pop %v4065
      %v4094 = vrcp.pop %v4067
      %v4095 = vrcp.pop %v4069
      %v4096 = vrcp.pop %v4071
      %v4097 = vrcp.pop %v4073
      %v4098 = vrcp.pop %v4075
      %v4099 = vrcp.pop %v4077
      %v4100 = vrcp.pop %v4079
      %v4101 = vrcp.pop %v4081
      %v4102 = vrcp.pop %v4083
      %v4103 = vrcp.pop %v4085
      %v4104 = vrcp.pop %v4087
      %v4105 = vrcp.pop %v4089
      %v4106 = vpack.c.bf16 %v4029, %v4027
      %v4107 = vpack.c.bf16 %v4033, %v4031
      %v4108 = vpack.c.bf16 %v4037, %v4035
      %v4109 = vpack.c.bf16 %v4041, %v4039
      %v4110 = vpack.c.bf16 %v4045, %v4043
      %v4111 = vpack.c.bf16 %v4049, %v4047
      %v4112 = vpack.c.bf16 %v4053, %v4051
      %v4113 = vpack.c.bf16 %v4057, %v4055
      %4114 = vrot.lane.b32.xlu0 %v598, 68
      %v4115 = vpop.permute.xlu0 %4114
      %4116 = vrot.lane.b32.xlu0 %v599, 68
      %v4117 = vpop.permute.xlu0 %4116
      %4118 = vrot.lane.b32.xlu0 %v600, 68
      %v4119 = vpop.permute.xlu0 %4118
      %4120 = vrot.lane.b32.xlu0 %v601, 68
      %v4121 = vpop.permute.xlu0 %4120
      %4122 = vrot.lane.b32.xlu0 %v602, 68
      %v4123 = vpop.permute.xlu0 %4122
      %4124 = vrot.lane.b32.xlu0 %v603, 68
      %v4125 = vpop.permute.xlu0 %4124
      %4126 = vrot.lane.b32.xlu0 %v604, 68
      %v4127 = vpop.permute.xlu0 %4126
      %4128 = vrot.lane.b32.xlu0 %v605, 68
      %v4129 = vpop.permute.xlu0 %4128
      %4138 = vmatprep.subr.bf16.mxu0 0
      %4139 = vmatpush1.bf16.msra.mxu0 %v4115
      %4140 = vmatprep.subr.bf16.mxu0 0
      %4141 = vmatpush1.bf16.msra.mxu0 %v4117
      %4142 = vmatprep.subr.bf16.mxu0 0
      %4143 = vmatpush1.bf16.msra.mxu0 %v4119
      %4144 = vmatprep.subr.bf16.mxu0 0
      %4145 = vmatpush1.bf16.msra.mxu0 %v4121
      %4146 = vmatprep.subr.bf16.mxu0 0
      %4147 = vmatpush1.bf16.msra.mxu0 %v4123
      %4148 = vmatprep.subr.bf16.mxu0 0
      %4149 = vmatpush1.bf16.msra.mxu0 %v4125
      %4150 = vmatprep.subr.bf16.mxu0 0
      %4151 = vmatpush1.bf16.msra.mxu0 %v4127
      %4152 = vmatprep.subr.bf16.mxu0 0
      %4153 = vmatpush1.bf16.msra.mxu0 %v4129
      %4154 = vmatprep.subr.bf16.mxu0 0
      %4155 = vmatpush1.bf16.msra.mxu0 0
      %4156 = vmatprep.subr.bf16.mxu0 0
      %4157 = vmatpush1.bf16.msra.mxu0 0
      %4158 = vmatprep.subr.bf16.mxu0 0
      %4159 = vmatpush1.bf16.msra.mxu0 0
      %4160 = vmatprep.subr.bf16.mxu0 0
      %4161 = vmatpush1.bf16.msra.mxu0 0
      %4162 = vmatprep.subr.bf16.mxu0 0
      %4163 = vmatpush1.bf16.msra.mxu0 0
      %4164 = vmatprep.subr.bf16.mxu0 0
      %4165 = vmatpush1.bf16.msra.mxu0 0
      %4166 = vmatprep.subr.bf16.mxu0 0
      %4167 = vmatpush1.bf16.msra.mxu0 0
      %4168 = vmatprep.subr.bf16.mxu0 0
      %4169 = vmatpush1.bf16.msra.mxu0 0
      %4170 = vmatprep.mubr.bf16.mxu0 0
      %4171 = vmatmul.mubr.bf16.gmra.mrb[0].mxu0 %v4106
      %v4172 = vpop.f32.mrb[0].mxu0
      %v4173 = vadd.f32 0.0, %v4172
      %v4174 = vpop.f32.mrb[0].mxu0
      %v4175 = vpop.f32.mrb[0].mxu0
      %v4176 = vadd.f32 0.0, %v4175
      %v4177 = vpop.f32.mrb[0].mxu0
      %4178 = vmatprep.mubr.bf16.mxu0 0
      %4179 = vmatmul.mubr.bf16.gmra.mrb[0].mxu0 %v4107
      %v4180 = vpop.f32.mrb[0].mxu0
      %v4181 = vadd.f32 0.0, %v4180
      %v4182 = vpop.f32.mrb[0].mxu0
      %v4183 = vpop.f32.mrb[0].mxu0
      %v4184 = vadd.f32 0.0, %v4183
      %v4185 = vpop.f32.mrb[0].mxu0
      %4186 = vmatprep.mubr.bf16.mxu0 0
      %4187 = vmatmul.mubr.bf16.gmra.mrb[0].mxu0 %v4108
      %v4188 = vpop.f32.mrb[0].mxu0
      %v4189 = vadd.f32 0.0, %v4188
      %v4190 = vpop.f32.mrb[0].mxu0
      %v4191 = vpop.f32.mrb[0].mxu0
      %v4192 = vadd.f32 0.0, %v4191
      %v4193 = vpop.f32.mrb[0].mxu0
      %4194 = vmatprep.mubr.bf16.mxu0 0
      %4195 = vmatmul.mubr.bf16.gmra.mrb[0].mxu0 %v4109
      %v4196 = vpop.f32.mrb[0].mxu0
      %v4197 = vadd.f32 0.0, %v4196
      %v4198 = vpop.f32.mrb[0].mxu0
      %v4199 = vpop.f32.mrb[0].mxu0
      %v4200 = vadd.f32 0.0, %v4199
      %v4201 = vpop.f32.mrb[0].mxu0
      %4202 = vmatprep.mubr.bf16.mxu0 0
      %4203 = vmatmul.mubr.bf16.gmra.mrb[0].mxu0 %v4110
      %v4204 = vpop.f32.mrb[0].mxu0
      %v4205 = vadd.f32 0.0, %v4204
      %v4206 = vpop.f32.mrb[0].mxu0
      %v4207 = vpop.f32.mrb[0].mxu0
      %v4208 = vadd.f32 0.0, %v4207
      %v4209 = vpop.f32.mrb[0].mxu0
      %4210 = vmatprep.mubr.bf16.mxu0 0
      %4211 = vmatmul.mubr.bf16.gmra.mrb[0].mxu0 %v4111
      %v4212 = vpop.f32.mrb[0].mxu0
      %v4213 = vadd.f32 0.0, %v4212
      %v4214 = vpop.f32.mrb[0].mxu0
      %v4215 = vpop.f32.mrb[0].mxu0
      %v4216 = vadd.f32 0.0, %v4215
      %v4217 = vpop.f32.mrb[0].mxu0
      %4218 = vmatprep.mubr.bf16.mxu0 0
      %4219 = vmatmul.mubr.bf16.gmra.mrb[0].mxu0 %v4112
      %v4220 = vpop.f32.mrb[0].mxu0
      %v4221 = vadd.f32 0.0, %v4220
      %v4222 = vpop.f32.mrb[0].mxu0
      %v4223 = vpop.f32.mrb[0].mxu0
      %v4224 = vadd.f32 0.0, %v4223
      %v4225 = vpop.f32.mrb[0].mxu0
      %4226 = vmatprep.mubr.bf16.mxu0 0
      %4227 = vmatmul.mubr.bf16.gmra.mrb[0].mxu0 %v4113
      %v4228 = vpop.f32.mrb[0].mxu0
      %v4229 = vadd.f32 0.0, %v4228
      %v4230 = vpop.f32.mrb[0].mxu0
      %v4231 = vpop.f32.mrb[0].mxu0
      %v4232 = vadd.f32 0.0, %v4231
      %v4233 = vpop.f32.mrb[0].mxu0
      %4234 = vdwg.mxu0
      %v4235 = vmul.f32 %v4173, %v4090
      %v4236 = vmul.f32 %v4176, %v4091
      %v4237 = vmul.f32 %v4181, %v4092
      %v4238 = vmul.f32 %v4184, %v4093
      %v4239 = vmul.f32 %v4189, %v4094
      %v4240 = vmul.f32 %v4192, %v4095
      %v4241 = vmul.f32 %v4197, %v4096
      %v4242 = vmul.f32 %v4200, %v4097
      %v4243 = vmul.f32 %v4205, %v4098
      %v4244 = vmul.f32 %v4208, %v4099
      %v4245 = vmul.f32 %v4213, %v4100
      %v4246 = vmul.f32 %v4216, %v4101
      %v4247 = vmul.f32 %v4221, %v4102
      %v4248 = vmul.f32 %v4224, %v4103
      %v4249 = vmul.f32 %v4229, %v4104
      %v4250 = vmul.f32 %v4232, %v4105
      %v4251 = vpack.c.bf16 %v4236, %v4235
      %v4252 = vpack.c.bf16 %v4238, %v4237
      %v4253 = vpack.c.bf16 %v4240, %v4239
      %v4254 = vpack.c.bf16 %v4242, %v4241
      %v4255 = vpack.c.bf16 %v4244, %v4243
      %v4256 = vpack.c.bf16 %v4246, %v4245
      %v4257 = vpack.c.bf16 %v4248, %v4247
      %v4258 = vpack.c.bf16 %v4250, %v4249
      %4267 = vrot.lane.b32.xlu0 %v1503, 4
      %v4268 = vpop.permute.xlu0 %4267
      %4269 = vrot.lane.b32.xlu0 %v1504, 4
      %v4270 = vpop.permute.xlu0 %4269
      %4271 = vrot.lane.b32.xlu0 %v1505, 4
      %v4272 = vpop.permute.xlu0 %4271
      %4273 = vrot.lane.b32.xlu0 %v1506, 4
      %v4274 = vpop.permute.xlu0 %4273
      %4275 = vrot.lane.b32.xlu0 %v1507, 4
      %v4276 = vpop.permute.xlu0 %4275
      %4277 = vrot.lane.b32.xlu0 %v1508, 4
      %v4278 = vpop.permute.xlu0 %4277
      %4279 = vrot.lane.b32.xlu0 %v1509, 4
      %v4280 = vpop.permute.xlu0 %4279
      %4281 = vrot.lane.b32.xlu0 %v1510, 4
      %v4282 = vpop.permute.xlu0 %4281
      %4291 = vrot.lane.b32.xlu0 %v1961, 8
      %v4292 = vpop.permute.xlu0 %4291
      %4293 = vrot.lane.b32.xlu0 %v1962, 8
      %v4294 = vpop.permute.xlu0 %4293
      %4295 = vrot.lane.b32.xlu0 %v1963, 8
      %v4296 = vpop.permute.xlu0 %4295
      %4297 = vrot.lane.b32.xlu0 %v1964, 8
      %v4298 = vpop.permute.xlu0 %4297
      %4299 = vrot.lane.b32.xlu0 %v1965, 8
      %v4300 = vpop.permute.xlu0 %4299
      %4301 = vrot.lane.b32.xlu0 %v1966, 8
      %v4302 = vpop.permute.xlu0 %4301
      %4303 = vrot.lane.b32.xlu0 %v1967, 8
      %v4304 = vpop.permute.xlu0 %4303
      %4305 = vrot.lane.b32.xlu0 %v1968, 8
      %v4306 = vpop.permute.xlu0 %4305
      %4315 = vrot.lane.b32.xlu0 %v2419, 12
      %v4316 = vpop.permute.xlu0 %4315
      %4317 = vrot.lane.b32.xlu0 %v2420, 12
      %v4318 = vpop.permute.xlu0 %4317
      %4319 = vrot.lane.b32.xlu0 %v2421, 12
      %v4320 = vpop.permute.xlu0 %4319
      %4321 = vrot.lane.b32.xlu0 %v2422, 12
      %v4322 = vpop.permute.xlu0 %4321
      %4323 = vrot.lane.b32.xlu0 %v2423, 12
      %v4324 = vpop.permute.xlu0 %4323
      %4325 = vrot.lane.b32.xlu0 %v2424, 12
      %v4326 = vpop.permute.xlu0 %4325
      %4327 = vrot.lane.b32.xlu0 %v2425, 12
      %v4328 = vpop.permute.xlu0 %4327
      %4329 = vrot.lane.b32.xlu0 %v2426, 12
      %v4330 = vpop.permute.xlu0 %4329
      %4339 = vrot.lane.b32.xlu0 %v2877, 16
      %v4340 = vpop.permute.xlu0 %4339
      %4341 = vrot.lane.b32.xlu0 %v2878, 16
      %v4342 = vpop.permute.xlu0 %4341
      %4343 = vrot.lane.b32.xlu0 %v2879, 16
      %v4344 = vpop.permute.xlu0 %4343
      %4345 = vrot.lane.b32.xlu0 %v2880, 16
      %v4346 = vpop.permute.xlu0 %4345
      %4347 = vrot.lane.b32.xlu0 %v2881, 16
      %v4348 = vpop.permute.xlu0 %4347
      %4349 = vrot.lane.b32.xlu0 %v2882, 16
      %v4350 = vpop.permute.xlu0 %4349
      %4351 = vrot.lane.b32.xlu0 %v2883, 16
      %v4352 = vpop.permute.xlu0 %4351
      %4353 = vrot.lane.b32.xlu0 %v2884, 16
      %v4354 = vpop.permute.xlu0 %4353
      %4363 = vrot.lane.b32.xlu0 %v3335, 20
      %v4364 = vpop.permute.xlu0 %4363
      %4365 = vrot.lane.b32.xlu0 %v3336, 20
      %v4366 = vpop.permute.xlu0 %4365
      %4367 = vrot.lane.b32.xlu0 %v3337, 20
      %v4368 = vpop.permute.xlu0 %4367
      %4369 = vrot.lane.b32.xlu0 %v3338, 20
      %v4370 = vpop.permute.xlu0 %4369
      %4371 = vrot.lane.b32.xlu0 %v3339, 20
      %v4372 = vpop.permute.xlu0 %4371
      %4373 = vrot.lane.b32.xlu0 %v3340, 20
      %v4374 = vpop.permute.xlu0 %4373
      %4375 = vrot.lane.b32.xlu0 %v3341, 20
      %v4376 = vpop.permute.xlu0 %4375
      %4377 = vrot.lane.b32.xlu0 %v3342, 20
      %v4378 = vpop.permute.xlu0 %4377
      %4387 = vrot.lane.b32.xlu0 %v3793, 24
      %v4388 = vpop.permute.xlu0 %4387
      %4389 = vrot.lane.b32.xlu0 %v3794, 24
      %v4390 = vpop.permute.xlu0 %4389
      %4391 = vrot.lane.b32.xlu0 %v3795, 24
      %v4392 = vpop.permute.xlu0 %4391
      %4393 = vrot.lane.b32.xlu0 %v3796, 24
      %v4394 = vpop.permute.xlu0 %4393
      %4395 = vrot.lane.b32.xlu0 %v3797, 24
      %v4396 = vpop.permute.xlu0 %4395
      %4397 = vrot.lane.b32.xlu0 %v3798, 24
      %v4398 = vpop.permute.xlu0 %4397
      %4399 = vrot.lane.b32.xlu0 %v3799, 24
      %v4400 = vpop.permute.xlu0 %4399
      %4401 = vrot.lane.b32.xlu0 %v3800, 24
      %v4402 = vpop.permute.xlu0 %4401
      %4411 = vrot.lane.b32.xlu0 %v4251, 28
      %v4412 = vpop.permute.xlu0 %4411
      %4413 = vrot.lane.b32.xlu0 %v4252, 28
      %v4414 = vpop.permute.xlu0 %4413
      %4415 = vrot.lane.b32.xlu0 %v4253, 28
      %v4416 = vpop.permute.xlu0 %4415
      %4417 = vrot.lane.b32.xlu0 %v4254, 28
      %v4418 = vpop.permute.xlu0 %4417
      %4419 = vrot.lane.b32.xlu0 %v4255, 28
      %v4420 = vpop.permute.xlu0 %4419
      %4421 = vrot.lane.b32.xlu0 %v4256, 28
      %v4422 = vpop.permute.xlu0 %4421
      %4423 = vrot.lane.b32.xlu0 %v4257, 28
      %v4424 = vpop.permute.xlu0 %4423
      %4425 = vrot.lane.b32.xlu0 %v4258, 28
      %v4426 = vpop.permute.xlu0 %4425
      %v4429 = vsel %vm610, %v1037, %v4268
      %v4432 = vsel %vm610, %v1038, %v4270
      %v4435 = vsel %vm610, %v1039, %v4272
      %v4438 = vsel %vm610, %v1040, %v4274
      %v4441 = vsel %vm610, %v1041, %v4276
      %v4444 = vsel %vm610, %v1042, %v4278
      %v4447 = vsel %vm610, %v1043, %v4280
      %v4450 = vsel %vm610, %v1044, %v4282
      %vm4451 = vcmask 64512
      %v4453 = vsel %vm4451, %v4429, %v4292
      %v4455 = vsel %vm4451, %v4432, %v4294
      %v4457 = vsel %vm4451, %v4435, %v4296
      %v4459 = vsel %vm4451, %v4438, %v4298
      %v4461 = vsel %vm4451, %v4441, %v4300
      %v4463 = vsel %vm4451, %v4444, %v4302
      %v4465 = vsel %vm4451, %v4447, %v4304
      %v4467 = vsel %vm4451, %v4450, %v4306
      %vm4468 = vcmask 97280
      %v4470 = vsel %vm4468, %v4453, %v4316
      %v4472 = vsel %vm4468, %v4455, %v4318
      %v4474 = vsel %vm4468, %v4457, %v4320
      %v4476 = vsel %vm4468, %v4459, %v4322
      %v4478 = vsel %vm4468, %v4461, %v4324
      %v4480 = vsel %vm4468, %v4463, %v4326
      %v4482 = vsel %vm4468, %v4465, %v4328
      %v4484 = vsel %vm4468, %v4467, %v4330
      %vm4485 = vcmask 130048
      %v4487 = vsel %vm4485, %v4470, %v4340
      %v4489 = vsel %vm4485, %v4472, %v4342
      %v4491 = vsel %vm4485, %v4474, %v4344
      %v4493 = vsel %vm4485, %v4476, %v4346
      %v4495 = vsel %vm4485, %v4478, %v4348
      %v4497 = vsel %vm4485, %v4480, %v4350
      %v4499 = vsel %vm4485, %v4482, %v4352
      %v4501 = vsel %vm4485, %v4484, %v4354
      %vm4502 = vcmask 162816
      %v4504 = vsel %vm4502, %v4487, %v4364
      %v4506 = vsel %vm4502, %v4489, %v4366
      %v4508 = vsel %vm4502, %v4491, %v4368
      %v4510 = vsel %vm4502, %v4493, %v4370
      %v4512 = vsel %vm4502, %v4495, %v4372
      %v4514 = vsel %vm4502, %v4497, %v4374
      %v4516 = vsel %vm4502, %v4499, %v4376
      %v4518 = vsel %vm4502, %v4501, %v4378
      %vm4519 = vcmask 195584
      %v4521 = vsel %vm4519, %v4504, %v4388
      %v4523 = vsel %vm4519, %v4506, %v4390
      %v4525 = vsel %vm4519, %v4508, %v4392
      %v4527 = vsel %vm4519, %v4510, %v4394
      %v4529 = vsel %vm4519, %v4512, %v4396
      %v4531 = vsel %vm4519, %v4514, %v4398
      %v4533 = vsel %vm4519, %v4516, %v4400
      %v4535 = vsel %vm4519, %v4518, %v4402
      %vm4536 = vcmask 228352
      %v4538 = vsel %vm4536, %v4521, %v4412
      %v4540 = vsel %vm4536, %v4523, %v4414
      %v4542 = vsel %vm4536, %v4525, %v4416
      %v4544 = vsel %vm4536, %v4527, %v4418
      %v4546 = vsel %vm4536, %v4529, %v4420
      %v4548 = vsel %vm4536, %v4531, %v4422
      %v4550 = vsel %vm4536, %v4533, %v4424
      %v4552 = vsel %vm4536, %v4535, %v4426
      %v4553 = vld [vmem:[%s4] sm:$0x1]
      %v4555 = vlaneseq
      %v4556 = vshrl.u32 %v4555, 7
      %v4557 = vsub.s32 0, %v4556
      %v4558 = vrot.slane %v4553, %v4557
      %v4564 = vunpack.c.l.b16 %v287
      %v4565 = vunpack.c.l.b16 %v288
      %v4566 = vunpack.c.l.b16 %v289
      %v4567 = vunpack.c.l.b16 %v290
      %v4568 = vpack.c.b16 %v4565, %v4564
      %v4569 = vpack.c.b16 %v4567, %v4566
      %v4572 = vsel %vm343, %v4538, 0
      %v4574 = vsel %vm343, %v4540, 0
      %v4576 = vsel %vm343, %v4542, 0
      %v4578 = vsel %vm343, %v4544, 0
      %v4580 = vsel %vm343, %v4546, 0
      %v4582 = vsel %vm343, %v4548, 0
      %v4584 = vsel %vm343, %v4550, 0
      %v4586 = vsel %vm343, %v4552, 0
      %4588 = vmatprep.subr.bf16.mxu0 0
      %4589 = vmatpush1.bf16.msra.mxu0 %v4568
      %4590 = vmatprep.subr.bf16.mxu0 0
      %4591 = vmatpush1.bf16.msra.mxu0 %v4569
      %4592 = vmatprep.subr.bf16.mxu0 0
      %4593 = vmatpush1.bf16.msra.mxu0 0
      %4594 = vmatprep.subr.bf16.mxu0 0
      %4595 = vmatpush1.bf16.msra.mxu0 0
      %4596 = vmatprep.subr.bf16.mxu0 0
      %4597 = vmatpush1.bf16.msra.mxu0 0
      %4598 = vmatprep.subr.bf16.mxu0 0
      %4599 = vmatpush1.bf16.msra.mxu0 0
      %4600 = vmatprep.subr.bf16.mxu0 0
      %4601 = vmatpush1.bf16.msra.mxu0 0
      %4602 = vmatprep.subr.bf16.mxu0 0
      %4603 = vmatpush1.bf16.msra.mxu0 0
      %4604 = vmatprep.subr.bf16.mxu0 0
      %4605 = vmatpush1.bf16.msra.mxu0 0
      %4606 = vmatprep.subr.bf16.mxu0 0
      %4607 = vmatpush1.bf16.msra.mxu0 0
      %4608 = vmatprep.subr.bf16.mxu0 0
      %4609 = vmatpush1.bf16.msra.mxu0 0
      %4610 = vmatprep.subr.bf16.mxu0 0
      %4611 = vmatpush1.bf16.msra.mxu0 0
      %4612 = vmatprep.subr.bf16.mxu0 0
      %4613 = vmatpush1.bf16.msra.mxu0 0
      %4614 = vmatprep.subr.bf16.mxu0 0
      %4615 = vmatpush1.bf16.msra.mxu0 0
      %4616 = vmatprep.subr.bf16.mxu0 0
      %4617 = vmatpush1.bf16.msra.mxu0 0
      %4618 = vmatprep.subr.bf16.mxu0 0
      %4619 = vmatpush1.bf16.msra.mxu0 0
      %4620 = vmatprep.mubr.bf16.mxu0 0
      %4621 = vmatmul.mubr.bf16.gmra.mrb[0].mxu0 %v4572
      %v4622 = vpop.f32.mrb[0].mxu0
      %v4623 = vadd.f32 %v4558, %v4622
      %v4624 = vpop.f32.mrb[0].mxu0
      %v4625 = vpop.f32.mrb[0].mxu0
      %v4626 = vadd.f32 %v4558, %v4625
      %v4627 = vpop.f32.mrb[0].mxu0
      %4628 = vmatprep.mubr.bf16.mxu0 0
      %4629 = vmatmul.mubr.bf16.gmra.mrb[0].mxu0 %v4574
      %v4630 = vpop.f32.mrb[0].mxu0
      %v4631 = vadd.f32 %v4558, %v4630
      %v4632 = vpop.f32.mrb[0].mxu0
      %v4633 = vpop.f32.mrb[0].mxu0
      %v4634 = vadd.f32 %v4558, %v4633
      %v4635 = vpop.f32.mrb[0].mxu0
      %4636 = vmatprep.mubr.bf16.mxu0 0
      %4637 = vmatmul.mubr.bf16.gmra.mrb[0].mxu0 %v4576
      %v4638 = vpop.f32.mrb[0].mxu0
      %v4639 = vadd.f32 %v4558, %v4638
      %v4640 = vpop.f32.mrb[0].mxu0
      %v4641 = vpop.f32.mrb[0].mxu0
      %v4642 = vadd.f32 %v4558, %v4641
      %v4643 = vpop.f32.mrb[0].mxu0
      %4644 = vmatprep.mubr.bf16.mxu0 0
      %4645 = vmatmul.mubr.bf16.gmra.mrb[0].mxu0 %v4578
      %v4646 = vpop.f32.mrb[0].mxu0
      %v4647 = vadd.f32 %v4558, %v4646
      %v4648 = vpop.f32.mrb[0].mxu0
      %v4649 = vpop.f32.mrb[0].mxu0
      %v4650 = vadd.f32 %v4558, %v4649
      %v4651 = vpop.f32.mrb[0].mxu0
      %4652 = vmatprep.mubr.bf16.mxu0 0
      %4653 = vmatmul.mubr.bf16.gmra.mrb[0].mxu0 %v4580
      %v4654 = vpop.f32.mrb[0].mxu0
      %v4655 = vadd.f32 %v4558, %v4654
      %v4656 = vpop.f32.mrb[0].mxu0
      %v4657 = vpop.f32.mrb[0].mxu0
      %v4658 = vadd.f32 %v4558, %v4657
      %v4659 = vpop.f32.mrb[0].mxu0
      %4660 = vmatprep.mubr.bf16.mxu0 0
      %4661 = vmatmul.mubr.bf16.gmra.mrb[0].mxu0 %v4582
      %v4662 = vpop.f32.mrb[0].mxu0
      %v4663 = vadd.f32 %v4558, %v4662
      %v4664 = vpop.f32.mrb[0].mxu0
      %v4665 = vpop.f32.mrb[0].mxu0
      %v4666 = vadd.f32 %v4558, %v4665
      %v4667 = vpop.f32.mrb[0].mxu0
      %4668 = vmatprep.mubr.bf16.mxu0 0
      %4669 = vmatmul.mubr.bf16.gmra.mrb[0].mxu0 %v4584
      %v4670 = vpop.f32.mrb[0].mxu0
      %v4671 = vadd.f32 %v4558, %v4670
      %v4672 = vpop.f32.mrb[0].mxu0
      %v4673 = vpop.f32.mrb[0].mxu0
      %v4674 = vadd.f32 %v4558, %v4673
      %v4675 = vpop.f32.mrb[0].mxu0
      %4676 = vmatprep.mubr.bf16.mxu0 0
      %4677 = vmatmul.mubr.bf16.gmra.mrb[0].mxu0 %v4586
      %v4678 = vpop.f32.mrb[0].mxu0
      %v4679 = vadd.f32 %v4558, %v4678
      %v4680 = vpop.f32.mrb[0].mxu0
      %v4681 = vpop.f32.mrb[0].mxu0
      %v4682 = vadd.f32 %v4558, %v4681
      %v4683 = vpop.f32.mrb[0].mxu0
      %4684 = vdwg.mxu0
      %4685 = vst.msk [vmem:[%s253] sm:$0xff] %vm343, %v4623
      %4686 = vst.msk [vmem:[%s253 + $0x8] sm:$0xff] %vm343, %v4626
      %4687 = vst.msk [vmem:[%s253 + $0x10] sm:$0xff] %vm343, %v4631
      %4688 = vst.msk [vmem:[%s253 + $0x18] sm:$0xff] %vm343, %v4634
      %4689 = vst.msk [vmem:[%s253 + $0x20] sm:$0xff] %vm343, %v4639
      %4690 = vst.msk [vmem:[%s253 + $0x28] sm:$0xff] %vm343, %v4642
      %4691 = vst.msk [vmem:[%s253 + $0x30] sm:$0xff] %vm343, %v4647
      %4692 = vst.msk [vmem:[%s253 + $0x38] sm:$0xff] %vm343, %v4650
      %4693 = vst.msk [vmem:[%s253 + $0x40] sm:$0xff] %vm343, %v4655
      %4694 = vst.msk [vmem:[%s253 + $0x48] sm:$0xff] %vm343, %v4658
      %4695 = vst.msk [vmem:[%s253 + $0x50] sm:$0xff] %vm343, %v4663
      %4696 = vst.msk [vmem:[%s253 + $0x58] sm:$0xff] %vm343, %v4666
      %4697 = vst.msk [vmem:[%s253 + $0x60] sm:$0xff] %vm343, %v4671
      %4698 = vst.msk [vmem:[%s253 + $0x68] sm:$0xff] %vm343, %v4674
      %4699 = vst.msk [vmem:[%s253 + $0x70] sm:$0xff] %vm343, %v4679
      %4700 = vst.msk [vmem:[%s253 + $0x78] sm:$0xff] %vm343, %v4682
      %s4701 = smul.u32 16, %s22
      %p4702 = scmp.lt.s32.totalorder %s21, 1
      %s4703 = scalar_select %p4702, %s21, 1
      %p4704 = scmp.lt.s32.totalorder %s4701, 15
      %s4705 = scalar_select %p4704, %s4701, 15
      %s4706 = smul.addr %s4703, 16
      %s4707 = sadd.s32 %s4705, %s4706
      %s4708 = smul.addr %s4707, 8
      %s4709 = scalar_lea.vmem %s5, %s4708
      // Predicated region
      $region41: #{tpu_custom_call.1} parent=39 // pred_check
        %p4710 = pneg %p165
      $region42: #{tpu_custom_call.1} parent=39 // pred_check_branch
        %4712 = sbr.rel (%p4710) target = $region44
      $region43: #{tpu_custom_call.1} parent=39 // pred_region
        %s4713 = smul.u32 16, %s22
      $region44: #{tpu_custom_call.1} parent=39 // pred_fallthru
        _
    $region40: #{tpu_custom_call.1} parent=5 // pred_fallthru
      _
    %p4714 = scmp.le.s32.totalorder 2, %s11
    // Predicated region
    $region45: #{tpu_custom_call.1} parent=5 // pred_check
      %p4715 = pneg %p4714
    $region46: #{tpu_custom_call.1} parent=5 // pred_check_branch
      %4717 = sbr.rel (%p4715) target = $region48
    $region47: #{tpu_custom_call.1} parent=5 // pred_region
      %s4718 = ssub.s32 %s11, 2
      // Predicated region
      $region49: #{tpu_custom_call.1} parent=47 // pred_check
        %p4719 = pneg %p171
      $region50: #{tpu_custom_call.1} parent=47 // pred_check_branch
        %4721 = sbr.rel (%p4719) target = $region52
      $region51: #{tpu_custom_call.1} parent=47 // pred_region
        %s4722 = smul.u32 16, %s25
        %p4723 = scmp.lt.s32.totalorder %s24, 1
        %s4724 = scalar_select %p4723, %s24, 1
        %p4725 = scmp.lt.s32.totalorder %s4722, 15
        %s4726 = scalar_select %p4725, %s4722, 15
        %s4727 = smul.addr %s4724, 16
        %s4728 = sadd.s32 %s4726, %s4727
        %s4729 = smul.addr %s4728, 8
        %s4730 = scalar_lea.vmem %s5, %s4729
      $region52: #{tpu_custom_call.1} parent=47 // pred_fallthru
        _
    $region48: #{tpu_custom_call.1} parent=5 // pred_fallthru
      _
  $region6: #{tpu_custom_call.1} parent=0 // loop_footer
    %s15 = sadd.s32 1, %s11
  $region7: #{tpu_custom_call.1} parent=0 // loop_footer_branch
    %10 = sbr.rel target = $region3
  $region8: #{tpu_custom_call.1} parent=0 // loop_exit
    _

</llo_original>
